<compile_context>
chip_gen: v5e
topology: v5e:2x2
jax: 0.10.0
libtpu: 0.0.40
codegen_flags: <defaults>
</compile_context>

<pallas_src>
import itertools
import numpy as np

import jax
import jax.numpy as jnp
from jax.experimental import pallas as pl
from jax.experimental.pallas import tpu as pltpu

NUM_PART = 5
DIM_LIST = [2] * NUM_PART
DIM_TOTAL = int(np.prod(np.array(DIM_LIST, dtype=np.int64)))   # 32


def get_bipartition_list(num_part):
    ret = []
    for r in range(1, num_part // 2 + 1):
        for x in itertools.combinations(range(num_part), r):
            tmp0 = set(x)
            tmp1 = (sorted(tmp0), sorted(set(range(num_part)) - tmp0))
            if len(tmp1[0]) > len(tmp1[1]) or (len(tmp1[0]) == len(tmp1[1]) and 0 in tmp1[1]):
                tmp1 = (tmp1[1], tmp1[0])
            ret.append(tuple((tuple(sorted(x)) for x in tmp1)))
    hf0 = lambda x: (len(x[0]),) + tuple(x[0]) + tuple(x[1])
    ret = sorted(set(ret), key=hf0)
    return ret


PARTITIONS = get_bipartition_list(NUM_PART)   # 15 bipartitions
K = len(PARTITIONS)                           # 15
N = 2 * DIM_TOTAL                             # 64 mixture states per partition
D = DIM_TOTAL                                 # 32
M = K * N                                     # 960 states total
M2 = 2 * M                                    # 1920 pseudo-states ([A | B] stacking)

# Optional bf16 MXU operands for v6e/v7x (keep f32 accumulation via
# preferred_element_type).  Left at f32: the kernel is latency-bound at this
# size, and f32 keeps comfortable margin vs. the float64 reference check.
MATMUL_DTYPE = jnp.float32


# ----------------------------------------------------------------------------
# Pallas kernel: softmaxes + fused weighted Gram + Frobenius loss, one step.
# ----------------------------------------------------------------------------
def chagme_kernel(thp_ref, thq_ref, s_ref, st_ref, lre_ref, lim_ref, r_ref,
                  tre_ref, tim_ref, loss_ref, dmre_ref, dmim_ref):
    f32 = jnp.float32

    # prob_p = softmax(theta_p) over the K bipartitions (lane-axis softmax).
    tp = thp_ref[...]                                             # (1, K)
    ep = jnp.exp(tp - jnp.max(tp, axis=-1, keepdims=True))
    pp = ep / jnp.sum(ep, axis=-1, keepdims=True)                 # (1, K)

    # Per-partition softmax of theta_q, computed on the flattened lane-dense
    # (1, 2*K*N) pseudo-state axis.  Segment (= bipartition) reductions use the
    # 0/1 indicator matmuls S (2KN, K) / S^T (K, 2KN); the segment mean is
    # subtracted for stability (softmax is shift-invariant per segment).
    q = thq_ref[...]                                              # (1, 2*K*N)
    seg = s_ref[...]                                              # (2*K*N, K)
    segT = st_ref[...]                                            # (K, 2*K*N)
    seg_mean = jnp.dot(q, seg, preferred_element_type=f32) * (1.0 / (2 * N))   # (1, K)
    e = jnp.exp(q - jnp.dot(seg_mean, segT, preferred_element_type=f32))       # (1, 2*K*N)
    seg_sum = jnp.dot(e, seg, preferred_element_type=f32)         # (1, K) = 2 * Z_k
    coef = (2.0 * pp) * pl.reciprocal(seg_sum, approx=True)       # (1, K) = prob_p[k] / Z_k
    w = e * jnp.dot(coef, segT, preferred_element_type=f32)       # (1, 2*K*N): prob_p*prob_q

    # Fused weighted Gram over all 2*K*N pseudo-states (two long MXU matmuls,
    # standard (M,K)x(K,N) form, no transposes, weight broadcast over sublanes).
    lhs_re = (lre_ref[...] * w).astype(MATMUL_DTYPE)              # (D, 2*K*N)
    lhs_im = (lim_ref[...] * w).astype(MATMUL_DTYPE)              # (D, 2*K*N)
    rhs = r_ref[...].astype(MATMUL_DTYPE)                         # (2*K*N, D)
    dre = jnp.dot(lhs_re, rhs, preferred_element_type=f32)        # (D, D)  Re(dm)
    dimg = jnp.dot(lhs_im, rhs, preferred_element_type=f32)       # (D, D)  Im(dm)
    dmre_ref[...] = dre
    dmim_ref[...] = dimg

    # loss = 2 * || dm_target - dm ||_F^2
    ere = tre_ref[...] - dre
    eim = tim_ref[...] - dimg
    loss_ref[...] = jnp.reshape(2.0 * (jnp.sum(ere * ere) + jnp.sum(eim * eim)), (1, 1))


def chagme_loss_pallas(theta_p_row, theta_q_flat2, seg, segT, l_re, l_im, rhs, t_re, t_im):
    inputs = (theta_p_row, theta_q_flat2, seg, segT, l_re, l_im, rhs, t_re, t_im)
    in_specs = [pl.BlockSpec(x.shape, lambda i: (0, 0)) for x in inputs]
    out_shapes = (
        jax.ShapeDtypeStruct((1, 1), jnp.float32),   # loss
        jax.ShapeDtypeStruct((D, D), jnp.float32),   # Re(dm)
        jax.ShapeDtypeStruct((D, D), jnp.float32),   # Im(dm)
    )
    out_specs = (
        pl.BlockSpec((1, 1), lambda i: (0, 0)),
        pl.BlockSpec((D, D), lambda i: (0, 0)),
        pl.BlockSpec((D, D), lambda i: (0, 0)),
    )
    grid_spec = pltpu.PrefetchScalarGridSpec(
        num_scalar_prefetch=0,
        grid=(1,),                      # single fused step: no per-step overhead
        in_specs=in_specs,
        out_specs=out_specs,
    )
    return pl.pallas_call(
        chagme_kernel,
        out_shape=out_shapes,
        grid_spec=grid_spec,
        compiler_params=pltpu.CompilerParams(dimension_semantics=("arbitrary",)),
    )(*inputs)


# ----------------------------------------------------------------------------
# Plain-JAX glue: build full state vectors psi0 (x) psi1 for a bipartition.
# (Tiny partition-dependent tensor-product permutation; kept outside the kernel.)
# ----------------------------------------------------------------------------
def build_full_states(psi0_ri, psi1_ri, ind0, ind1):
    letters = "abcde"[:NUM_PART]
    s0 = (N,) + tuple(DIM_LIST[i] for i in ind0)
    s1 = (N,) + tuple(DIM_LIST[i] for i in ind1)
    eq = ("n" + "".join(letters[i] for i in ind0) + ","
          + "n" + "".join(letters[i] for i in ind1) + "->n" + letters)
    t0r = psi0_ri[0].reshape(s0)
    t0i = psi0_ri[1].reshape(s0)
    t1r = psi1_ri[0].reshape(s1)
    t1i = psi1_ri[1].reshape(s1)
    vr = jnp.einsum(eq, t0r, t1r) - jnp.einsum(eq, t0i, t1i)
    vi = jnp.einsum(eq, t0r, t1i) + jnp.einsum(eq, t0i, t1r)
    return vr.reshape(N, DIM_TOTAL), vi.reshape(N, DIM_TOTAL)


# ----------------------------------------------------------------------------
# Independent numpy (complex128) reference replicating the torch forward().
# ----------------------------------------------------------------------------
def reference_forward_numpy(theta_p, theta_q, psi0_list, psi1_list, dm_target):
    def softmax(x):
        e = np.exp(x - x.max())
        return e / e.sum()

    prob_p = softmax(theta_p)
    dm = np.zeros((DIM_TOTAL, DIM_TOTAL), dtype=np.complex128)
    letters = "abcde"[:NUM_PART]
    for k, (ind0, ind1) in enumerate(PARTITIONS):
        prob_q = softmax(theta_q[k])
        psi0 = psi0_list[k][0].astype(np.float64) + 1j * psi0_list[k][1].astype(np.float64)
        psi1 = psi1_list[k][0].astype(np.float64) + 1j * psi1_list[k][1].astype(np.float64)
        s0 = (N,) + tuple(DIM_LIST[i] for i in ind0)
        s1 = (N,) + tuple(DIM_LIST[i] for i in ind1)
        eq = ("n" + "".join(letters[i] for i in ind0) + ","
              + "n" + "".join(letters[i] for i in ind1) + "->n" + letters)
        V = np.einsum(eq, psi0.reshape(s0), psi1.reshape(s1)).reshape(N, DIM_TOTAL)
        dm_k = (prob_q[:, None] * V).T @ V.conj()
        dm = dm + prob_p[k] * dm_k
    diff = (dm_target - dm).reshape(-1)
    loss = 2.0 * np.real(np.dot(diff, diff.conj()))
    return loss, dm


# ----------------------------------------------------------------------------
if __name__ == "__main__":
    key = jax.random.PRNGKey(0)
    kp, kq, kpsi, ktre, ktim = jax.random.split(key, 5)

    # Parameters (deterministic, uniform(-1,1) like the torch init, f32)
    theta_p = jax.random.uniform(kp, (K,), minval=-1.0, maxval=1.0, dtype=jnp.float32)
    theta_q = jax.random.uniform(kq, (K, N), minval=-1.0, maxval=1.0, dtype=jnp.float32)

    psi_keys = jax.random.split(kpsi, 2 * K)
    theta_psi0, theta_psi1 = [], []
    for k_idx, (ind0, ind1) in enumerate(PARTITIONS):
        d0 = int(np.prod([DIM_LIST[i] for i in ind0]))
        d1 = int(np.prod([DIM_LIST[i] for i in ind1]))
        theta_psi0.append(jax.random.uniform(psi_keys[2 * k_idx], (2, N, d0),
                                             minval=-1.0, maxval=1.0, dtype=jnp.float32))
        theta_psi1.append(jax.random.uniform(psi_keys[2 * k_idx + 1], (2, N, d1),
                                             minval=-1.0, maxval=1.0, dtype=jnp.float32))

    # Hermitian PSD target density matrix: T = G G^H / trace, split into Re/Im.
    gr = jax.random.uniform(ktre, (D, D), minval=-1.0, maxval=1.0, dtype=jnp.float32)
    gi = jax.random.uniform(ktim, (D, D), minval=-1.0, maxval=1.0, dtype=jnp.float32)
    Tre = gr @ gr.T + gi @ gi.T
    Tim = gi @ gr.T - gr @ gi.T
    tr = jnp.trace(Tre)
    Tre = Tre / tr
    Tim = Tim / tr

    # Glue: full state vectors per bipartition, stacked along the K*N state axis.
    A_list, B_list = [], []
    for k_idx, (ind0, ind1) in enumerate(PARTITIONS):
        a_k, b_k = build_full_states(theta_psi0[k_idx], theta_psi1[k_idx], ind0, ind1)
        A_list.append(a_k)
        B_list.append(b_k)
    A = jnp.concatenate(A_list, axis=0)                            # (M, D)  Re(V)
    B = jnp.concatenate(B_list, axis=0)                            # (M, D)  Im(V)

    # Layout plumbing for the fused weighted Gram (all static, wrapper-side):
    AT, BT = A.T, B.T                                              # (D, M)
    Lre = jnp.concatenate([AT, BT], axis=1)                        # (D, 2M) = [A^T | B^T]
    Lim = jnp.concatenate([BT, -AT], axis=1)                       # (D, 2M) = [B^T | -A^T]
    R = jnp.concatenate([A, B], axis=0)                            # (2M, D) = [A ; B]

    # Logits flattened to the same 2M pseudo-state ordering (duplicated halves),
    # plus the static 0/1 partition-indicator matrices for segment reductions.
    q_flat = theta_q.reshape(1, M)
    theta_q_flat2 = jnp.concatenate([q_flat, q_flat], axis=1)      # (1, 2M)
    theta_p_row = theta_p.reshape(1, K)                            # (1, K)
    seg_np = np.zeros((M2, K), dtype=np.float32)
    pidx = np.arange(M2)
    seg_np[pidx, (pidx % M) // N] = 1.0
    SEG = jnp.asarray(seg_np)                                      # (2M, K)
    SEGT = jnp.asarray(np.ascontiguousarray(seg_np.T))             # (K, 2M)

    loss, dm_re, dm_im = chagme_loss_pallas(theta_p_row, theta_q_flat2, SEG, SEGT,
                                            Lre, Lim, R, Tre, Tim)
    jax.block_until_ready(loss)

    # Verify against an independent float64 numpy reference of the torch forward.
    loss_ref, dm_ref = reference_forward_numpy(
        np.asarray(theta_p, dtype=np.float64),
        np.asarray(theta_q, dtype=np.float64),
        [np.asarray(x) for x in theta_psi0],
        [np.asarray(x) for x in theta_psi1],
        np.asarray(Tre, dtype=np.float64) + 1j * np.asarray(Tim, dtype=np.float64),
    )
    loss_k = float(np.asarray(loss)[0, 0])
    assert abs(loss_k - loss_ref) <= 2e-3 * (1.0 + abs(loss_ref)), (loss_k, loss_ref)
    assert np.max(np.abs(np.asarray(dm_re) - dm_ref.real)) < 2e-3
    assert np.max(np.abs(np.asarray(dm_im) - dm_ref.imag)) < 2e-3

    print("KERNEL_OK")
</pallas_src>

<mosaic_0001>
module attributes {stable_mosaic.version = 11 : i64} {
  func.func @chagme_kernel(%arg0: i32, %arg1: memref<1x15xf32, #tpu.memory_space<vmem>>, %arg2: memref<1x1920xf32, #tpu.memory_space<vmem>>, %arg3: memref<1920x15xf32, #tpu.memory_space<vmem>>, %arg4: memref<15x1920xf32, #tpu.memory_space<vmem>>, %arg5: memref<32x1920xf32, #tpu.memory_space<vmem>>, %arg6: memref<32x1920xf32, #tpu.memory_space<vmem>>, %arg7: memref<1920x32xf32, #tpu.memory_space<vmem>>, %arg8: memref<32x32xf32, #tpu.memory_space<vmem>>, %arg9: memref<32x32xf32, #tpu.memory_space<vmem>>, %arg10: memref<1x1xf32, #tpu.memory_space<vmem>>, %arg11: memref<32x32xf32, #tpu.memory_space<vmem>>, %arg12: memref<32x32xf32, #tpu.memory_space<vmem>>) attributes {dimension_semantics = [#tpu.dimension_semantics<arbitrary>], iteration_bounds = array<i64: 1>, scalar_prefetch = 0 : i64, scratch_operands = 0 : i64, tpu.core_type = #tpu.core_type<tc>, window_params = [{pipeline_mode = #tpu.pipeline_mode<synchronous>, transform_indices = @transform_0, window_bounds = array<i64: 1, 15>}, {pipeline_mode = #tpu.pipeline_mode<synchronous>, transform_indices = @transform_1, window_bounds = array<i64: 1, 1920>}, {pipeline_mode = #tpu.pipeline_mode<synchronous>, transform_indices = @transform_2, window_bounds = array<i64: 1920, 15>}, {pipeline_mode = #tpu.pipeline_mode<synchronous>, transform_indices = @transform_3, window_bounds = array<i64: 15, 1920>}, {pipeline_mode = #tpu.pipeline_mode<synchronous>, transform_indices = @transform_4, window_bounds = array<i64: 32, 1920>}, {pipeline_mode = #tpu.pipeline_mode<synchronous>, transform_indices = @transform_5, window_bounds = array<i64: 32, 1920>}, {pipeline_mode = #tpu.pipeline_mode<synchronous>, transform_indices = @transform_6, window_bounds = array<i64: 1920, 32>}, {pipeline_mode = #tpu.pipeline_mode<synchronous>, transform_indices = @transform_7, window_bounds = array<i64: 32, 32>}, {pipeline_mode = #tpu.pipeline_mode<synchronous>, transform_indices = @transform_8, window_bounds = array<i64: 32, 32>}, {pipeline_mode = #tpu.pipeline_mode<synchronous>, transform_indices = @transform_9, window_bounds = array<i64: 1, 1>}, {pipeline_mode = #tpu.pipeline_mode<synchronous>, transform_indices = @transform_10, window_bounds = array<i64: 32, 32>}, {pipeline_mode = #tpu.pipeline_mode<synchronous>, transform_indices = @transform_11, window_bounds = array<i64: 32, 32>}]} {
    %c0 = arith.constant 0 : index
    %c0_0 = arith.constant 0 : index
    %0 = vector.load %arg1[%c0, %c0_0] : memref<1x15xf32, #tpu.memory_space<vmem>>, vector<1x15xf32>
    %cst = arith.constant dense<0xFF800000> : vector<1xf32>
    %1 = vector.multi_reduction <maximumf>, %0, %cst [1] : vector<1x15xf32> to vector<1xf32>
    %2 = vector.shape_cast %1 : vector<1xf32> to vector<1x1xf32>
    %3 = vector.broadcast %2 : vector<1x1xf32> to vector<1x15xf32>
    %4 = arith.subf %0, %3 : vector<1x15xf32>
    %5 = math.exp %4 : vector<1x15xf32>
    %cst_1 = arith.constant dense<0.000000e+00> : vector<1xf32>
    %6 = vector.multi_reduction <add>, %5, %cst_1 [1] : vector<1x15xf32> to vector<1xf32>
    %7 = vector.shape_cast %6 : vector<1xf32> to vector<1x1xf32>
    %8 = vector.broadcast %7 : vector<1x1xf32> to vector<1x15xf32>
    %9 = arith.divf %5, %8 : vector<1x15xf32>
    %c0_2 = arith.constant 0 : index
    %c0_3 = arith.constant 0 : index
    %10 = vector.load %arg2[%c0_2, %c0_3] : memref<1x1920xf32, #tpu.memory_space<vmem>>, vector<1x1920xf32>
    %c0_4 = arith.constant 0 : index
    %c0_5 = arith.constant 0 : index
    %11 = vector.load %arg3[%c0_4, %c0_5] : memref<1920x15xf32, #tpu.memory_space<vmem>>, vector<1920x15xf32>
    %c0_6 = arith.constant 0 : index
    %c0_7 = arith.constant 0 : index
    %12 = vector.load %arg4[%c0_6, %c0_7] : memref<15x1920xf32, #tpu.memory_space<vmem>>, vector<15x1920xf32>
    %cst_8 = arith.constant dense<0.000000e+00> : vector<1x15xf32>
    %13 = tpu.matmul %10, %11, %cst_8 {dimension_numbers = #tpu.dot_dimension_numbers<[1], [0], [0], [1], [0, 0, 1, 1], [], []>} : vector<1x1920xf32>, vector<1920x15xf32>, vector<1x15xf32> -> vector<1x15xf32>
    %cst_9 = arith.constant 7.812500e-03 : f32
    %14 = vector.broadcast %cst_9 : f32 to vector<1x15xf32>
    %15 = arith.mulf %13, %14 : vector<1x15xf32>
    %cst_10 = arith.constant dense<0.000000e+00> : vector<1x1920xf32>
    %16 = tpu.matmul %15, %12, %cst_10 {dimension_numbers = #tpu.dot_dimension_numbers<[1], [0], [0], [1], [0, 0, 1, 1], [], []>} : vector<1x15xf32>, vector<15x1920xf32>, vector<1x1920xf32> -> vector<1x1920xf32>
    %17 = arith.subf %10, %16 : vector<1x1920xf32>
    %18 = math.exp %17 : vector<1x1920xf32>
    %cst_11 = arith.constant dense<0.000000e+00> : vector<1x15xf32>
    %19 = tpu.matmul %18, %11, %cst_11 {dimension_numbers = #tpu.dot_dimension_numbers<[1], [0], [0], [1], [0, 0, 1, 1], [], []>} : vector<1x1920xf32>, vector<1920x15xf32>, vector<1x15xf32> -> vector<1x15xf32>
    %cst_12 = arith.constant 2.000000e+00 : f32
    %20 = vector.broadcast %cst_12 : f32 to vector<1x15xf32>
    %21 = arith.mulf %20, %9 : vector<1x15xf32>
    %22 = tpu.reciprocal %19 {approx = true} : vector<1x15xf32> -> vector<1x15xf32>
    %23 = arith.mulf %21, %22 : vector<1x15xf32>
    %cst_13 = arith.constant dense<0.000000e+00> : vector<1x1920xf32>
    %24 = tpu.matmul %23, %12, %cst_13 {dimension_numbers = #tpu.dot_dimension_numbers<[1], [0], [0], [1], [0, 0, 1, 1], [], []>} : vector<1x15xf32>, vector<15x1920xf32>, vector<1x1920xf32> -> vector<1x1920xf32>
    %25 = arith.mulf %18, %24 : vector<1x1920xf32>
    %c0_14 = arith.constant 0 : index
    %c0_15 = arith.constant 0 : index
    %26 = vector.load %arg5[%c0_14, %c0_15] : memref<32x1920xf32, #tpu.memory_space<vmem>>, vector<32x1920xf32>
    %27 = vector.broadcast %25 : vector<1x1920xf32> to vector<32x1920xf32>
    %28 = arith.mulf %26, %27 : vector<32x1920xf32>
    %c0_16 = arith.constant 0 : index
    %c0_17 = arith.constant 0 : index
    %29 = vector.load %arg6[%c0_16, %c0_17] : memref<32x1920xf32, #tpu.memory_space<vmem>>, vector<32x1920xf32>
    %30 = vector.broadcast %25 : vector<1x1920xf32> to vector<32x1920xf32>
    %31 = arith.mulf %29, %30 : vector<32x1920xf32>
    %c0_18 = arith.constant 0 : index
    %c0_19 = arith.constant 0 : index
    %32 = vector.load %arg7[%c0_18, %c0_19] : memref<1920x32xf32, #tpu.memory_space<vmem>>, vector<1920x32xf32>
    %cst_20 = arith.constant dense<0.000000e+00> : vector<32x32xf32>
    %33 = tpu.matmul %28, %32, %cst_20 {dimension_numbers = #tpu.dot_dimension_numbers<[1], [0], [0], [1], [0, 0, 1, 1], [], []>} : vector<32x1920xf32>, vector<1920x32xf32>, vector<32x32xf32> -> vector<32x32xf32>
    %cst_21 = arith.constant dense<0.000000e+00> : vector<32x32xf32>
    %34 = tpu.matmul %31, %32, %cst_21 {dimension_numbers = #tpu.dot_dimension_numbers<[1], [0], [0], [1], [0, 0, 1, 1], [], []>} : vector<32x1920xf32>, vector<1920x32xf32>, vector<32x32xf32> -> vector<32x32xf32>
    %c0_22 = arith.constant 0 : index
    %c0_23 = arith.constant 0 : index
    %35 = vector.load %arg11[%c0_22, %c0_23] : memref<32x32xf32, #tpu.memory_space<vmem>>, vector<32x32xf32>
    tpu.vector_store %arg11[%c0_22, %c0_23], %33 {strides = array<i32>} : memref<32x32xf32, #tpu.memory_space<vmem>>, vector<32x32xf32>,
    %c0_24 = arith.constant 0 : index
    %c0_25 = arith.constant 0 : index
    %36 = vector.load %arg12[%c0_24, %c0_25] : memref<32x32xf32, #tpu.memory_space<vmem>>, vector<32x32xf32>
    tpu.vector_store %arg12[%c0_24, %c0_25], %34 {strides = array<i32>} : memref<32x32xf32, #tpu.memory_space<vmem>>, vector<32x32xf32>,
    %c0_26 = arith.constant 0 : index
    %c0_27 = arith.constant 0 : index
    %37 = vector.load %arg8[%c0_26, %c0_27] : memref<32x32xf32, #tpu.memory_space<vmem>>, vector<32x32xf32>
    %38 = arith.subf %37, %33 : vector<32x32xf32>
    %c0_28 = arith.constant 0 : index
    %c0_29 = arith.constant 0 : index
    %39 = vector.load %arg9[%c0_28, %c0_29] : memref<32x32xf32, #tpu.memory_space<vmem>>, vector<32x32xf32>
    %40 = arith.subf %39, %34 : vector<32x32xf32>
    %41 = arith.mulf %38, %38 : vector<32x32xf32>
    %42 = vector.shape_cast %41 : vector<32x32xf32> to vector<1x32x32xf32>
    %cst_30 = arith.constant dense<0.000000e+00> : vector<1xf32>
    %43 = vector.multi_reduction <add>, %42, %cst_30 [1, 2] : vector<1x32x32xf32> to vector<1xf32>
    %44 = vector.shape_cast %43 : vector<1xf32> to vector<1x1x1xf32>
    %45 = vector.extract %44[0, 0, 0] : f32 from vector<1x1x1xf32>
    %46 = arith.mulf %40, %40 : vector<32x32xf32>
    %47 = vector.shape_cast %46 : vector<32x32xf32> to vector<1x32x32xf32>
    %cst_31 = arith.constant dense<0.000000e+00> : vector<1xf32>
    %48 = vector.multi_reduction <add>, %47, %cst_31 [1, 2] : vector<1x32x32xf32> to vector<1xf32>
    %49 = vector.shape_cast %48 : vector<1xf32> to vector<1x1x1xf32>
    %50 = vector.extract %49[0, 0, 0] : f32 from vector<1x1x1xf32>
    %51 = arith.addf %45, %50 : f32
    %cst_32 = arith.constant 2.000000e+00 : f32
    %52 = arith.mulf %cst_32, %51 : f32
    %53 = vector.broadcast %52 : f32 to vector<1x1xf32>
    %c0_33 = arith.constant 0 : index
    %c0_34 = arith.constant 0 : index
    %54 = vector.load %arg10[%c0_33, %c0_34] : memref<1x1xf32, #tpu.memory_space<vmem>>, vector<1x1xf32>
    tpu.vector_store %arg10[%c0_33, %c0_34], %53 {strides = array<i32>} : memref<1x1xf32, #tpu.memory_space<vmem>>, vector<1x1xf32>,
    return
  }
  func.func @transform_0(%arg0: i32) -> (i32, i32) {
    %c0_i32 = arith.constant 0 : i32
    %c0_i32_0 = arith.constant 0 : i32
    %c0_i32_1 = arith.constant 0 : i32
    return %c0_i32, %c0_i32_0 : i32, i32
  }
  func.func @transform_1(%arg0: i32) -> (i32, i32) {
    %c0_i32 = arith.constant 0 : i32
    %c0_i32_0 = arith.constant 0 : i32
    %c0_i32_1 = arith.constant 0 : i32
    return %c0_i32, %c0_i32_0 : i32, i32
  }
  func.func @transform_2(%arg0: i32) -> (i32, i32) {
    %c0_i32 = arith.constant 0 : i32
    %c0_i32_0 = arith.constant 0 : i32
    %c0_i32_1 = arith.constant 0 : i32
    return %c0_i32, %c0_i32_0 : i32, i32
  }
  func.func @transform_3(%arg0: i32) -> (i32, i32) {
    %c0_i32 = arith.constant 0 : i32
    %c0_i32_0 = arith.constant 0 : i32
    %c0_i32_1 = arith.constant 0 : i32
    return %c0_i32, %c0_i32_0 : i32, i32
  }
  func.func @transform_4(%arg0: i32) -> (i32, i32) {
    %c0_i32 = arith.constant 0 : i32
    %c0_i32_0 = arith.constant 0 : i32
    %c0_i32_1 = arith.constant 0 : i32
    return %c0_i32, %c0_i32_0 : i32, i32
  }
  func.func @transform_5(%arg0: i32) -> (i32, i32) {
    %c0_i32 = arith.constant 0 : i32
    %c0_i32_0 = arith.constant 0 : i32
    %c0_i32_1 = arith.constant 0 : i32
    return %c0_i32, %c0_i32_0 : i32, i32
  }
  func.func @transform_6(%arg0: i32) -> (i32, i32) {
    %c0_i32 = arith.constant 0 : i32
    %c0_i32_0 = arith.constant 0 : i32
    %c0_i32_1 = arith.constant 0 : i32
    return %c0_i32, %c0_i32_0 : i32, i32
  }
  func.func @transform_7(%arg0: i32) -> (i32, i32) {
    %c0_i32 = arith.constant 0 : i32
    %c0_i32_0 = arith.constant 0 : i32
    %c0_i32_1 = arith.constant 0 : i32
    return %c0_i32, %c0_i32_0 : i32, i32
  }
  func.func @transform_8(%arg0: i32) -> (i32, i32) {
    %c0_i32 = arith.constant 0 : i32
    %c0_i32_0 = arith.constant 0 : i32
    %c0_i32_1 = arith.constant 0 : i32
    return %c0_i32, %c0_i32_0 : i32, i32
  }
  func.func @transform_9(%arg0: i32) -> (i32, i32) {
    %c0_i32 = arith.constant 0 : i32
    %c0_i32_0 = arith.constant 0 : i32
    %c0_i32_1 = arith.constant 0 : i32
    return %c0_i32, %c0_i32_0 : i32, i32
  }
  func.func @transform_10(%arg0: i32) -> (i32, i32) {
    %c0_i32 = arith.constant 0 : i32
    %c0_i32_0 = arith.constant 0 : i32
    %c0_i32_1 = arith.constant 0 : i32
    return %c0_i32, %c0_i32_0 : i32, i32
  }
  func.func @transform_11(%arg0: i32) -> (i32, i32) {
    %c0_i32 = arith.constant 0 : i32
    %c0_i32_0 = arith.constant 0 : i32
    %c0_i32_1 = arith.constant 0 : i32
    return %c0_i32, %c0_i32_0 : i32, i32
  }
}

</mosaic_0001>

<llo_original>
// kernel: tpu_custom_call.1
$region0: #{tpu_custom_call.1}
  #allocation0 [shape = 'u32[]', space=smem, size = 0x4, offset = 0x4, fixed_abs, tag = 'smem constant byte address 0x4 - core index']
  #allocation1 [shape = 'u32[72,128]{1,0:T(1,128)}', space=vmem, size = 0x9000, scoped, tag = 'internal scratch']
  %s0 = inlined_call_operand.vmem [shape: f32[1,15], index: 0, kind: input, shape index: {}]
  %s1 = inlined_call_operand.vmem [shape: f32[1,1920], index: 1, kind: input, shape index: {}]
  %s2 = inlined_call_operand.vmem [shape: f32[1920,15], index: 2, kind: input, shape index: {}]
  %s3 = inlined_call_operand.vmem [shape: f32[15,1920], index: 3, kind: input, shape index: {}]
  %s4 = inlined_call_operand.vmem [shape: f32[32,1920], index: 4, kind: input, shape index: {}]
  %s5 = inlined_call_operand.vmem [shape: f32[32,1920], index: 5, kind: input, shape index: {}]
  %s6 = inlined_call_operand.vmem [shape: f32[1920,32], index: 6, kind: input, shape index: {}]
  %s7 = inlined_call_operand.vmem [shape: f32[32,32], index: 7, kind: input, shape index: {}]
  %s8 = inlined_call_operand.vmem [shape: f32[32,32], index: 8, kind: input, shape index: {}]
  %s9 = inlined_call_operand.hbm [shape: f32[1,1], index: 9, kind: output, shape index: {0}]
  %s10 = inlined_call_operand.hbm [shape: f32[32,32], index: 10, kind: output, shape index: {1}]
  %s11 = inlined_call_operand.hbm [shape: f32[32,32], index: 11, kind: output, shape index: {2}]
  %12 = xla_tuple %s9, %s10, %s11
  %s13 = sld [smem:[#allocation0]]
  $region62: #{tpu_custom_call.1} parent=0
    _
  %s15 = ssub.s32 1, %s13
  %s16 = scalar_select 0, %s15, %s13
  $region1: #{tpu_custom_call.1} parent=0
    #allocation2 [shape = 'u8[512]{0}', space=vmem, size = 0x400, scoped, tag = 'output window, operand 0, single buffered']
    #allocation3 [shape = 's32[1]{0}', space=sflag, size = 0x4, scoped, tag = 'scoped memory for tpu_custom_call.1']
    #allocation4 [shape = 'u8[16384]{0}', space=vmem, size = 0x4000, scoped, tag = 'output window, operand 1, single buffered']
    #allocation5 [shape = 's32[1]{0}', space=sflag, size = 0x4, scoped, tag = 'scoped memory for tpu_custom_call.1']
    #allocation6 [shape = 'u8[16384]{0}', space=vmem, size = 0x4000, scoped, tag = 'output window, operand 2, single buffered']
    %17 = vsyncpa [#allocation3], 0
    %18 = vsyncpa [#allocation5], 0
    // Predicated region
    $region2: #{tpu_custom_call.1} parent=1 // pred_check
      _
    $region3: #{tpu_custom_call.1} parent=1 // pred_check_branch
      %20 = sbr.rel (0) target = $region5
    $region4: #{tpu_custom_call.1} parent=1 // pred_region
      _
    $region5: #{tpu_custom_call.1} parent=1 // pred_fallthru
      _
    // Predicated region
    $region6: #{tpu_custom_call.1} parent=1 // pred_check
      _
    $region7: #{tpu_custom_call.1} parent=1 // pred_check_branch
      %22 = sbr.rel (0) target = $region9
    $region8: #{tpu_custom_call.1} parent=1 // pred_region
      _
    $region9: #{tpu_custom_call.1} parent=1 // pred_fallthru
      _
    // Predicated region
    $region10: #{tpu_custom_call.1} parent=1 // pred_check
      _
    $region11: #{tpu_custom_call.1} parent=1 // pred_check_branch
      %24 = sbr.rel (0) target = $region13
    $region12: #{tpu_custom_call.1} parent=1 // pred_region
      _
    $region13: #{tpu_custom_call.1} parent=1 // pred_fallthru
      _
    // Predicated region
    $region14: #{tpu_custom_call.1} parent=1 // pred_check
      _
    $region15: #{tpu_custom_call.1} parent=1 // pred_check_branch
      %26 = sbr.rel (0) target = $region17
    $region16: #{tpu_custom_call.1} parent=1 // pred_region
      _
    $region17: #{tpu_custom_call.1} parent=1 // pred_fallthru
      _
    // Predicated region
    $region18: #{tpu_custom_call.1} parent=1 // pred_check
      _
    $region19: #{tpu_custom_call.1} parent=1 // pred_check_branch
      %28 = sbr.rel (0) target = $region21
    $region20: #{tpu_custom_call.1} parent=1 // pred_region
      _
    $region21: #{tpu_custom_call.1} parent=1 // pred_fallthru
      _
    // Predicated region
    $region22: #{tpu_custom_call.1} parent=1 // pred_check
      _
    $region23: #{tpu_custom_call.1} parent=1 // pred_check_branch
      %30 = sbr.rel (0) target = $region25
    $region24: #{tpu_custom_call.1} parent=1 // pred_region
      _
    $region25: #{tpu_custom_call.1} parent=1 // pred_fallthru
      _
    // Predicated region
    $region26: #{tpu_custom_call.1} parent=1 // pred_check
      _
    $region27: #{tpu_custom_call.1} parent=1 // pred_check_branch
      %32 = sbr.rel (0) target = $region29
    $region28: #{tpu_custom_call.1} parent=1 // pred_region
      _
    $region29: #{tpu_custom_call.1} parent=1 // pred_fallthru
      _
    // Predicated region
    $region30: #{tpu_custom_call.1} parent=1 // pred_check
      _
    $region31: #{tpu_custom_call.1} parent=1 // pred_check_branch
      %34 = sbr.rel (0) target = $region33
    $region32: #{tpu_custom_call.1} parent=1 // pred_region
      _
    $region33: #{tpu_custom_call.1} parent=1 // pred_fallthru
      _
    // Predicated region
    $region34: #{tpu_custom_call.1} parent=1 // pred_check
      _
    $region35: #{tpu_custom_call.1} parent=1 // pred_check_branch
      %36 = sbr.rel (0) target = $region37
    $region36: #{tpu_custom_call.1} parent=1 // pred_region
      _
    $region37: #{tpu_custom_call.1} parent=1 // pred_fallthru
      _
    %v37 = vld [vmem:[%s0] sm:$0x1]
    %vm38 = vcmask 114688
    %v39 = vsel %vm38, %v37, -inf
    %40 = vmax.xlane.f32.xlu0 %v39
    %v41 = vpop.xlane.xlu0 %40
    %v42 = vsub.f32 %v37, %v41
    %v43 = vmul.f32 %v42, 1.442695
    %v44 = vpow.pop %v43
    %v45 = vsel %vm38, %v44, 0.0
    %46 = vadd.xlane.f32.xlu0 %v45
    %v47 = vpop.xlane.xlu0 %46
    %v48 = vrcp.pop %v47
    %v49 = vmul.f32 %v47, %v48
    %v50 = vsub.f32 1.0, %v49
    %v51 = vmul.f32 %v48, %v50
    %v52 = vadd.f32 %v48, %v51
    %vm53 = vweird.f32 %v47
    %vm54 = vweird.f32 %v48
    %vm55 = vmor %vm53, %vm54
    %v56 = vsel %vm55, %v48, %v52
    %v57 = vand.u32 2147483647, %v47
    %vm58 = vcmp.eq.f32.partialorder %v57, 8.507059e+37
    %v59 = vand.u32 %v47, 2147483648
    %v60 = vor.u32 1.1754944e-38, %v59
    %v61 = vsel %vm58, %v60, %v56
    %v62 = vmul.f32 %v44, %v61
    %v63 = vld [vmem:[%s1] sm:$0xff]
    %v64 = vld [vmem:[%s1 + $0x8] sm:$0xff]
    %v65 = vld [vmem:[%s2] sm:$0xff]
    %v66 = vld [vmem:[%s2 + $0x8] sm:$0xff]
    %v67 = vld [vmem:[%s2 + $0x10] sm:$0xff]
    %v68 = vld [vmem:[%s2 + $0x18] sm:$0xff]
    %v69 = vld [vmem:[%s2 + $0x20] sm:$0xff]
    %v70 = vld [vmem:[%s2 + $0x28] sm:$0xff]
    %v71 = vld [vmem:[%s2 + $0x30] sm:$0xff]
    %v72 = vld [vmem:[%s2 + $0x38] sm:$0xff]
    %v73 = vld [vmem:[%s2 + $0x40] sm:$0xff]
    %v74 = vld [vmem:[%s2 + $0x48] sm:$0xff]
    %v75 = vld [vmem:[%s2 + $0x50] sm:$0xff]
    %v76 = vld [vmem:[%s2 + $0x58] sm:$0xff]
    %v77 = vld [vmem:[%s2 + $0x60] sm:$0xff]
    %v78 = vld [vmem:[%s2 + $0x68] sm:$0xff]
    %v79 = vld [vmem:[%s2 + $0x70] sm:$0xff]
    %v80 = vld [vmem:[%s2 + $0x78] sm:$0xff]
    %v81 = vld [vmem:[%s2 + $0x80] sm:$0xff]
    %v82 = vld [vmem:[%s2 + $0x88] sm:$0xff]
    %v83 = vld [vmem:[%s2 + $0x90] sm:$0xff]
    %v84 = vld [vmem:[%s2 + $0x98] sm:$0xff]
    %v85 = vld [vmem:[%s2 + $0xa0] sm:$0xff]
    %v86 = vld [vmem:[%s2 + $0xa8] sm:$0xff]
    %v87 = vld [vmem:[%s2 + $0xb0] sm:$0xff]
    %v88 = vld [vmem:[%s2 + $0xb8] sm:$0xff]
    %v89 = vld [vmem:[%s2 + $0xc0] sm:$0xff]
    %v90 = vld [vmem:[%s2 + $0xc8] sm:$0xff]
    %v91 = vld [vmem:[%s2 + $0xd0] sm:$0xff]
    %v92 = vld [vmem:[%s2 + $0xd8] sm:$0xff]
    %v93 = vld [vmem:[%s2 + $0xe0] sm:$0xff]
    %v94 = vld [vmem:[%s2 + $0xe8] sm:$0xff]
    %v95 = vld [vmem:[%s2 + $0xf0] sm:$0xff]
    %v96 = vld [vmem:[%s2 + $0xf8] sm:$0xff]
    %v97 = vld [vmem:[%s2 + $0x100] sm:$0xff]
    %v98 = vld [vmem:[%s2 + $0x108] sm:$0xff]
    %v99 = vld [vmem:[%s2 + $0x110] sm:$0xff]
    %v100 = vld [vmem:[%s2 + $0x118] sm:$0xff]
    %v101 = vld [vmem:[%s2 + $0x120] sm:$0xff]
    %v102 = vld [vmem:[%s2 + $0x128] sm:$0xff]
    %v103 = vld [vmem:[%s2 + $0x130] sm:$0xff]
    %v104 = vld [vmem:[%s2 + $0x138] sm:$0xff]
    %v105 = vld [vmem:[%s2 + $0x140] sm:$0xff]
    %v106 = vld [vmem:[%s2 + $0x148] sm:$0xff]
    %v107 = vld [vmem:[%s2 + $0x150] sm:$0xff]
    %v108 = vld [vmem:[%s2 + $0x158] sm:$0xff]
    %v109 = vld [vmem:[%s2 + $0x160] sm:$0xff]
    %v110 = vld [vmem:[%s2 + $0x168] sm:$0xff]
    %v111 = vld [vmem:[%s2 + $0x170] sm:$0xff]
    %v112 = vld [vmem:[%s2 + $0x178] sm:$0xff]
    %v113 = vld [vmem:[%s2 + $0x180] sm:$0xff]
    %v114 = vld [vmem:[%s2 + $0x188] sm:$0xff]
    %v115 = vld [vmem:[%s2 + $0x190] sm:$0xff]
    %v116 = vld [vmem:[%s2 + $0x198] sm:$0xff]
    %v117 = vld [vmem:[%s2 + $0x1a0] sm:$0xff]
    %v118 = vld [vmem:[%s2 + $0x1a8] sm:$0xff]
    %v119 = vld [vmem:[%s2 + $0x1b0] sm:$0xff]
    %v120 = vld [vmem:[%s2 + $0x1b8] sm:$0xff]
    %v121 = vld [vmem:[%s2 + $0x1c0] sm:$0xff]
    %v122 = vld [vmem:[%s2 + $0x1c8] sm:$0xff]
    %v123 = vld [vmem:[%s2 + $0x1d0] sm:$0xff]
    %v124 = vld [vmem:[%s2 + $0x1d8] sm:$0xff]
    %v125 = vld [vmem:[%s2 + $0x1e0] sm:$0xff]
    %v126 = vld [vmem:[%s2 + $0x1e8] sm:$0xff]
    %v127 = vld [vmem:[%s2 + $0x1f0] sm:$0xff]
    %v128 = vld [vmem:[%s2 + $0x1f8] sm:$0xff]
    %v129 = vld [vmem:[%s2 + $0x200] sm:$0xff]
    %v130 = vld [vmem:[%s2 + $0x208] sm:$0xff]
    %v131 = vld [vmem:[%s2 + $0x210] sm:$0xff]
    %v132 = vld [vmem:[%s2 + $0x218] sm:$0xff]
    %v133 = vld [vmem:[%s2 + $0x220] sm:$0xff]
    %v134 = vld [vmem:[%s2 + $0x228] sm:$0xff]
    %v135 = vld [vmem:[%s2 + $0x230] sm:$0xff]
    %v136 = vld [vmem:[%s2 + $0x238] sm:$0xff]
    %v137 = vld [vmem:[%s2 + $0x240] sm:$0xff]
    %v138 = vld [vmem:[%s2 + $0x248] sm:$0xff]
    %v139 = vld [vmem:[%s2 + $0x250] sm:$0xff]
    %v140 = vld [vmem:[%s2 + $0x258] sm:$0xff]
    %v141 = vld [vmem:[%s2 + $0x260] sm:$0xff]
    %v142 = vld [vmem:[%s2 + $0x268] sm:$0xff]
    %v143 = vld [vmem:[%s2 + $0x270] sm:$0xff]
    %v144 = vld [vmem:[%s2 + $0x278] sm:$0xff]
    %v145 = vld [vmem:[%s2 + $0x280] sm:$0xff]
    %v146 = vld [vmem:[%s2 + $0x288] sm:$0xff]
    %v147 = vld [vmem:[%s2 + $0x290] sm:$0xff]
    %v148 = vld [vmem:[%s2 + $0x298] sm:$0xff]
    %v149 = vld [vmem:[%s2 + $0x2a0] sm:$0xff]
    %v150 = vld [vmem:[%s2 + $0x2a8] sm:$0xff]
    %v151 = vld [vmem:[%s2 + $0x2b0] sm:$0xff]
    %v152 = vld [vmem:[%s2 + $0x2b8] sm:$0xff]
    %v153 = vld [vmem:[%s2 + $0x2c0] sm:$0xff]
    %v154 = vld [vmem:[%s2 + $0x2c8] sm:$0xff]
    %v155 = vld [vmem:[%s2 + $0x2d0] sm:$0xff]
    %v156 = vld [vmem:[%s2 + $0x2d8] sm:$0xff]
    %v157 = vld [vmem:[%s2 + $0x2e0] sm:$0xff]
    %v158 = vld [vmem:[%s2 + $0x2e8] sm:$0xff]
    %v159 = vld [vmem:[%s2 + $0x2f0] sm:$0xff]
    %v160 = vld [vmem:[%s2 + $0x2f8] sm:$0xff]
    %v161 = vld [vmem:[%s2 + $0x300] sm:$0xff]
    %v162 = vld [vmem:[%s2 + $0x308] sm:$0xff]
    %v163 = vld [vmem:[%s2 + $0x310] sm:$0xff]
    %v164 = vld [vmem:[%s2 + $0x318] sm:$0xff]
    %v165 = vld [vmem:[%s2 + $0x320] sm:$0xff]
    %v166 = vld [vmem:[%s2 + $0x328] sm:$0xff]
    %v167 = vld [vmem:[%s2 + $0x330] sm:$0xff]
    %v168 = vld [vmem:[%s2 + $0x338] sm:$0xff]
    %v169 = vld [vmem:[%s2 + $0x340] sm:$0xff]
    %v170 = vld [vmem:[%s2 + $0x348] sm:$0xff]
    %v171 = vld [vmem:[%s2 + $0x350] sm:$0xff]
    %v172 = vld [vmem:[%s2 + $0x358] sm:$0xff]
    %v173 = vld [vmem:[%s2 + $0x360] sm:$0xff]
    %v174 = vld [vmem:[%s2 + $0x368] sm:$0xff]
    %v175 = vld [vmem:[%s2 + $0x370] sm:$0xff]
    %v176 = vld [vmem:[%s2 + $0x378] sm:$0xff]
    %v177 = vld [vmem:[%s2 + $0x380] sm:$0xff]
    %v178 = vld [vmem:[%s2 + $0x388] sm:$0xff]
    %v179 = vld [vmem:[%s2 + $0x390] sm:$0xff]
    %v180 = vld [vmem:[%s2 + $0x398] sm:$0xff]
    %v181 = vld [vmem:[%s2 + $0x3a0] sm:$0xff]
    %v182 = vld [vmem:[%s2 + $0x3a8] sm:$0xff]
    %v183 = vld [vmem:[%s2 + $0x3b0] sm:$0xff]
    %v184 = vld [vmem:[%s2 + $0x3b8] sm:$0xff]
    %v185 = vld [vmem:[%s2 + $0x3c0] sm:$0xff]
    %v186 = vld [vmem:[%s2 + $0x3c8] sm:$0xff]
    %v187 = vld [vmem:[%s2 + $0x3d0] sm:$0xff]
    %v188 = vld [vmem:[%s2 + $0x3d8] sm:$0xff]
    %v189 = vld [vmem:[%s2 + $0x3e0] sm:$0xff]
    %v190 = vld [vmem:[%s2 + $0x3e8] sm:$0xff]
    %v191 = vld [vmem:[%s2 + $0x3f0] sm:$0xff]
    %v192 = vld [vmem:[%s2 + $0x3f8] sm:$0xff]
    %v193 = vld [vmem:[%s2 + $0x400] sm:$0xff]
    %v194 = vld [vmem:[%s2 + $0x408] sm:$0xff]
    %v195 = vld [vmem:[%s2 + $0x410] sm:$0xff]
    %v196 = vld [vmem:[%s2 + $0x418] sm:$0xff]
    %v197 = vld [vmem:[%s2 + $0x420] sm:$0xff]
    %v198 = vld [vmem:[%s2 + $0x428] sm:$0xff]
    %v199 = vld [vmem:[%s2 + $0x430] sm:$0xff]
    %v200 = vld [vmem:[%s2 + $0x438] sm:$0xff]
    %v201 = vld [vmem:[%s2 + $0x440] sm:$0xff]
    %v202 = vld [vmem:[%s2 + $0x448] sm:$0xff]
    %v203 = vld [vmem:[%s2 + $0x450] sm:$0xff]
    %v204 = vld [vmem:[%s2 + $0x458] sm:$0xff]
    %v205 = vld [vmem:[%s2 + $0x460] sm:$0xff]
    %v206 = vld [vmem:[%s2 + $0x468] sm:$0xff]
    %v207 = vld [vmem:[%s2 + $0x470] sm:$0xff]
    %v208 = vld [vmem:[%s2 + $0x478] sm:$0xff]
    %v209 = vld [vmem:[%s2 + $0x480] sm:$0xff]
    %v210 = vld [vmem:[%s2 + $0x488] sm:$0xff]
    %v211 = vld [vmem:[%s2 + $0x490] sm:$0xff]
    %v212 = vld [vmem:[%s2 + $0x498] sm:$0xff]
    %v213 = vld [vmem:[%s2 + $0x4a0] sm:$0xff]
    %v214 = vld [vmem:[%s2 + $0x4a8] sm:$0xff]
    %v215 = vld [vmem:[%s2 + $0x4b0] sm:$0xff]
    %v216 = vld [vmem:[%s2 + $0x4b8] sm:$0xff]
    %v217 = vld [vmem:[%s2 + $0x4c0] sm:$0xff]
    %v218 = vld [vmem:[%s2 + $0x4c8] sm:$0xff]
    %v219 = vld [vmem:[%s2 + $0x4d0] sm:$0xff]
    %v220 = vld [vmem:[%s2 + $0x4d8] sm:$0xff]
    %v221 = vld [vmem:[%s2 + $0x4e0] sm:$0xff]
    %v222 = vld [vmem:[%s2 + $0x4e8] sm:$0xff]
    %v223 = vld [vmem:[%s2 + $0x4f0] sm:$0xff]
    %v224 = vld [vmem:[%s2 + $0x4f8] sm:$0xff]
    %v225 = vld [vmem:[%s2 + $0x500] sm:$0xff]
    %v226 = vld [vmem:[%s2 + $0x508] sm:$0xff]
    %v227 = vld [vmem:[%s2 + $0x510] sm:$0xff]
    %v228 = vld [vmem:[%s2 + $0x518] sm:$0xff]
    %v229 = vld [vmem:[%s2 + $0x520] sm:$0xff]
    %v230 = vld [vmem:[%s2 + $0x528] sm:$0xff]
    %v231 = vld [vmem:[%s2 + $0x530] sm:$0xff]
    %v232 = vld [vmem:[%s2 + $0x538] sm:$0xff]
    %v233 = vld [vmem:[%s2 + $0x540] sm:$0xff]
    %v234 = vld [vmem:[%s2 + $0x548] sm:$0xff]
    %v235 = vld [vmem:[%s2 + $0x550] sm:$0xff]
    %v236 = vld [vmem:[%s2 + $0x558] sm:$0xff]
    %v237 = vld [vmem:[%s2 + $0x560] sm:$0xff]
    %v238 = vld [vmem:[%s2 + $0x568] sm:$0xff]
    %v239 = vld [vmem:[%s2 + $0x570] sm:$0xff]
    %v240 = vld [vmem:[%s2 + $0x578] sm:$0xff]
    %v241 = vld [vmem:[%s2 + $0x580] sm:$0xff]
    %v242 = vld [vmem:[%s2 + $0x588] sm:$0xff]
    %v243 = vld [vmem:[%s2 + $0x590] sm:$0xff]
    %v244 = vld [vmem:[%s2 + $0x598] sm:$0xff]
    %v245 = vld [vmem:[%s2 + $0x5a0] sm:$0xff]
    %v246 = vld [vmem:[%s2 + $0x5a8] sm:$0xff]
    %v247 = vld [vmem:[%s2 + $0x5b0] sm:$0xff]
    %v248 = vld [vmem:[%s2 + $0x5b8] sm:$0xff]
    %v249 = vld [vmem:[%s2 + $0x5c0] sm:$0xff]
    %v250 = vld [vmem:[%s2 + $0x5c8] sm:$0xff]
    %v251 = vld [vmem:[%s2 + $0x5d0] sm:$0xff]
    %v252 = vld [vmem:[%s2 + $0x5d8] sm:$0xff]
    %v253 = vld [vmem:[%s2 + $0x5e0] sm:$0xff]
    %v254 = vld [vmem:[%s2 + $0x5e8] sm:$0xff]
    %v255 = vld [vmem:[%s2 + $0x5f0] sm:$0xff]
    %v256 = vld [vmem:[%s2 + $0x5f8] sm:$0xff]
    %v257 = vld [vmem:[%s2 + $0x600] sm:$0xff]
    %v258 = vld [vmem:[%s2 + $0x608] sm:$0xff]
    %v259 = vld [vmem:[%s2 + $0x610] sm:$0xff]
    %v260 = vld [vmem:[%s2 + $0x618] sm:$0xff]
    %v261 = vld [vmem:[%s2 + $0x620] sm:$0xff]
    %v262 = vld [vmem:[%s2 + $0x628] sm:$0xff]
    %v263 = vld [vmem:[%s2 + $0x630] sm:$0xff]
    %v264 = vld [vmem:[%s2 + $0x638] sm:$0xff]
    %v265 = vld [vmem:[%s2 + $0x640] sm:$0xff]
    %v266 = vld [vmem:[%s2 + $0x648] sm:$0xff]
    %v267 = vld [vmem:[%s2 + $0x650] sm:$0xff]
    %v268 = vld [vmem:[%s2 + $0x658] sm:$0xff]
    %v269 = vld [vmem:[%s2 + $0x660] sm:$0xff]
    %v270 = vld [vmem:[%s2 + $0x668] sm:$0xff]
    %v271 = vld [vmem:[%s2 + $0x670] sm:$0xff]
    %v272 = vld [vmem:[%s2 + $0x678] sm:$0xff]
    %v273 = vld [vmem:[%s2 + $0x680] sm:$0xff]
    %v274 = vld [vmem:[%s2 + $0x688] sm:$0xff]
    %v275 = vld [vmem:[%s2 + $0x690] sm:$0xff]
    %v276 = vld [vmem:[%s2 + $0x698] sm:$0xff]
    %v277 = vld [vmem:[%s2 + $0x6a0] sm:$0xff]
    %v278 = vld [vmem:[%s2 + $0x6a8] sm:$0xff]
    %v279 = vld [vmem:[%s2 + $0x6b0] sm:$0xff]
    %v280 = vld [vmem:[%s2 + $0x6b8] sm:$0xff]
    %v281 = vld [vmem:[%s2 + $0x6c0] sm:$0xff]
    %v282 = vld [vmem:[%s2 + $0x6c8] sm:$0xff]
    %v283 = vld [vmem:[%s2 + $0x6d0] sm:$0xff]
    %v284 = vld [vmem:[%s2 + $0x6d8] sm:$0xff]
    %v285 = vld [vmem:[%s2 + $0x6e0] sm:$0xff]
    %v286 = vld [vmem:[%s2 + $0x6e8] sm:$0xff]
    %v287 = vld [vmem:[%s2 + $0x6f0] sm:$0xff]
    %v288 = vld [vmem:[%s2 + $0x6f8] sm:$0xff]
    %v289 = vld [vmem:[%s2 + $0x700] sm:$0xff]
    %v290 = vld [vmem:[%s2 + $0x708] sm:$0xff]
    %v291 = vld [vmem:[%s2 + $0x710] sm:$0xff]
    %v292 = vld [vmem:[%s2 + $0x718] sm:$0xff]
    %v293 = vld [vmem:[%s2 + $0x720] sm:$0xff]
    %v294 = vld [vmem:[%s2 + $0x728] sm:$0xff]
    %v295 = vld [vmem:[%s2 + $0x730] sm:$0xff]
    %v296 = vld [vmem:[%s2 + $0x738] sm:$0xff]
    %v297 = vld [vmem:[%s2 + $0x740] sm:$0xff]
    %v298 = vld [vmem:[%s2 + $0x748] sm:$0xff]
    %v299 = vld [vmem:[%s2 + $0x750] sm:$0xff]
    %v300 = vld [vmem:[%s2 + $0x758] sm:$0xff]
    %v301 = vld [vmem:[%s2 + $0x760] sm:$0xff]
    %v302 = vld [vmem:[%s2 + $0x768] sm:$0xff]
    %v303 = vld [vmem:[%s2 + $0x770] sm:$0xff]
    %v304 = vld [vmem:[%s2 + $0x778] sm:$0xff]
    %v305 = vld [vmem:[%s3] sm:$0xff]
    %v306 = vld [vmem:[%s3 + $0x8] sm:$0xff]
    %v307 = vld [vmem:[%s3 + $0x10] sm:$0xff]
    %v308 = vld [vmem:[%s3 + $0x18] sm:$0xff]
    %v309 = vld [vmem:[%s3 + $0x20] sm:$0xff]
    %v310 = vld [vmem:[%s3 + $0x28] sm:$0xff]
    %v311 = vld [vmem:[%s3 + $0x30] sm:$0xff]
    %v312 = vld [vmem:[%s3 + $0x38] sm:$0xff]
    %v313 = vld [vmem:[%s3 + $0x40] sm:$0xff]
    %v314 = vld [vmem:[%s3 + $0x48] sm:$0xff]
    %v315 = vld [vmem:[%s3 + $0x50] sm:$0xff]
    %v316 = vld [vmem:[%s3 + $0x58] sm:$0xff]
    %v317 = vld [vmem:[%s3 + $0x60] sm:$0xff]
    %v318 = vld [vmem:[%s3 + $0x68] sm:$0xff]
    %v319 = vld [vmem:[%s3 + $0x70] sm:$0xff]
    %v320 = vld [vmem:[%s3 + $0x78] sm:$0x7f]
    %v321 = vld [vmem:[%s3 + $0x80] sm:$0x7f]
    %v322 = vld [vmem:[%s3 + $0x88] sm:$0x7f]
    %v323 = vld [vmem:[%s3 + $0x90] sm:$0x7f]
    %v324 = vld [vmem:[%s3 + $0x98] sm:$0x7f]
    %v325 = vld [vmem:[%s3 + $0xa0] sm:$0x7f]
    %v326 = vld [vmem:[%s3 + $0xa8] sm:$0x7f]
    %v327 = vld [vmem:[%s3 + $0xb0] sm:$0x7f]
    %v328 = vld [vmem:[%s3 + $0xb8] sm:$0x7f]
    %v329 = vld [vmem:[%s3 + $0xc0] sm:$0x7f]
    %v330 = vld [vmem:[%s3 + $0xc8] sm:$0x7f]
    %v331 = vld [vmem:[%s3 + $0xd0] sm:$0x7f]
    %v332 = vld [vmem:[%s3 + $0xd8] sm:$0x7f]
    %v333 = vld [vmem:[%s3 + $0xe0] sm:$0x7f]
    %v334 = vld [vmem:[%s3 + $0xe8] sm:$0x7f]
    %v337 = vperm.slane %v63, 0
    %v338 = vperm.slane %v63, 1
    %v339 = vperm.slane %v63, 2
    %v340 = vperm.slane %v63, 3
    %v341 = vperm.slane %v63, 4
    %v342 = vperm.slane %v63, 5
    %v343 = vperm.slane %v63, 6
    %v344 = vperm.slane %v63, 7
    %v345 = vperm.slane %v64, 0
    %v346 = vperm.slane %v64, 1
    %v347 = vperm.slane %v64, 2
    %v348 = vperm.slane %v64, 3
    %v349 = vperm.slane %v64, 4
    %v350 = vperm.slane %v64, 5
    %v351 = vperm.slane %v64, 6
    %367 = vmatpush.msra.mxu0 %v80
    %368 = vmatpush.msra.mxu0 %v79
    %369 = vmatpush.msra.mxu0 %v78
    %370 = vmatpush.msra.mxu0 %v77
    %371 = vmatpush.msra.mxu0 %v76
    %372 = vmatpush.msra.mxu0 %v75
    %373 = vmatpush.msra.mxu0 %v74
    %374 = vmatpush.msra.mxu0 %v73
    %375 = vmatpush.msra.mxu0 %v72
    %376 = vmatpush.msra.mxu0 %v71
    %377 = vmatpush.msra.mxu0 %v70
    %378 = vmatpush.msra.mxu0 %v69
    %379 = vmatpush.msra.mxu0 %v68
    %380 = vmatpush.msra.mxu0 %v67
    %381 = vmatpush.msra.mxu0 %v66
    %382 = vmatpush.msra.mxu0 %v65
    %383 = vmatmul.f32.gmra.mxu0 %v337
    %v384 = vpop.f32.mrf.mxu0
    %v385 = vadd.f32 0.0, %v384
    %386 = vdwg.mxu0
    %387 = vmatpush.msra.mxu0 %v96
    %388 = vmatpush.msra.mxu0 %v95
    %389 = vmatpush.msra.mxu0 %v94
    %390 = vmatpush.msra.mxu0 %v93
    %391 = vmatpush.msra.mxu0 %v92
    %392 = vmatpush.msra.mxu0 %v91
    %393 = vmatpush.msra.mxu0 %v90
    %394 = vmatpush.msra.mxu0 %v89
    %395 = vmatpush.msra.mxu0 %v88
    %396 = vmatpush.msra.mxu0 %v87
    %397 = vmatpush.msra.mxu0 %v86
    %398 = vmatpush.msra.mxu0 %v85
    %399 = vmatpush.msra.mxu0 %v84
    %400 = vmatpush.msra.mxu0 %v83
    %401 = vmatpush.msra.mxu0 %v82
    %402 = vmatpush.msra.mxu0 %v81
    %403 = vmatmul.f32.gmra.mxu0 %v338
    %v404 = vpop.f32.mrf.mxu0
    %v405 = vadd.f32 %v385, %v404
    %406 = vdwg.mxu0
    %407 = vmatpush.msra.mxu0 %v112
    %408 = vmatpush.msra.mxu0 %v111
    %409 = vmatpush.msra.mxu0 %v110
    %410 = vmatpush.msra.mxu0 %v109
    %411 = vmatpush.msra.mxu0 %v108
    %412 = vmatpush.msra.mxu0 %v107
    %413 = vmatpush.msra.mxu0 %v106
    %414 = vmatpush.msra.mxu0 %v105
    %415 = vmatpush.msra.mxu0 %v104
    %416 = vmatpush.msra.mxu0 %v103
    %417 = vmatpush.msra.mxu0 %v102
    %418 = vmatpush.msra.mxu0 %v101
    %419 = vmatpush.msra.mxu0 %v100
    %420 = vmatpush.msra.mxu0 %v99
    %421 = vmatpush.msra.mxu0 %v98
    %422 = vmatpush.msra.mxu0 %v97
    %423 = vmatmul.f32.gmra.mxu0 %v339
    %v424 = vpop.f32.mrf.mxu0
    %v425 = vadd.f32 %v405, %v424
    %426 = vdwg.mxu0
    %427 = vmatpush.msra.mxu0 %v128
    %428 = vmatpush.msra.mxu0 %v127
    %429 = vmatpush.msra.mxu0 %v126
    %430 = vmatpush.msra.mxu0 %v125
    %431 = vmatpush.msra.mxu0 %v124
    %432 = vmatpush.msra.mxu0 %v123
    %433 = vmatpush.msra.mxu0 %v122
    %434 = vmatpush.msra.mxu0 %v121
    %435 = vmatpush.msra.mxu0 %v120
    %436 = vmatpush.msra.mxu0 %v119
    %437 = vmatpush.msra.mxu0 %v118
    %438 = vmatpush.msra.mxu0 %v117
    %439 = vmatpush.msra.mxu0 %v116
    %440 = vmatpush.msra.mxu0 %v115
    %441 = vmatpush.msra.mxu0 %v114
    %442 = vmatpush.msra.mxu0 %v113
    %443 = vmatmul.f32.gmra.mxu0 %v340
    %v444 = vpop.f32.mrf.mxu0
    %v445 = vadd.f32 %v425, %v444
    %446 = vdwg.mxu0
    %447 = vmatpush.msra.mxu0 %v144
    %448 = vmatpush.msra.mxu0 %v143
    %449 = vmatpush.msra.mxu0 %v142
    %450 = vmatpush.msra.mxu0 %v141
    %451 = vmatpush.msra.mxu0 %v140
    %452 = vmatpush.msra.mxu0 %v139
    %453 = vmatpush.msra.mxu0 %v138
    %454 = vmatpush.msra.mxu0 %v137
    %455 = vmatpush.msra.mxu0 %v136
    %456 = vmatpush.msra.mxu0 %v135
    %457 = vmatpush.msra.mxu0 %v134
    %458 = vmatpush.msra.mxu0 %v133
    %459 = vmatpush.msra.mxu0 %v132
    %460 = vmatpush.msra.mxu0 %v131
    %461 = vmatpush.msra.mxu0 %v130
    %462 = vmatpush.msra.mxu0 %v129
    %463 = vmatmul.f32.gmra.mxu0 %v341
    %v464 = vpop.f32.mrf.mxu0
    %v465 = vadd.f32 %v445, %v464
    %466 = vdwg.mxu0
    %467 = vmatpush.msra.mxu0 %v160
    %468 = vmatpush.msra.mxu0 %v159
    %469 = vmatpush.msra.mxu0 %v158
    %470 = vmatpush.msra.mxu0 %v157
    %471 = vmatpush.msra.mxu0 %v156
    %472 = vmatpush.msra.mxu0 %v155
    %473 = vmatpush.msra.mxu0 %v154
    %474 = vmatpush.msra.mxu0 %v153
    %475 = vmatpush.msra.mxu0 %v152
    %476 = vmatpush.msra.mxu0 %v151
    %477 = vmatpush.msra.mxu0 %v150
    %478 = vmatpush.msra.mxu0 %v149
    %479 = vmatpush.msra.mxu0 %v148
    %480 = vmatpush.msra.mxu0 %v147
    %481 = vmatpush.msra.mxu0 %v146
    %482 = vmatpush.msra.mxu0 %v145
    %483 = vmatmul.f32.gmra.mxu0 %v342
    %v484 = vpop.f32.mrf.mxu0
    %v485 = vadd.f32 %v465, %v484
    %486 = vdwg.mxu0
    %487 = vmatpush.msra.mxu0 %v176
    %488 = vmatpush.msra.mxu0 %v175
    %489 = vmatpush.msra.mxu0 %v174
    %490 = vmatpush.msra.mxu0 %v173
    %491 = vmatpush.msra.mxu0 %v172
    %492 = vmatpush.msra.mxu0 %v171
    %493 = vmatpush.msra.mxu0 %v170
    %494 = vmatpush.msra.mxu0 %v169
    %495 = vmatpush.msra.mxu0 %v168
    %496 = vmatpush.msra.mxu0 %v167
    %497 = vmatpush.msra.mxu0 %v166
    %498 = vmatpush.msra.mxu0 %v165
    %499 = vmatpush.msra.mxu0 %v164
    %500 = vmatpush.msra.mxu0 %v163
    %501 = vmatpush.msra.mxu0 %v162
    %502 = vmatpush.msra.mxu0 %v161
    %503 = vmatmul.f32.gmra.mxu0 %v343
    %v504 = vpop.f32.mrf.mxu0
    %v505 = vadd.f32 %v485, %v504
    %506 = vdwg.mxu0
    %507 = vmatpush.msra.mxu0 %v192
    %508 = vmatpush.msra.mxu0 %v191
    %509 = vmatpush.msra.mxu0 %v190
    %510 = vmatpush.msra.mxu0 %v189
    %511 = vmatpush.msra.mxu0 %v188
    %512 = vmatpush.msra.mxu0 %v187
    %513 = vmatpush.msra.mxu0 %v186
    %514 = vmatpush.msra.mxu0 %v185
    %515 = vmatpush.msra.mxu0 %v184
    %516 = vmatpush.msra.mxu0 %v183
    %517 = vmatpush.msra.mxu0 %v182
    %518 = vmatpush.msra.mxu0 %v181
    %519 = vmatpush.msra.mxu0 %v180
    %520 = vmatpush.msra.mxu0 %v179
    %521 = vmatpush.msra.mxu0 %v178
    %522 = vmatpush.msra.mxu0 %v177
    %523 = vmatmul.f32.gmra.mxu0 %v344
    %v524 = vpop.f32.mrf.mxu0
    %v525 = vadd.f32 %v505, %v524
    %526 = vdwg.mxu0
    %527 = vmatpush.msra.mxu0 %v208
    %528 = vmatpush.msra.mxu0 %v207
    %529 = vmatpush.msra.mxu0 %v206
    %530 = vmatpush.msra.mxu0 %v205
    %531 = vmatpush.msra.mxu0 %v204
    %532 = vmatpush.msra.mxu0 %v203
    %533 = vmatpush.msra.mxu0 %v202
    %534 = vmatpush.msra.mxu0 %v201
    %535 = vmatpush.msra.mxu0 %v200
    %536 = vmatpush.msra.mxu0 %v199
    %537 = vmatpush.msra.mxu0 %v198
    %538 = vmatpush.msra.mxu0 %v197
    %539 = vmatpush.msra.mxu0 %v196
    %540 = vmatpush.msra.mxu0 %v195
    %541 = vmatpush.msra.mxu0 %v194
    %542 = vmatpush.msra.mxu0 %v193
    %543 = vmatmul.f32.gmra.mxu0 %v345
    %v544 = vpop.f32.mrf.mxu0
    %v545 = vadd.f32 %v525, %v544
    %546 = vdwg.mxu0
    %547 = vmatpush.msra.mxu0 %v224
    %548 = vmatpush.msra.mxu0 %v223
    %549 = vmatpush.msra.mxu0 %v222
    %550 = vmatpush.msra.mxu0 %v221
    %551 = vmatpush.msra.mxu0 %v220
    %552 = vmatpush.msra.mxu0 %v219
    %553 = vmatpush.msra.mxu0 %v218
    %554 = vmatpush.msra.mxu0 %v217
    %555 = vmatpush.msra.mxu0 %v216
    %556 = vmatpush.msra.mxu0 %v215
    %557 = vmatpush.msra.mxu0 %v214
    %558 = vmatpush.msra.mxu0 %v213
    %559 = vmatpush.msra.mxu0 %v212
    %560 = vmatpush.msra.mxu0 %v211
    %561 = vmatpush.msra.mxu0 %v210
    %562 = vmatpush.msra.mxu0 %v209
    %563 = vmatmul.f32.gmra.mxu0 %v346
    %v564 = vpop.f32.mrf.mxu0
    %v565 = vadd.f32 %v545, %v564
    %566 = vdwg.mxu0
    %567 = vmatpush.msra.mxu0 %v240
    %568 = vmatpush.msra.mxu0 %v239
    %569 = vmatpush.msra.mxu0 %v238
    %570 = vmatpush.msra.mxu0 %v237
    %571 = vmatpush.msra.mxu0 %v236
    %572 = vmatpush.msra.mxu0 %v235
    %573 = vmatpush.msra.mxu0 %v234
    %574 = vmatpush.msra.mxu0 %v233
    %575 = vmatpush.msra.mxu0 %v232
    %576 = vmatpush.msra.mxu0 %v231
    %577 = vmatpush.msra.mxu0 %v230
    %578 = vmatpush.msra.mxu0 %v229
    %579 = vmatpush.msra.mxu0 %v228
    %580 = vmatpush.msra.mxu0 %v227
    %581 = vmatpush.msra.mxu0 %v226
    %582 = vmatpush.msra.mxu0 %v225
    %583 = vmatmul.f32.gmra.mxu0 %v347
    %v584 = vpop.f32.mrf.mxu0
    %v585 = vadd.f32 %v565, %v584
    %586 = vdwg.mxu0
    %587 = vmatpush.msra.mxu0 %v256
    %588 = vmatpush.msra.mxu0 %v255
    %589 = vmatpush.msra.mxu0 %v254
    %590 = vmatpush.msra.mxu0 %v253
    %591 = vmatpush.msra.mxu0 %v252
    %592 = vmatpush.msra.mxu0 %v251
    %593 = vmatpush.msra.mxu0 %v250
    %594 = vmatpush.msra.mxu0 %v249
    %595 = vmatpush.msra.mxu0 %v248
    %596 = vmatpush.msra.mxu0 %v247
    %597 = vmatpush.msra.mxu0 %v246
    %598 = vmatpush.msra.mxu0 %v245
    %599 = vmatpush.msra.mxu0 %v244
    %600 = vmatpush.msra.mxu0 %v243
    %601 = vmatpush.msra.mxu0 %v242
    %602 = vmatpush.msra.mxu0 %v241
    %603 = vmatmul.f32.gmra.mxu0 %v348
    %v604 = vpop.f32.mrf.mxu0
    %v605 = vadd.f32 %v585, %v604
    %606 = vdwg.mxu0
    %607 = vmatpush.msra.mxu0 %v272
    %608 = vmatpush.msra.mxu0 %v271
    %609 = vmatpush.msra.mxu0 %v270
    %610 = vmatpush.msra.mxu0 %v269
    %611 = vmatpush.msra.mxu0 %v268
    %612 = vmatpush.msra.mxu0 %v267
    %613 = vmatpush.msra.mxu0 %v266
    %614 = vmatpush.msra.mxu0 %v265
    %615 = vmatpush.msra.mxu0 %v264
    %616 = vmatpush.msra.mxu0 %v263
    %617 = vmatpush.msra.mxu0 %v262
    %618 = vmatpush.msra.mxu0 %v261
    %619 = vmatpush.msra.mxu0 %v260
    %620 = vmatpush.msra.mxu0 %v259
    %621 = vmatpush.msra.mxu0 %v258
    %622 = vmatpush.msra.mxu0 %v257
    %623 = vmatmul.f32.gmra.mxu0 %v349
    %v624 = vpop.f32.mrf.mxu0
    %v625 = vadd.f32 %v605, %v624
    %626 = vdwg.mxu0
    %627 = vmatpush.msra.mxu0 %v288
    %628 = vmatpush.msra.mxu0 %v287
    %629 = vmatpush.msra.mxu0 %v286
    %630 = vmatpush.msra.mxu0 %v285
    %631 = vmatpush.msra.mxu0 %v284
    %632 = vmatpush.msra.mxu0 %v283
    %633 = vmatpush.msra.mxu0 %v282
    %634 = vmatpush.msra.mxu0 %v281
    %635 = vmatpush.msra.mxu0 %v280
    %636 = vmatpush.msra.mxu0 %v279
    %637 = vmatpush.msra.mxu0 %v278
    %638 = vmatpush.msra.mxu0 %v277
    %639 = vmatpush.msra.mxu0 %v276
    %640 = vmatpush.msra.mxu0 %v275
    %641 = vmatpush.msra.mxu0 %v274
    %642 = vmatpush.msra.mxu0 %v273
    %643 = vmatmul.f32.gmra.mxu0 %v350
    %v644 = vpop.f32.mrf.mxu0
    %v645 = vadd.f32 %v625, %v644
    %646 = vdwg.mxu0
    %647 = vmatpush.msra.mxu0 %v304
    %648 = vmatpush.msra.mxu0 %v303
    %649 = vmatpush.msra.mxu0 %v302
    %650 = vmatpush.msra.mxu0 %v301
    %651 = vmatpush.msra.mxu0 %v300
    %652 = vmatpush.msra.mxu0 %v299
    %653 = vmatpush.msra.mxu0 %v298
    %654 = vmatpush.msra.mxu0 %v297
    %655 = vmatpush.msra.mxu0 %v296
    %656 = vmatpush.msra.mxu0 %v295
    %657 = vmatpush.msra.mxu0 %v294
    %658 = vmatpush.msra.mxu0 %v293
    %659 = vmatpush.msra.mxu0 %v292
    %660 = vmatpush.msra.mxu0 %v291
    %661 = vmatpush.msra.mxu0 %v290
    %662 = vmatpush.msra.mxu0 %v289
    %663 = vmatmul.f32.gmra.mxu0 %v351
    %v664 = vpop.f32.mrf.mxu0
    %v665 = vadd.f32 %v645, %v664
    %666 = vdwg.mxu0
    %v667 = vmul.f32 %v665, 0.0078125
    %vm668 = vcmask 121856
    %v670 = vsel %vm668, %v667, 0
    %vm672 = vcmask 1046528
    %v674 = vsel %vm672, %v320, 0
    %v677 = vsel %vm672, %v321, 0
    %v680 = vsel %vm672, %v322, 0
    %v683 = vsel %vm672, %v323, 0
    %v686 = vsel %vm672, %v324, 0
    %v689 = vsel %vm672, %v325, 0
    %v692 = vsel %vm672, %v326, 0
    %v695 = vsel %vm672, %v327, 0
    %v698 = vsel %vm672, %v328, 0
    %v701 = vsel %vm672, %v329, 0
    %v704 = vsel %vm672, %v330, 0
    %v707 = vsel %vm672, %v331, 0
    %v710 = vsel %vm672, %v332, 0
    %v713 = vsel %vm672, %v333, 0
    %v716 = vsel %vm672, %v334, 0
    %718 = vmatpush.msra.mxu0 0.0
    %719 = vmatpush.msra.mxu0 0.0
    %720 = vmatpush.msra.mxu0 0.0
    %721 = vmatpush.msra.mxu0 0.0
    %722 = vmatpush.msra.mxu0 0.0
    %723 = vmatpush.msra.mxu0 0.0
    %724 = vmatpush.msra.mxu0 0.0
    %725 = vmatpush.msra.mxu0 0.0
    %726 = vmatpush.msra.mxu0 0.0
    %727 = vmatpush.msra.mxu0 0.0
    %728 = vmatpush.msra.mxu0 0.0
    %729 = vmatpush.msra.mxu0 0.0
    %730 = vmatpush.msra.mxu0 0.0
    %731 = vmatpush.msra.mxu0 0.0
    %732 = vmatpush.msra.mxu0 %v674
    %733 = vmatpush.msra.mxu0 %v305
    %734 = vmatmul.f32.gmra.mxu0 %v670
    %v735 = vpop.f32.mrf.mxu0
    %v736 = vadd.f32 0.0, %v735
    %737 = vdwg.mxu0
    %738 = vmatpush.msra.mxu0 0.0
    %739 = vmatpush.msra.mxu0 0.0
    %740 = vmatpush.msra.mxu0 0.0
    %741 = vmatpush.msra.mxu0 0.0
    %742 = vmatpush.msra.mxu0 0.0
    %743 = vmatpush.msra.mxu0 0.0
    %744 = vmatpush.msra.mxu0 0.0
    %745 = vmatpush.msra.mxu0 0.0
    %746 = vmatpush.msra.mxu0 0.0
    %747 = vmatpush.msra.mxu0 0.0
    %748 = vmatpush.msra.mxu0 0.0
    %749 = vmatpush.msra.mxu0 0.0
    %750 = vmatpush.msra.mxu0 0.0
    %751 = vmatpush.msra.mxu0 0.0
    %752 = vmatpush.msra.mxu0 %v677
    %753 = vmatpush.msra.mxu0 %v306
    %754 = vmatmul.f32.gmra.mxu0 %v670
    %v755 = vpop.f32.mrf.mxu0
    %v756 = vadd.f32 0.0, %v755
    %757 = vdwg.mxu0
    %758 = vmatpush.msra.mxu0 0.0
    %759 = vmatpush.msra.mxu0 0.0
    %760 = vmatpush.msra.mxu0 0.0
    %761 = vmatpush.msra.mxu0 0.0
    %762 = vmatpush.msra.mxu0 0.0
    %763 = vmatpush.msra.mxu0 0.0
    %764 = vmatpush.msra.mxu0 0.0
    %765 = vmatpush.msra.mxu0 0.0
    %766 = vmatpush.msra.mxu0 0.0
    %767 = vmatpush.msra.mxu0 0.0
    %768 = vmatpush.msra.mxu0 0.0
    %769 = vmatpush.msra.mxu0 0.0
    %770 = vmatpush.msra.mxu0 0.0
    %771 = vmatpush.msra.mxu0 0.0
    %772 = vmatpush.msra.mxu0 %v680
    %773 = vmatpush.msra.mxu0 %v307
    %774 = vmatmul.f32.gmra.mxu0 %v670
    %v775 = vpop.f32.mrf.mxu0
    %v776 = vadd.f32 0.0, %v775
    %777 = vdwg.mxu0
    %778 = vmatpush.msra.mxu0 0.0
    %779 = vmatpush.msra.mxu0 0.0
    %780 = vmatpush.msra.mxu0 0.0
    %781 = vmatpush.msra.mxu0 0.0
    %782 = vmatpush.msra.mxu0 0.0
    %783 = vmatpush.msra.mxu0 0.0
    %784 = vmatpush.msra.mxu0 0.0
    %785 = vmatpush.msra.mxu0 0.0
    %786 = vmatpush.msra.mxu0 0.0
    %787 = vmatpush.msra.mxu0 0.0
    %788 = vmatpush.msra.mxu0 0.0
    %789 = vmatpush.msra.mxu0 0.0
    %790 = vmatpush.msra.mxu0 0.0
    %791 = vmatpush.msra.mxu0 0.0
    %792 = vmatpush.msra.mxu0 %v683
    %793 = vmatpush.msra.mxu0 %v308
    %794 = vmatmul.f32.gmra.mxu0 %v670
    %v795 = vpop.f32.mrf.mxu0
    %v796 = vadd.f32 0.0, %v795
    %797 = vdwg.mxu0
    %798 = vmatpush.msra.mxu0 0.0
    %799 = vmatpush.msra.mxu0 0.0
    %800 = vmatpush.msra.mxu0 0.0
    %801 = vmatpush.msra.mxu0 0.0
    %802 = vmatpush.msra.mxu0 0.0
    %803 = vmatpush.msra.mxu0 0.0
    %804 = vmatpush.msra.mxu0 0.0
    %805 = vmatpush.msra.mxu0 0.0
    %806 = vmatpush.msra.mxu0 0.0
    %807 = vmatpush.msra.mxu0 0.0
    %808 = vmatpush.msra.mxu0 0.0
    %809 = vmatpush.msra.mxu0 0.0
    %810 = vmatpush.msra.mxu0 0.0
    %811 = vmatpush.msra.mxu0 0.0
    %812 = vmatpush.msra.mxu0 %v686
    %813 = vmatpush.msra.mxu0 %v309
    %814 = vmatmul.f32.gmra.mxu0 %v670
    %v815 = vpop.f32.mrf.mxu0
    %v816 = vadd.f32 0.0, %v815
    %817 = vdwg.mxu0
    %818 = vmatpush.msra.mxu0 0.0
    %819 = vmatpush.msra.mxu0 0.0
    %820 = vmatpush.msra.mxu0 0.0
    %821 = vmatpush.msra.mxu0 0.0
    %822 = vmatpush.msra.mxu0 0.0
    %823 = vmatpush.msra.mxu0 0.0
    %824 = vmatpush.msra.mxu0 0.0
    %825 = vmatpush.msra.mxu0 0.0
    %826 = vmatpush.msra.mxu0 0.0
    %827 = vmatpush.msra.mxu0 0.0
    %828 = vmatpush.msra.mxu0 0.0
    %829 = vmatpush.msra.mxu0 0.0
    %830 = vmatpush.msra.mxu0 0.0
    %831 = vmatpush.msra.mxu0 0.0
    %832 = vmatpush.msra.mxu0 %v689
    %833 = vmatpush.msra.mxu0 %v310
    %834 = vmatmul.f32.gmra.mxu0 %v670
    %v835 = vpop.f32.mrf.mxu0
    %v836 = vadd.f32 0.0, %v835
    %837 = vdwg.mxu0
    %838 = vmatpush.msra.mxu0 0.0
    %839 = vmatpush.msra.mxu0 0.0
    %840 = vmatpush.msra.mxu0 0.0
    %841 = vmatpush.msra.mxu0 0.0
    %842 = vmatpush.msra.mxu0 0.0
    %843 = vmatpush.msra.mxu0 0.0
    %844 = vmatpush.msra.mxu0 0.0
    %845 = vmatpush.msra.mxu0 0.0
    %846 = vmatpush.msra.mxu0 0.0
    %847 = vmatpush.msra.mxu0 0.0
    %848 = vmatpush.msra.mxu0 0.0
    %849 = vmatpush.msra.mxu0 0.0
    %850 = vmatpush.msra.mxu0 0.0
    %851 = vmatpush.msra.mxu0 0.0
    %852 = vmatpush.msra.mxu0 %v692
    %853 = vmatpush.msra.mxu0 %v311
    %854 = vmatmul.f32.gmra.mxu0 %v670
    %v855 = vpop.f32.mrf.mxu0
    %v856 = vadd.f32 0.0, %v855
    %857 = vdwg.mxu0
    %858 = vmatpush.msra.mxu0 0.0
    %859 = vmatpush.msra.mxu0 0.0
    %860 = vmatpush.msra.mxu0 0.0
    %861 = vmatpush.msra.mxu0 0.0
    %862 = vmatpush.msra.mxu0 0.0
    %863 = vmatpush.msra.mxu0 0.0
    %864 = vmatpush.msra.mxu0 0.0
    %865 = vmatpush.msra.mxu0 0.0
    %866 = vmatpush.msra.mxu0 0.0
    %867 = vmatpush.msra.mxu0 0.0
    %868 = vmatpush.msra.mxu0 0.0
    %869 = vmatpush.msra.mxu0 0.0
    %870 = vmatpush.msra.mxu0 0.0
    %871 = vmatpush.msra.mxu0 0.0
    %872 = vmatpush.msra.mxu0 %v695
    %873 = vmatpush.msra.mxu0 %v312
    %874 = vmatmul.f32.gmra.mxu0 %v670
    %v875 = vpop.f32.mrf.mxu0
    %v876 = vadd.f32 0.0, %v875
    %877 = vdwg.mxu0
    %878 = vmatpush.msra.mxu0 0.0
    %879 = vmatpush.msra.mxu0 0.0
    %880 = vmatpush.msra.mxu0 0.0
    %881 = vmatpush.msra.mxu0 0.0
    %882 = vmatpush.msra.mxu0 0.0
    %883 = vmatpush.msra.mxu0 0.0
    %884 = vmatpush.msra.mxu0 0.0
    %885 = vmatpush.msra.mxu0 0.0
    %886 = vmatpush.msra.mxu0 0.0
    %887 = vmatpush.msra.mxu0 0.0
    %888 = vmatpush.msra.mxu0 0.0
    %889 = vmatpush.msra.mxu0 0.0
    %890 = vmatpush.msra.mxu0 0.0
    %891 = vmatpush.msra.mxu0 0.0
    %892 = vmatpush.msra.mxu0 %v698
    %893 = vmatpush.msra.mxu0 %v313
    %894 = vmatmul.f32.gmra.mxu0 %v670
    %v895 = vpop.f32.mrf.mxu0
    %v896 = vadd.f32 0.0, %v895
    %897 = vdwg.mxu0
    %898 = vmatpush.msra.mxu0 0.0
    %899 = vmatpush.msra.mxu0 0.0
    %900 = vmatpush.msra.mxu0 0.0
    %901 = vmatpush.msra.mxu0 0.0
    %902 = vmatpush.msra.mxu0 0.0
    %903 = vmatpush.msra.mxu0 0.0
    %904 = vmatpush.msra.mxu0 0.0
    %905 = vmatpush.msra.mxu0 0.0
    %906 = vmatpush.msra.mxu0 0.0
    %907 = vmatpush.msra.mxu0 0.0
    %908 = vmatpush.msra.mxu0 0.0
    %909 = vmatpush.msra.mxu0 0.0
    %910 = vmatpush.msra.mxu0 0.0
    %911 = vmatpush.msra.mxu0 0.0
    %912 = vmatpush.msra.mxu0 %v701
    %913 = vmatpush.msra.mxu0 %v314
    %914 = vmatmul.f32.gmra.mxu0 %v670
    %v915 = vpop.f32.mrf.mxu0
    %v916 = vadd.f32 0.0, %v915
    %917 = vdwg.mxu0
    %918 = vmatpush.msra.mxu0 0.0
    %919 = vmatpush.msra.mxu0 0.0
    %920 = vmatpush.msra.mxu0 0.0
    %921 = vmatpush.msra.mxu0 0.0
    %922 = vmatpush.msra.mxu0 0.0
    %923 = vmatpush.msra.mxu0 0.0
    %924 = vmatpush.msra.mxu0 0.0
    %925 = vmatpush.msra.mxu0 0.0
    %926 = vmatpush.msra.mxu0 0.0
    %927 = vmatpush.msra.mxu0 0.0
    %928 = vmatpush.msra.mxu0 0.0
    %929 = vmatpush.msra.mxu0 0.0
    %930 = vmatpush.msra.mxu0 0.0
    %931 = vmatpush.msra.mxu0 0.0
    %932 = vmatpush.msra.mxu0 %v704
    %933 = vmatpush.msra.mxu0 %v315
    %934 = vmatmul.f32.gmra.mxu0 %v670
    %v935 = vpop.f32.mrf.mxu0
    %v936 = vadd.f32 0.0, %v935
    %937 = vdwg.mxu0
    %938 = vmatpush.msra.mxu0 0.0
    %939 = vmatpush.msra.mxu0 0.0
    %940 = vmatpush.msra.mxu0 0.0
    %941 = vmatpush.msra.mxu0 0.0
    %942 = vmatpush.msra.mxu0 0.0
    %943 = vmatpush.msra.mxu0 0.0
    %944 = vmatpush.msra.mxu0 0.0
    %945 = vmatpush.msra.mxu0 0.0
    %946 = vmatpush.msra.mxu0 0.0
    %947 = vmatpush.msra.mxu0 0.0
    %948 = vmatpush.msra.mxu0 0.0
    %949 = vmatpush.msra.mxu0 0.0
    %950 = vmatpush.msra.mxu0 0.0
    %951 = vmatpush.msra.mxu0 0.0
    %952 = vmatpush.msra.mxu0 %v707
    %953 = vmatpush.msra.mxu0 %v316
    %954 = vmatmul.f32.gmra.mxu0 %v670
    %v955 = vpop.f32.mrf.mxu0
    %v956 = vadd.f32 0.0, %v955
    %957 = vdwg.mxu0
    %958 = vmatpush.msra.mxu0 0.0
    %959 = vmatpush.msra.mxu0 0.0
    %960 = vmatpush.msra.mxu0 0.0
    %961 = vmatpush.msra.mxu0 0.0
    %962 = vmatpush.msra.mxu0 0.0
    %963 = vmatpush.msra.mxu0 0.0
    %964 = vmatpush.msra.mxu0 0.0
    %965 = vmatpush.msra.mxu0 0.0
    %966 = vmatpush.msra.mxu0 0.0
    %967 = vmatpush.msra.mxu0 0.0
    %968 = vmatpush.msra.mxu0 0.0
    %969 = vmatpush.msra.mxu0 0.0
    %970 = vmatpush.msra.mxu0 0.0
    %971 = vmatpush.msra.mxu0 0.0
    %972 = vmatpush.msra.mxu0 %v710
    %973 = vmatpush.msra.mxu0 %v317
    %974 = vmatmul.f32.gmra.mxu0 %v670
    %v975 = vpop.f32.mrf.mxu0
    %v976 = vadd.f32 0.0, %v975
    %977 = vdwg.mxu0
    %978 = vmatpush.msra.mxu0 0.0
    %979 = vmatpush.msra.mxu0 0.0
    %980 = vmatpush.msra.mxu0 0.0
    %981 = vmatpush.msra.mxu0 0.0
    %982 = vmatpush.msra.mxu0 0.0
    %983 = vmatpush.msra.mxu0 0.0
    %984 = vmatpush.msra.mxu0 0.0
    %985 = vmatpush.msra.mxu0 0.0
    %986 = vmatpush.msra.mxu0 0.0
    %987 = vmatpush.msra.mxu0 0.0
    %988 = vmatpush.msra.mxu0 0.0
    %989 = vmatpush.msra.mxu0 0.0
    %990 = vmatpush.msra.mxu0 0.0
    %991 = vmatpush.msra.mxu0 0.0
    %992 = vmatpush.msra.mxu0 %v713
    %993 = vmatpush.msra.mxu0 %v318
    %994 = vmatmul.f32.gmra.mxu0 %v670
    %v995 = vpop.f32.mrf.mxu0
    %v996 = vadd.f32 0.0, %v995
    %997 = vdwg.mxu0
    %998 = vmatpush.msra.mxu0 0.0
    %999 = vmatpush.msra.mxu0 0.0
    %1000 = vmatpush.msra.mxu0 0.0
    %1001 = vmatpush.msra.mxu0 0.0
    %1002 = vmatpush.msra.mxu0 0.0
    %1003 = vmatpush.msra.mxu0 0.0
    %1004 = vmatpush.msra.mxu0 0.0
    %1005 = vmatpush.msra.mxu0 0.0
    %1006 = vmatpush.msra.mxu0 0.0
    %1007 = vmatpush.msra.mxu0 0.0
    %1008 = vmatpush.msra.mxu0 0.0
    %1009 = vmatpush.msra.mxu0 0.0
    %1010 = vmatpush.msra.mxu0 0.0
    %1011 = vmatpush.msra.mxu0 0.0
    %1012 = vmatpush.msra.mxu0 %v716
    %1013 = vmatpush.msra.mxu0 %v319
    %1014 = vmatmul.f32.gmra.mxu0 %v670
    %v1015 = vpop.f32.mrf.mxu0
    %v1016 = vadd.f32 0.0, %v1015
    %1017 = vdwg.mxu0
    %v1033 = vrot.slane %v756, 7
    %v1034 = vrot.slane %v776, 6
    %v1035 = vrot.slane %v796, 5
    %v1036 = vrot.slane %v816, 4
    %v1037 = vrot.slane %v836, 3
    %v1038 = vrot.slane %v856, 2
    %v1039 = vrot.slane %v876, 1
    %v1040 = vrot.slane %v916, 7
    %v1041 = vrot.slane %v936, 6
    %v1042 = vrot.slane %v956, 5
    %v1043 = vrot.slane %v976, 4
    %v1044 = vrot.slane %v996, 3
    %v1045 = vrot.slane %v1016, 2
    %vm1046 = vcmask 1040384
    %v1047 = vsel %vm1046, %v736, %v1033
    %vm1048 = vcmask 1042434
    %v1049 = vsel %vm1048, %v1034, %v1035
    %vm1050 = vcmask 1041408
    %v1051 = vsel %vm1050, %v1047, %v1049
    %vm1052 = vcmask 1044484
    %v1053 = vsel %vm1052, %v1036, %v1037
    %vm1054 = vcmask 1046534
    %v1055 = vsel %vm1054, %v1038, %v1039
    %vm1056 = vcmask 1045508
    %v1057 = vsel %vm1056, %v1053, %v1055
    %vm1058 = vcmask 1043456
    %v1059 = vsel %vm1058, %v1051, %v1057
    %v1060 = vsel %vm1046, %v896, %v1040
    %v1061 = vsel %vm1048, %v1041, %v1042
    %v1062 = vsel %vm1050, %v1060, %v1061
    %v1063 = vsel %vm1052, %v1043, %v1044
    %v1064 = vsel %vm1056, %v1063, %v1045
    %v1065 = vsel %vm1058, %v1062, %v1064
    %v1068 = vsub.f32 %v63, %v1059
    %v1069 = vsub.f32 %v64, %v1065
    %v1070 = vmul.f32 %v1068, 1.442695
    %v1071 = vpow.pop %v1070
    %v1072 = vmul.f32 %v1069, 1.442695
    %v1073 = vpow.pop %v1072
    %v1076 = vperm.slane %v1071, 0
    %v1077 = vperm.slane %v1071, 1
    %v1078 = vperm.slane %v1071, 2
    %v1079 = vperm.slane %v1071, 3
    %v1080 = vperm.slane %v1071, 4
    %v1081 = vperm.slane %v1071, 5
    %v1082 = vperm.slane %v1071, 6
    %v1083 = vperm.slane %v1071, 7
    %v1084 = vperm.slane %v1073, 0
    %v1085 = vperm.slane %v1073, 1
    %v1086 = vperm.slane %v1073, 2
    %v1087 = vperm.slane %v1073, 3
    %v1088 = vperm.slane %v1073, 4
    %v1089 = vperm.slane %v1073, 5
    %v1090 = vperm.slane %v1073, 6
    %1106 = vmatpush.msra.mxu0 %v80
    %1107 = vmatpush.msra.mxu0 %v79
    %1108 = vmatpush.msra.mxu0 %v78
    %1109 = vmatpush.msra.mxu0 %v77
    %1110 = vmatpush.msra.mxu0 %v76
    %1111 = vmatpush.msra.mxu0 %v75
    %1112 = vmatpush.msra.mxu0 %v74
    %1113 = vmatpush.msra.mxu0 %v73
    %1114 = vmatpush.msra.mxu0 %v72
    %1115 = vmatpush.msra.mxu0 %v71
    %1116 = vmatpush.msra.mxu0 %v70
    %1117 = vmatpush.msra.mxu0 %v69
    %1118 = vmatpush.msra.mxu0 %v68
    %1119 = vmatpush.msra.mxu0 %v67
    %1120 = vmatpush.msra.mxu0 %v66
    %1121 = vmatpush.msra.mxu0 %v65
    %1122 = vmatmul.f32.gmra.mxu0 %v1076
    %v1123 = vpop.f32.mrf.mxu0
    %v1124 = vadd.f32 0.0, %v1123
    %1125 = vdwg.mxu0
    %1126 = vmatpush.msra.mxu0 %v96
    %1127 = vmatpush.msra.mxu0 %v95
    %1128 = vmatpush.msra.mxu0 %v94
    %1129 = vmatpush.msra.mxu0 %v93
    %1130 = vmatpush.msra.mxu0 %v92
    %1131 = vmatpush.msra.mxu0 %v91
    %1132 = vmatpush.msra.mxu0 %v90
    %1133 = vmatpush.msra.mxu0 %v89
    %1134 = vmatpush.msra.mxu0 %v88
    %1135 = vmatpush.msra.mxu0 %v87
    %1136 = vmatpush.msra.mxu0 %v86
    %1137 = vmatpush.msra.mxu0 %v85
    %1138 = vmatpush.msra.mxu0 %v84
    %1139 = vmatpush.msra.mxu0 %v83
    %1140 = vmatpush.msra.mxu0 %v82
    %1141 = vmatpush.msra.mxu0 %v81
    %1142 = vmatmul.f32.gmra.mxu0 %v1077
    %v1143 = vpop.f32.mrf.mxu0
    %v1144 = vadd.f32 %v1124, %v1143
    %1145 = vdwg.mxu0
    %1146 = vmatpush.msra.mxu0 %v112
    %1147 = vmatpush.msra.mxu0 %v111
    %1148 = vmatpush.msra.mxu0 %v110
    %1149 = vmatpush.msra.mxu0 %v109
    %1150 = vmatpush.msra.mxu0 %v108
    %1151 = vmatpush.msra.mxu0 %v107
    %1152 = vmatpush.msra.mxu0 %v106
    %1153 = vmatpush.msra.mxu0 %v105
    %1154 = vmatpush.msra.mxu0 %v104
    %1155 = vmatpush.msra.mxu0 %v103
    %1156 = vmatpush.msra.mxu0 %v102
    %1157 = vmatpush.msra.mxu0 %v101
    %1158 = vmatpush.msra.mxu0 %v100
    %1159 = vmatpush.msra.mxu0 %v99
    %1160 = vmatpush.msra.mxu0 %v98
    %1161 = vmatpush.msra.mxu0 %v97
    %1162 = vmatmul.f32.gmra.mxu0 %v1078
    %v1163 = vpop.f32.mrf.mxu0
    %v1164 = vadd.f32 %v1144, %v1163
    %1165 = vdwg.mxu0
    %1166 = vmatpush.msra.mxu0 %v128
    %1167 = vmatpush.msra.mxu0 %v127
    %1168 = vmatpush.msra.mxu0 %v126
    %1169 = vmatpush.msra.mxu0 %v125
    %1170 = vmatpush.msra.mxu0 %v124
    %1171 = vmatpush.msra.mxu0 %v123
    %1172 = vmatpush.msra.mxu0 %v122
    %1173 = vmatpush.msra.mxu0 %v121
    %1174 = vmatpush.msra.mxu0 %v120
    %1175 = vmatpush.msra.mxu0 %v119
    %1176 = vmatpush.msra.mxu0 %v118
    %1177 = vmatpush.msra.mxu0 %v117
    %1178 = vmatpush.msra.mxu0 %v116
    %1179 = vmatpush.msra.mxu0 %v115
    %1180 = vmatpush.msra.mxu0 %v114
    %1181 = vmatpush.msra.mxu0 %v113
    %1182 = vmatmul.f32.gmra.mxu0 %v1079
    %v1183 = vpop.f32.mrf.mxu0
    %v1184 = vadd.f32 %v1164, %v1183
    %1185 = vdwg.mxu0
    %1186 = vmatpush.msra.mxu0 %v144
    %1187 = vmatpush.msra.mxu0 %v143
    %1188 = vmatpush.msra.mxu0 %v142
    %1189 = vmatpush.msra.mxu0 %v141
    %1190 = vmatpush.msra.mxu0 %v140
    %1191 = vmatpush.msra.mxu0 %v139
    %1192 = vmatpush.msra.mxu0 %v138
    %1193 = vmatpush.msra.mxu0 %v137
    %1194 = vmatpush.msra.mxu0 %v136
    %1195 = vmatpush.msra.mxu0 %v135
    %1196 = vmatpush.msra.mxu0 %v134
    %1197 = vmatpush.msra.mxu0 %v133
    %1198 = vmatpush.msra.mxu0 %v132
    %1199 = vmatpush.msra.mxu0 %v131
    %1200 = vmatpush.msra.mxu0 %v130
    %1201 = vmatpush.msra.mxu0 %v129
    %1202 = vmatmul.f32.gmra.mxu0 %v1080
    %v1203 = vpop.f32.mrf.mxu0
    %v1204 = vadd.f32 %v1184, %v1203
    %1205 = vdwg.mxu0
    %1206 = vmatpush.msra.mxu0 %v160
    %1207 = vmatpush.msra.mxu0 %v159
    %1208 = vmatpush.msra.mxu0 %v158
    %1209 = vmatpush.msra.mxu0 %v157
    %1210 = vmatpush.msra.mxu0 %v156
    %1211 = vmatpush.msra.mxu0 %v155
    %1212 = vmatpush.msra.mxu0 %v154
    %1213 = vmatpush.msra.mxu0 %v153
    %1214 = vmatpush.msra.mxu0 %v152
    %1215 = vmatpush.msra.mxu0 %v151
    %1216 = vmatpush.msra.mxu0 %v150
    %1217 = vmatpush.msra.mxu0 %v149
    %1218 = vmatpush.msra.mxu0 %v148
    %1219 = vmatpush.msra.mxu0 %v147
    %1220 = vmatpush.msra.mxu0 %v146
    %1221 = vmatpush.msra.mxu0 %v145
    %1222 = vmatmul.f32.gmra.mxu0 %v1081
    %v1223 = vpop.f32.mrf.mxu0
    %v1224 = vadd.f32 %v1204, %v1223
    %1225 = vdwg.mxu0
    %1226 = vmatpush.msra.mxu0 %v176
    %1227 = vmatpush.msra.mxu0 %v175
    %1228 = vmatpush.msra.mxu0 %v174
    %1229 = vmatpush.msra.mxu0 %v173
    %1230 = vmatpush.msra.mxu0 %v172
    %1231 = vmatpush.msra.mxu0 %v171
    %1232 = vmatpush.msra.mxu0 %v170
    %1233 = vmatpush.msra.mxu0 %v169
    %1234 = vmatpush.msra.mxu0 %v168
    %1235 = vmatpush.msra.mxu0 %v167
    %1236 = vmatpush.msra.mxu0 %v166
    %1237 = vmatpush.msra.mxu0 %v165
    %1238 = vmatpush.msra.mxu0 %v164
    %1239 = vmatpush.msra.mxu0 %v163
    %1240 = vmatpush.msra.mxu0 %v162
    %1241 = vmatpush.msra.mxu0 %v161
    %1242 = vmatmul.f32.gmra.mxu0 %v1082
    %v1243 = vpop.f32.mrf.mxu0
    %v1244 = vadd.f32 %v1224, %v1243
    %1245 = vdwg.mxu0
    %1246 = vmatpush.msra.mxu0 %v192
    %1247 = vmatpush.msra.mxu0 %v191
    %1248 = vmatpush.msra.mxu0 %v190
    %1249 = vmatpush.msra.mxu0 %v189
    %1250 = vmatpush.msra.mxu0 %v188
    %1251 = vmatpush.msra.mxu0 %v187
    %1252 = vmatpush.msra.mxu0 %v186
    %1253 = vmatpush.msra.mxu0 %v185
    %1254 = vmatpush.msra.mxu0 %v184
    %1255 = vmatpush.msra.mxu0 %v183
    %1256 = vmatpush.msra.mxu0 %v182
    %1257 = vmatpush.msra.mxu0 %v181
    %1258 = vmatpush.msra.mxu0 %v180
    %1259 = vmatpush.msra.mxu0 %v179
    %1260 = vmatpush.msra.mxu0 %v178
    %1261 = vmatpush.msra.mxu0 %v177
    %1262 = vmatmul.f32.gmra.mxu0 %v1083
    %v1263 = vpop.f32.mrf.mxu0
    %v1264 = vadd.f32 %v1244, %v1263
    %1265 = vdwg.mxu0
    %1266 = vmatpush.msra.mxu0 %v208
    %1267 = vmatpush.msra.mxu0 %v207
    %1268 = vmatpush.msra.mxu0 %v206
    %1269 = vmatpush.msra.mxu0 %v205
    %1270 = vmatpush.msra.mxu0 %v204
    %1271 = vmatpush.msra.mxu0 %v203
    %1272 = vmatpush.msra.mxu0 %v202
    %1273 = vmatpush.msra.mxu0 %v201
    %1274 = vmatpush.msra.mxu0 %v200
    %1275 = vmatpush.msra.mxu0 %v199
    %1276 = vmatpush.msra.mxu0 %v198
    %1277 = vmatpush.msra.mxu0 %v197
    %1278 = vmatpush.msra.mxu0 %v196
    %1279 = vmatpush.msra.mxu0 %v195
    %1280 = vmatpush.msra.mxu0 %v194
    %1281 = vmatpush.msra.mxu0 %v193
    %1282 = vmatmul.f32.gmra.mxu0 %v1084
    %v1283 = vpop.f32.mrf.mxu0
    %v1284 = vadd.f32 %v1264, %v1283
    %1285 = vdwg.mxu0
    %1286 = vmatpush.msra.mxu0 %v224
    %1287 = vmatpush.msra.mxu0 %v223
    %1288 = vmatpush.msra.mxu0 %v222
    %1289 = vmatpush.msra.mxu0 %v221
    %1290 = vmatpush.msra.mxu0 %v220
    %1291 = vmatpush.msra.mxu0 %v219
    %1292 = vmatpush.msra.mxu0 %v218
    %1293 = vmatpush.msra.mxu0 %v217
    %1294 = vmatpush.msra.mxu0 %v216
    %1295 = vmatpush.msra.mxu0 %v215
    %1296 = vmatpush.msra.mxu0 %v214
    %1297 = vmatpush.msra.mxu0 %v213
    %1298 = vmatpush.msra.mxu0 %v212
    %1299 = vmatpush.msra.mxu0 %v211
    %1300 = vmatpush.msra.mxu0 %v210
    %1301 = vmatpush.msra.mxu0 %v209
    %1302 = vmatmul.f32.gmra.mxu0 %v1085
    %v1303 = vpop.f32.mrf.mxu0
    %v1304 = vadd.f32 %v1284, %v1303
    %1305 = vdwg.mxu0
    %1306 = vmatpush.msra.mxu0 %v240
    %1307 = vmatpush.msra.mxu0 %v239
    %1308 = vmatpush.msra.mxu0 %v238
    %1309 = vmatpush.msra.mxu0 %v237
    %1310 = vmatpush.msra.mxu0 %v236
    %1311 = vmatpush.msra.mxu0 %v235
    %1312 = vmatpush.msra.mxu0 %v234
    %1313 = vmatpush.msra.mxu0 %v233
    %1314 = vmatpush.msra.mxu0 %v232
    %1315 = vmatpush.msra.mxu0 %v231
    %1316 = vmatpush.msra.mxu0 %v230
    %1317 = vmatpush.msra.mxu0 %v229
    %1318 = vmatpush.msra.mxu0 %v228
    %1319 = vmatpush.msra.mxu0 %v227
    %1320 = vmatpush.msra.mxu0 %v226
    %1321 = vmatpush.msra.mxu0 %v225
    %1322 = vmatmul.f32.gmra.mxu0 %v1086
    %v1323 = vpop.f32.mrf.mxu0
    %v1324 = vadd.f32 %v1304, %v1323
    %1325 = vdwg.mxu0
    %1326 = vmatpush.msra.mxu0 %v256
    %1327 = vmatpush.msra.mxu0 %v255
    %1328 = vmatpush.msra.mxu0 %v254
    %1329 = vmatpush.msra.mxu0 %v253
    %1330 = vmatpush.msra.mxu0 %v252
    %1331 = vmatpush.msra.mxu0 %v251
    %1332 = vmatpush.msra.mxu0 %v250
    %1333 = vmatpush.msra.mxu0 %v249
    %1334 = vmatpush.msra.mxu0 %v248
    %1335 = vmatpush.msra.mxu0 %v247
    %1336 = vmatpush.msra.mxu0 %v246
    %1337 = vmatpush.msra.mxu0 %v245
    %1338 = vmatpush.msra.mxu0 %v244
    %1339 = vmatpush.msra.mxu0 %v243
    %1340 = vmatpush.msra.mxu0 %v242
    %1341 = vmatpush.msra.mxu0 %v241
    %1342 = vmatmul.f32.gmra.mxu0 %v1087
    %v1343 = vpop.f32.mrf.mxu0
    %v1344 = vadd.f32 %v1324, %v1343
    %1345 = vdwg.mxu0
    %1346 = vmatpush.msra.mxu0 %v272
    %1347 = vmatpush.msra.mxu0 %v271
    %1348 = vmatpush.msra.mxu0 %v270
    %1349 = vmatpush.msra.mxu0 %v269
    %1350 = vmatpush.msra.mxu0 %v268
    %1351 = vmatpush.msra.mxu0 %v267
    %1352 = vmatpush.msra.mxu0 %v266
    %1353 = vmatpush.msra.mxu0 %v265
    %1354 = vmatpush.msra.mxu0 %v264
    %1355 = vmatpush.msra.mxu0 %v263
    %1356 = vmatpush.msra.mxu0 %v262
    %1357 = vmatpush.msra.mxu0 %v261
    %1358 = vmatpush.msra.mxu0 %v260
    %1359 = vmatpush.msra.mxu0 %v259
    %1360 = vmatpush.msra.mxu0 %v258
    %1361 = vmatpush.msra.mxu0 %v257
    %1362 = vmatmul.f32.gmra.mxu0 %v1088
    %v1363 = vpop.f32.mrf.mxu0
    %v1364 = vadd.f32 %v1344, %v1363
    %1365 = vdwg.mxu0
    %1366 = vmatpush.msra.mxu0 %v288
    %1367 = vmatpush.msra.mxu0 %v287
    %1368 = vmatpush.msra.mxu0 %v286
    %1369 = vmatpush.msra.mxu0 %v285
    %1370 = vmatpush.msra.mxu0 %v284
    %1371 = vmatpush.msra.mxu0 %v283
    %1372 = vmatpush.msra.mxu0 %v282
    %1373 = vmatpush.msra.mxu0 %v281
    %1374 = vmatpush.msra.mxu0 %v280
    %1375 = vmatpush.msra.mxu0 %v279
    %1376 = vmatpush.msra.mxu0 %v278
    %1377 = vmatpush.msra.mxu0 %v277
    %1378 = vmatpush.msra.mxu0 %v276
    %1379 = vmatpush.msra.mxu0 %v275
    %1380 = vmatpush.msra.mxu0 %v274
    %1381 = vmatpush.msra.mxu0 %v273
    %1382 = vmatmul.f32.gmra.mxu0 %v1089
    %v1383 = vpop.f32.mrf.mxu0
    %v1384 = vadd.f32 %v1364, %v1383
    %1385 = vdwg.mxu0
    %1386 = vmatpush.msra.mxu0 %v304
    %1387 = vmatpush.msra.mxu0 %v303
    %1388 = vmatpush.msra.mxu0 %v302
    %1389 = vmatpush.msra.mxu0 %v301
    %1390 = vmatpush.msra.mxu0 %v300
    %1391 = vmatpush.msra.mxu0 %v299
    %1392 = vmatpush.msra.mxu0 %v298
    %1393 = vmatpush.msra.mxu0 %v297
    %1394 = vmatpush.msra.mxu0 %v296
    %1395 = vmatpush.msra.mxu0 %v295
    %1396 = vmatpush.msra.mxu0 %v294
    %1397 = vmatpush.msra.mxu0 %v293
    %1398 = vmatpush.msra.mxu0 %v292
    %1399 = vmatpush.msra.mxu0 %v291
    %1400 = vmatpush.msra.mxu0 %v290
    %1401 = vmatpush.msra.mxu0 %v289
    %1402 = vmatmul.f32.gmra.mxu0 %v1090
    %v1403 = vpop.f32.mrf.mxu0
    %v1404 = vadd.f32 %v1384, %v1403
    %1405 = vdwg.mxu0
    %v1406 = vmul.f32 %v62, 2.0
    %v1407 = vrcp.pop %v1404
    %v1408 = vmul.f32 %v1406, %v1407
    %v1410 = vsel %vm668, %v1408, 0
    %1412 = vmatpush.msra.mxu0 0.0
    %1413 = vmatpush.msra.mxu0 0.0
    %1414 = vmatpush.msra.mxu0 0.0
    %1415 = vmatpush.msra.mxu0 0.0
    %1416 = vmatpush.msra.mxu0 0.0
    %1417 = vmatpush.msra.mxu0 0.0
    %1418 = vmatpush.msra.mxu0 0.0
    %1419 = vmatpush.msra.mxu0 0.0
    %1420 = vmatpush.msra.mxu0 0.0
    %1421 = vmatpush.msra.mxu0 0.0
    %1422 = vmatpush.msra.mxu0 0.0
    %1423 = vmatpush.msra.mxu0 0.0
    %1424 = vmatpush.msra.mxu0 0.0
    %1425 = vmatpush.msra.mxu0 0.0
    %1426 = vmatpush.msra.mxu0 %v674
    %1427 = vmatpush.msra.mxu0 %v305
    %1428 = vmatmul.f32.gmra.mxu0 %v1410
    %v1429 = vpop.f32.mrf.mxu0
    %v1430 = vadd.f32 0.0, %v1429
    %1431 = vdwg.mxu0
    %1432 = vmatpush.msra.mxu0 0.0
    %1433 = vmatpush.msra.mxu0 0.0
    %1434 = vmatpush.msra.mxu0 0.0
    %1435 = vmatpush.msra.mxu0 0.0
    %1436 = vmatpush.msra.mxu0 0.0
    %1437 = vmatpush.msra.mxu0 0.0
    %1438 = vmatpush.msra.mxu0 0.0
    %1439 = vmatpush.msra.mxu0 0.0
    %1440 = vmatpush.msra.mxu0 0.0
    %1441 = vmatpush.msra.mxu0 0.0
    %1442 = vmatpush.msra.mxu0 0.0
    %1443 = vmatpush.msra.mxu0 0.0
    %1444 = vmatpush.msra.mxu0 0.0
    %1445 = vmatpush.msra.mxu0 0.0
    %1446 = vmatpush.msra.mxu0 %v677
    %1447 = vmatpush.msra.mxu0 %v306
    %1448 = vmatmul.f32.gmra.mxu0 %v1410
    %v1449 = vpop.f32.mrf.mxu0
    %v1450 = vadd.f32 0.0, %v1449
    %1451 = vdwg.mxu0
    %1452 = vmatpush.msra.mxu0 0.0
    %1453 = vmatpush.msra.mxu0 0.0
    %1454 = vmatpush.msra.mxu0 0.0
    %1455 = vmatpush.msra.mxu0 0.0
    %1456 = vmatpush.msra.mxu0 0.0
    %1457 = vmatpush.msra.mxu0 0.0
    %1458 = vmatpush.msra.mxu0 0.0
    %1459 = vmatpush.msra.mxu0 0.0
    %1460 = vmatpush.msra.mxu0 0.0
    %1461 = vmatpush.msra.mxu0 0.0
    %1462 = vmatpush.msra.mxu0 0.0
    %1463 = vmatpush.msra.mxu0 0.0
    %1464 = vmatpush.msra.mxu0 0.0
    %1465 = vmatpush.msra.mxu0 0.0
    %1466 = vmatpush.msra.mxu0 %v680
    %1467 = vmatpush.msra.mxu0 %v307
    %1468 = vmatmul.f32.gmra.mxu0 %v1410
    %v1469 = vpop.f32.mrf.mxu0
    %v1470 = vadd.f32 0.0, %v1469
    %1471 = vdwg.mxu0
    %1472 = vmatpush.msra.mxu0 0.0
    %1473 = vmatpush.msra.mxu0 0.0
    %1474 = vmatpush.msra.mxu0 0.0
    %1475 = vmatpush.msra.mxu0 0.0
    %1476 = vmatpush.msra.mxu0 0.0
    %1477 = vmatpush.msra.mxu0 0.0
    %1478 = vmatpush.msra.mxu0 0.0
    %1479 = vmatpush.msra.mxu0 0.0
    %1480 = vmatpush.msra.mxu0 0.0
    %1481 = vmatpush.msra.mxu0 0.0
    %1482 = vmatpush.msra.mxu0 0.0
    %1483 = vmatpush.msra.mxu0 0.0
    %1484 = vmatpush.msra.mxu0 0.0
    %1485 = vmatpush.msra.mxu0 0.0
    %1486 = vmatpush.msra.mxu0 %v683
    %1487 = vmatpush.msra.mxu0 %v308
    %1488 = vmatmul.f32.gmra.mxu0 %v1410
    %v1489 = vpop.f32.mrf.mxu0
    %v1490 = vadd.f32 0.0, %v1489
    %1491 = vdwg.mxu0
    %1492 = vmatpush.msra.mxu0 0.0
    %1493 = vmatpush.msra.mxu0 0.0
    %1494 = vmatpush.msra.mxu0 0.0
    %1495 = vmatpush.msra.mxu0 0.0
    %1496 = vmatpush.msra.mxu0 0.0
    %1497 = vmatpush.msra.mxu0 0.0
    %1498 = vmatpush.msra.mxu0 0.0
    %1499 = vmatpush.msra.mxu0 0.0
    %1500 = vmatpush.msra.mxu0 0.0
    %1501 = vmatpush.msra.mxu0 0.0
    %1502 = vmatpush.msra.mxu0 0.0
    %1503 = vmatpush.msra.mxu0 0.0
    %1504 = vmatpush.msra.mxu0 0.0
    %1505 = vmatpush.msra.mxu0 0.0
    %1506 = vmatpush.msra.mxu0 %v686
    %1507 = vmatpush.msra.mxu0 %v309
    %1508 = vmatmul.f32.gmra.mxu0 %v1410
    %v1509 = vpop.f32.mrf.mxu0
    %v1510 = vadd.f32 0.0, %v1509
    %1511 = vdwg.mxu0
    %1512 = vmatpush.msra.mxu0 0.0
    %1513 = vmatpush.msra.mxu0 0.0
    %1514 = vmatpush.msra.mxu0 0.0
    %1515 = vmatpush.msra.mxu0 0.0
    %1516 = vmatpush.msra.mxu0 0.0
    %1517 = vmatpush.msra.mxu0 0.0
    %1518 = vmatpush.msra.mxu0 0.0
    %1519 = vmatpush.msra.mxu0 0.0
    %1520 = vmatpush.msra.mxu0 0.0
    %1521 = vmatpush.msra.mxu0 0.0
    %1522 = vmatpush.msra.mxu0 0.0
    %1523 = vmatpush.msra.mxu0 0.0
    %1524 = vmatpush.msra.mxu0 0.0
    %1525 = vmatpush.msra.mxu0 0.0
    %1526 = vmatpush.msra.mxu0 %v689
    %1527 = vmatpush.msra.mxu0 %v310
    %1528 = vmatmul.f32.gmra.mxu0 %v1410
    %v1529 = vpop.f32.mrf.mxu0
    %v1530 = vadd.f32 0.0, %v1529
    %1531 = vdwg.mxu0
    %1532 = vmatpush.msra.mxu0 0.0
    %1533 = vmatpush.msra.mxu0 0.0
    %1534 = vmatpush.msra.mxu0 0.0
    %1535 = vmatpush.msra.mxu0 0.0
    %1536 = vmatpush.msra.mxu0 0.0
    %1537 = vmatpush.msra.mxu0 0.0
    %1538 = vmatpush.msra.mxu0 0.0
    %1539 = vmatpush.msra.mxu0 0.0
    %1540 = vmatpush.msra.mxu0 0.0
    %1541 = vmatpush.msra.mxu0 0.0
    %1542 = vmatpush.msra.mxu0 0.0
    %1543 = vmatpush.msra.mxu0 0.0
    %1544 = vmatpush.msra.mxu0 0.0
    %1545 = vmatpush.msra.mxu0 0.0
    %1546 = vmatpush.msra.mxu0 %v692
    %1547 = vmatpush.msra.mxu0 %v311
    %1548 = vmatmul.f32.gmra.mxu0 %v1410
    %v1549 = vpop.f32.mrf.mxu0
    %v1550 = vadd.f32 0.0, %v1549
    %1551 = vdwg.mxu0
    %1552 = vmatpush.msra.mxu0 0.0
    %1553 = vmatpush.msra.mxu0 0.0
    %1554 = vmatpush.msra.mxu0 0.0
    %1555 = vmatpush.msra.mxu0 0.0
    %1556 = vmatpush.msra.mxu0 0.0
    %1557 = vmatpush.msra.mxu0 0.0
    %1558 = vmatpush.msra.mxu0 0.0
    %1559 = vmatpush.msra.mxu0 0.0
    %1560 = vmatpush.msra.mxu0 0.0
    %1561 = vmatpush.msra.mxu0 0.0
    %1562 = vmatpush.msra.mxu0 0.0
    %1563 = vmatpush.msra.mxu0 0.0
    %1564 = vmatpush.msra.mxu0 0.0
    %1565 = vmatpush.msra.mxu0 0.0
    %1566 = vmatpush.msra.mxu0 %v695
    %1567 = vmatpush.msra.mxu0 %v312
    %1568 = vmatmul.f32.gmra.mxu0 %v1410
    %v1569 = vpop.f32.mrf.mxu0
    %v1570 = vadd.f32 0.0, %v1569
    %1571 = vdwg.mxu0
    %1572 = vmatpush.msra.mxu0 0.0
    %1573 = vmatpush.msra.mxu0 0.0
    %1574 = vmatpush.msra.mxu0 0.0
    %1575 = vmatpush.msra.mxu0 0.0
    %1576 = vmatpush.msra.mxu0 0.0
    %1577 = vmatpush.msra.mxu0 0.0
    %1578 = vmatpush.msra.mxu0 0.0
    %1579 = vmatpush.msra.mxu0 0.0
    %1580 = vmatpush.msra.mxu0 0.0
    %1581 = vmatpush.msra.mxu0 0.0
    %1582 = vmatpush.msra.mxu0 0.0
    %1583 = vmatpush.msra.mxu0 0.0
    %1584 = vmatpush.msra.mxu0 0.0
    %1585 = vmatpush.msra.mxu0 0.0
    %1586 = vmatpush.msra.mxu0 %v698
    %1587 = vmatpush.msra.mxu0 %v313
    %1588 = vmatmul.f32.gmra.mxu0 %v1410
    %v1589 = vpop.f32.mrf.mxu0
    %v1590 = vadd.f32 0.0, %v1589
    %1591 = vdwg.mxu0
    %1592 = vmatpush.msra.mxu0 0.0
    %1593 = vmatpush.msra.mxu0 0.0
    %1594 = vmatpush.msra.mxu0 0.0
    %1595 = vmatpush.msra.mxu0 0.0
    %1596 = vmatpush.msra.mxu0 0.0
    %1597 = vmatpush.msra.mxu0 0.0
    %1598 = vmatpush.msra.mxu0 0.0
    %1599 = vmatpush.msra.mxu0 0.0
    %1600 = vmatpush.msra.mxu0 0.0
    %1601 = vmatpush.msra.mxu0 0.0
    %1602 = vmatpush.msra.mxu0 0.0
    %1603 = vmatpush.msra.mxu0 0.0
    %1604 = vmatpush.msra.mxu0 0.0
    %1605 = vmatpush.msra.mxu0 0.0
    %1606 = vmatpush.msra.mxu0 %v701
    %1607 = vmatpush.msra.mxu0 %v314
    %1608 = vmatmul.f32.gmra.mxu0 %v1410
    %v1609 = vpop.f32.mrf.mxu0
    %v1610 = vadd.f32 0.0, %v1609
    %1611 = vdwg.mxu0
    %1612 = vmatpush.msra.mxu0 0.0
    %1613 = vmatpush.msra.mxu0 0.0
    %1614 = vmatpush.msra.mxu0 0.0
    %1615 = vmatpush.msra.mxu0 0.0
    %1616 = vmatpush.msra.mxu0 0.0
    %1617 = vmatpush.msra.mxu0 0.0
    %1618 = vmatpush.msra.mxu0 0.0
    %1619 = vmatpush.msra.mxu0 0.0
    %1620 = vmatpush.msra.mxu0 0.0
    %1621 = vmatpush.msra.mxu0 0.0
    %1622 = vmatpush.msra.mxu0 0.0
    %1623 = vmatpush.msra.mxu0 0.0
    %1624 = vmatpush.msra.mxu0 0.0
    %1625 = vmatpush.msra.mxu0 0.0
    %1626 = vmatpush.msra.mxu0 %v704
    %1627 = vmatpush.msra.mxu0 %v315
    %1628 = vmatmul.f32.gmra.mxu0 %v1410
    %v1629 = vpop.f32.mrf.mxu0
    %v1630 = vadd.f32 0.0, %v1629
    %1631 = vdwg.mxu0
    %1632 = vmatpush.msra.mxu0 0.0
    %1633 = vmatpush.msra.mxu0 0.0
    %1634 = vmatpush.msra.mxu0 0.0
    %1635 = vmatpush.msra.mxu0 0.0
    %1636 = vmatpush.msra.mxu0 0.0
    %1637 = vmatpush.msra.mxu0 0.0
    %1638 = vmatpush.msra.mxu0 0.0
    %1639 = vmatpush.msra.mxu0 0.0
    %1640 = vmatpush.msra.mxu0 0.0
    %1641 = vmatpush.msra.mxu0 0.0
    %1642 = vmatpush.msra.mxu0 0.0
    %1643 = vmatpush.msra.mxu0 0.0
    %1644 = vmatpush.msra.mxu0 0.0
    %1645 = vmatpush.msra.mxu0 0.0
    %1646 = vmatpush.msra.mxu0 %v707
    %1647 = vmatpush.msra.mxu0 %v316
    %1648 = vmatmul.f32.gmra.mxu0 %v1410
    %v1649 = vpop.f32.mrf.mxu0
    %v1650 = vadd.f32 0.0, %v1649
    %1651 = vdwg.mxu0
    %1652 = vmatpush.msra.mxu0 0.0
    %1653 = vmatpush.msra.mxu0 0.0
    %1654 = vmatpush.msra.mxu0 0.0
    %1655 = vmatpush.msra.mxu0 0.0
    %1656 = vmatpush.msra.mxu0 0.0
    %1657 = vmatpush.msra.mxu0 0.0
    %1658 = vmatpush.msra.mxu0 0.0
    %1659 = vmatpush.msra.mxu0 0.0
    %1660 = vmatpush.msra.mxu0 0.0
    %1661 = vmatpush.msra.mxu0 0.0
    %1662 = vmatpush.msra.mxu0 0.0
    %1663 = vmatpush.msra.mxu0 0.0
    %1664 = vmatpush.msra.mxu0 0.0
    %1665 = vmatpush.msra.mxu0 0.0
    %1666 = vmatpush.msra.mxu0 %v710
    %1667 = vmatpush.msra.mxu0 %v317
    %1668 = vmatmul.f32.gmra.mxu0 %v1410
    %v1669 = vpop.f32.mrf.mxu0
    %v1670 = vadd.f32 0.0, %v1669
    %1671 = vdwg.mxu0
    %1672 = vmatpush.msra.mxu0 0.0
    %1673 = vmatpush.msra.mxu0 0.0
    %1674 = vmatpush.msra.mxu0 0.0
    %1675 = vmatpush.msra.mxu0 0.0
    %1676 = vmatpush.msra.mxu0 0.0
    %1677 = vmatpush.msra.mxu0 0.0
    %1678 = vmatpush.msra.mxu0 0.0
    %1679 = vmatpush.msra.mxu0 0.0
    %1680 = vmatpush.msra.mxu0 0.0
    %1681 = vmatpush.msra.mxu0 0.0
    %1682 = vmatpush.msra.mxu0 0.0
    %1683 = vmatpush.msra.mxu0 0.0
    %1684 = vmatpush.msra.mxu0 0.0
    %1685 = vmatpush.msra.mxu0 0.0
    %1686 = vmatpush.msra.mxu0 %v713
    %1687 = vmatpush.msra.mxu0 %v318
    %1688 = vmatmul.f32.gmra.mxu0 %v1410
    %v1689 = vpop.f32.mrf.mxu0
    %v1690 = vadd.f32 0.0, %v1689
    %1691 = vdwg.mxu0
    %1692 = vmatpush.msra.mxu0 0.0
    %1693 = vmatpush.msra.mxu0 0.0
    %1694 = vmatpush.msra.mxu0 0.0
    %1695 = vmatpush.msra.mxu0 0.0
    %1696 = vmatpush.msra.mxu0 0.0
    %1697 = vmatpush.msra.mxu0 0.0
    %1698 = vmatpush.msra.mxu0 0.0
    %1699 = vmatpush.msra.mxu0 0.0
    %1700 = vmatpush.msra.mxu0 0.0
    %1701 = vmatpush.msra.mxu0 0.0
    %1702 = vmatpush.msra.mxu0 0.0
    %1703 = vmatpush.msra.mxu0 0.0
    %1704 = vmatpush.msra.mxu0 0.0
    %1705 = vmatpush.msra.mxu0 0.0
    %1706 = vmatpush.msra.mxu0 %v716
    %1707 = vmatpush.msra.mxu0 %v319
    %1708 = vmatmul.f32.gmra.mxu0 %v1410
    %v1709 = vpop.f32.mrf.mxu0
    %v1710 = vadd.f32 0.0, %v1709
    %1711 = vdwg.mxu0
    %v1727 = vrot.slane %v1450, 7
    %v1728 = vrot.slane %v1470, 6
    %v1729 = vrot.slane %v1490, 5
    %v1730 = vrot.slane %v1510, 4
    %v1731 = vrot.slane %v1530, 3
    %v1732 = vrot.slane %v1550, 2
    %v1733 = vrot.slane %v1570, 1
    %v1734 = vrot.slane %v1610, 7
    %v1735 = vrot.slane %v1630, 6
    %v1736 = vrot.slane %v1650, 5
    %v1737 = vrot.slane %v1670, 4
    %v1738 = vrot.slane %v1690, 3
    %v1739 = vrot.slane %v1710, 2
    %v1740 = vsel %vm1046, %v1430, %v1727
    %v1741 = vsel %vm1048, %v1728, %v1729
    %v1742 = vsel %vm1050, %v1740, %v1741
    %v1743 = vsel %vm1052, %v1730, %v1731
    %v1744 = vsel %vm1054, %v1732, %v1733
    %v1745 = vsel %vm1056, %v1743, %v1744
    %v1746 = vsel %vm1058, %v1742, %v1745
    %v1747 = vsel %vm1046, %v1590, %v1734
    %v1748 = vsel %vm1048, %v1735, %v1736
    %v1749 = vsel %vm1050, %v1747, %v1748
    %v1750 = vsel %vm1052, %v1737, %v1738
    %v1751 = vsel %vm1056, %v1750, %v1739
    %v1752 = vsel %vm1058, %v1749, %v1751
    %v1755 = vmul.f32 %v1071, %v1746
    %v1756 = vmul.f32 %v1073, %v1752
    %v1757 = vld [vmem:[%s4] sm:$0xff]
    %v1758 = vld [vmem:[%s4 + $0x8] sm:$0xff]
    %v1759 = vld [vmem:[%s4 + $0x10] sm:$0xff]
    %v1760 = vld [vmem:[%s4 + $0x18] sm:$0xff]
    %v1761 = vld [vmem:[%s4 + $0x20] sm:$0xff]
    %v1762 = vld [vmem:[%s4 + $0x28] sm:$0xff]
    %v1763 = vld [vmem:[%s4 + $0x30] sm:$0xff]
    %v1764 = vld [vmem:[%s4 + $0x38] sm:$0xff]
    %v1765 = vld [vmem:[%s4 + $0x40] sm:$0xff]
    %v1766 = vld [vmem:[%s4 + $0x48] sm:$0xff]
    %v1767 = vld [vmem:[%s4 + $0x50] sm:$0xff]
    %v1768 = vld [vmem:[%s4 + $0x58] sm:$0xff]
    %v1769 = vld [vmem:[%s4 + $0x60] sm:$0xff]
    %v1770 = vld [vmem:[%s4 + $0x68] sm:$0xff]
    %v1771 = vld [vmem:[%s4 + $0x70] sm:$0xff]
    %v1772 = vld [vmem:[%s4 + $0x78] sm:$0xff]
    %v1773 = vld [vmem:[%s4 + $0x80] sm:$0xff]
    %v1774 = vld [vmem:[%s4 + $0x88] sm:$0xff]
    %v1775 = vld [vmem:[%s4 + $0x90] sm:$0xff]
    %v1776 = vld [vmem:[%s4 + $0x98] sm:$0xff]
    %v1777 = vld [vmem:[%s4 + $0xa0] sm:$0xff]
    %v1778 = vld [vmem:[%s4 + $0xa8] sm:$0xff]
    %v1779 = vld [vmem:[%s4 + $0xb0] sm:$0xff]
    %v1780 = vld [vmem:[%s4 + $0xb8] sm:$0xff]
    %v1781 = vld [vmem:[%s4 + $0xc0] sm:$0xff]
    %v1782 = vld [vmem:[%s4 + $0xc8] sm:$0xff]
    %v1783 = vld [vmem:[%s4 + $0xd0] sm:$0xff]
    %v1784 = vld [vmem:[%s4 + $0xd8] sm:$0xff]
    %v1785 = vld [vmem:[%s4 + $0xe0] sm:$0xff]
    %v1786 = vld [vmem:[%s4 + $0xe8] sm:$0xff]
    %v1787 = vld [vmem:[%s4 + $0xf0] sm:$0xff]
    %v1788 = vld [vmem:[%s4 + $0xf8] sm:$0xff]
    %v1789 = vld [vmem:[%s4 + $0x100] sm:$0xff]
    %v1790 = vld [vmem:[%s4 + $0x108] sm:$0xff]
    %v1791 = vld [vmem:[%s4 + $0x110] sm:$0xff]
    %v1792 = vld [vmem:[%s4 + $0x118] sm:$0xff]
    %v1793 = vld [vmem:[%s4 + $0x120] sm:$0xff]
    %v1794 = vld [vmem:[%s4 + $0x128] sm:$0xff]
    %v1795 = vld [vmem:[%s4 + $0x130] sm:$0xff]
    %v1796 = vld [vmem:[%s4 + $0x138] sm:$0xff]
    %v1797 = vld [vmem:[%s4 + $0x140] sm:$0xff]
    %v1798 = vld [vmem:[%s4 + $0x148] sm:$0xff]
    %v1799 = vld [vmem:[%s4 + $0x150] sm:$0xff]
    %v1800 = vld [vmem:[%s4 + $0x158] sm:$0xff]
    %v1801 = vld [vmem:[%s4 + $0x160] sm:$0xff]
    %v1802 = vld [vmem:[%s4 + $0x168] sm:$0xff]
    %v1803 = vld [vmem:[%s4 + $0x170] sm:$0xff]
    %v1804 = vld [vmem:[%s4 + $0x178] sm:$0xff]
    %v1805 = vld [vmem:[%s4 + $0x180] sm:$0xff]
    %v1806 = vld [vmem:[%s4 + $0x188] sm:$0xff]
    %v1807 = vld [vmem:[%s4 + $0x190] sm:$0xff]
    %v1808 = vld [vmem:[%s4 + $0x198] sm:$0xff]
    %v1809 = vld [vmem:[%s4 + $0x1a0] sm:$0xff]
    %v1810 = vld [vmem:[%s4 + $0x1a8] sm:$0xff]
    %v1811 = vld [vmem:[%s4 + $0x1b0] sm:$0xff]
    %v1812 = vld [vmem:[%s4 + $0x1b8] sm:$0xff]
    %v1813 = vld [vmem:[%s4 + $0x1c0] sm:$0xff]
    %v1814 = vld [vmem:[%s4 + $0x1c8] sm:$0xff]
    %v1815 = vld [vmem:[%s4 + $0x1d0] sm:$0xff]
    %v1816 = vld [vmem:[%s4 + $0x1d8] sm:$0xff]
    %v1819 = vperm.slane %v1755, 0
    %v1820 = vperm.slane %v1755, 1
    %v1821 = vperm.slane %v1755, 2
    %v1822 = vperm.slane %v1755, 3
    %v1823 = vperm.slane %v1755, 4
    %v1824 = vperm.slane %v1755, 5
    %v1825 = vperm.slane %v1755, 6
    %v1826 = vperm.slane %v1755, 7
    %v1827 = vperm.slane %v1756, 0
    %v1828 = vperm.slane %v1756, 1
    %v1829 = vperm.slane %v1756, 2
    %v1830 = vperm.slane %v1756, 3
    %v1831 = vperm.slane %v1756, 4
    %v1832 = vperm.slane %v1756, 5
    %v1833 = vperm.slane %v1756, 6
    %v1849 = vmul.f32 %v1757, %v1819
    %v1850 = vmul.f32 %v1758, %v1820
    %v1851 = vmul.f32 %v1759, %v1821
    %v1852 = vmul.f32 %v1760, %v1822
    %v1853 = vmul.f32 %v1761, %v1823
    %v1854 = vmul.f32 %v1762, %v1824
    %v1855 = vmul.f32 %v1763, %v1825
    %v1856 = vmul.f32 %v1764, %v1826
    %v1857 = vmul.f32 %v1765, %v1827
    %v1858 = vmul.f32 %v1766, %v1828
    %v1859 = vmul.f32 %v1767, %v1829
    %v1860 = vmul.f32 %v1768, %v1830
    %v1861 = vmul.f32 %v1769, %v1831
    %v1862 = vmul.f32 %v1770, %v1832
    %v1863 = vmul.f32 %v1771, %v1833
    %v1864 = vmul.f32 %v1772, %v1819
    %v1865 = vmul.f32 %v1773, %v1820
    %v1866 = vmul.f32 %v1774, %v1821
    %v1867 = vmul.f32 %v1775, %v1822
    %v1868 = vmul.f32 %v1776, %v1823
    %v1869 = vmul.f32 %v1777, %v1824
    %v1870 = vmul.f32 %v1778, %v1825
    %v1871 = vmul.f32 %v1779, %v1826
    %v1872 = vmul.f32 %v1780, %v1827
    %v1873 = vmul.f32 %v1781, %v1828
    %v1874 = vmul.f32 %v1782, %v1829
    %v1875 = vmul.f32 %v1783, %v1830
    %v1876 = vmul.f32 %v1784, %v1831
    %v1877 = vmul.f32 %v1785, %v1832
    %v1878 = vmul.f32 %v1786, %v1833
    %v1879 = vmul.f32 %v1787, %v1819
    %v1880 = vmul.f32 %v1788, %v1820
    %v1881 = vmul.f32 %v1789, %v1821
    %v1882 = vmul.f32 %v1790, %v1822
    %v1883 = vmul.f32 %v1791, %v1823
    %v1884 = vmul.f32 %v1792, %v1824
    %v1885 = vmul.f32 %v1793, %v1825
    %v1886 = vmul.f32 %v1794, %v1826
    %v1887 = vmul.f32 %v1795, %v1827
    %v1888 = vmul.f32 %v1796, %v1828
    %v1889 = vmul.f32 %v1797, %v1829
    %v1890 = vmul.f32 %v1798, %v1830
    %v1891 = vmul.f32 %v1799, %v1831
    %v1892 = vmul.f32 %v1800, %v1832
    %v1893 = vmul.f32 %v1801, %v1833
    %v1894 = vmul.f32 %v1802, %v1819
    %v1895 = vmul.f32 %v1803, %v1820
    %v1896 = vmul.f32 %v1804, %v1821
    %v1897 = vmul.f32 %v1805, %v1822
    %v1898 = vmul.f32 %v1806, %v1823
    %v1899 = vmul.f32 %v1807, %v1824
    %v1900 = vmul.f32 %v1808, %v1825
    %v1901 = vmul.f32 %v1809, %v1826
    %v1902 = vmul.f32 %v1810, %v1827
    %v1903 = vmul.f32 %v1811, %v1828
    %v1904 = vmul.f32 %v1812, %v1829
    %v1905 = vmul.f32 %v1813, %v1830
    %v1906 = vmul.f32 %v1814, %v1831
    %v1907 = vmul.f32 %v1815, %v1832
    %v1908 = vmul.f32 %v1816, %v1833
    %v1909 = vld [vmem:[%s5] sm:$0xff]
    %v1910 = vld [vmem:[%s5 + $0x8] sm:$0xff]
    %v1911 = vld [vmem:[%s5 + $0x10] sm:$0xff]
    %v1912 = vld [vmem:[%s5 + $0x18] sm:$0xff]
    %v1913 = vld [vmem:[%s5 + $0x20] sm:$0xff]
    %v1914 = vld [vmem:[%s5 + $0x28] sm:$0xff]
    %v1915 = vld [vmem:[%s5 + $0x30] sm:$0xff]
    %v1916 = vld [vmem:[%s5 + $0x38] sm:$0xff]
    %v1917 = vld [vmem:[%s5 + $0x40] sm:$0xff]
    %v1918 = vld [vmem:[%s5 + $0x48] sm:$0xff]
    %v1919 = vld [vmem:[%s5 + $0x50] sm:$0xff]
    %v1920 = vld [vmem:[%s5 + $0x58] sm:$0xff]
    %v1921 = vld [vmem:[%s5 + $0x60] sm:$0xff]
    %v1922 = vld [vmem:[%s5 + $0x68] sm:$0xff]
    %v1923 = vld [vmem:[%s5 + $0x70] sm:$0xff]
    %v1924 = vld [vmem:[%s5 + $0x78] sm:$0xff]
    %v1925 = vld [vmem:[%s5 + $0x80] sm:$0xff]
    %v1926 = vld [vmem:[%s5 + $0x88] sm:$0xff]
    %v1927 = vld [vmem:[%s5 + $0x90] sm:$0xff]
    %v1928 = vld [vmem:[%s5 + $0x98] sm:$0xff]
    %v1929 = vld [vmem:[%s5 + $0xa0] sm:$0xff]
    %v1930 = vld [vmem:[%s5 + $0xa8] sm:$0xff]
    %v1931 = vld [vmem:[%s5 + $0xb0] sm:$0xff]
    %v1932 = vld [vmem:[%s5 + $0xb8] sm:$0xff]
    %v1933 = vld [vmem:[%s5 + $0xc0] sm:$0xff]
    %v1934 = vld [vmem:[%s5 + $0xc8] sm:$0xff]
    %v1935 = vld [vmem:[%s5 + $0xd0] sm:$0xff]
    %v1936 = vld [vmem:[%s5 + $0xd8] sm:$0xff]
    %v1937 = vld [vmem:[%s5 + $0xe0] sm:$0xff]
    %v1938 = vld [vmem:[%s5 + $0xe8] sm:$0xff]
    %v1939 = vld [vmem:[%s5 + $0xf0] sm:$0xff]
    %v1940 = vld [vmem:[%s5 + $0xf8] sm:$0xff]
    %v1941 = vld [vmem:[%s5 + $0x100] sm:$0xff]
    %v1942 = vld [vmem:[%s5 + $0x108] sm:$0xff]
    %v1943 = vld [vmem:[%s5 + $0x110] sm:$0xff]
    %v1944 = vld [vmem:[%s5 + $0x118] sm:$0xff]
    %v1945 = vld [vmem:[%s5 + $0x120] sm:$0xff]
    %v1946 = vld [vmem:[%s5 + $0x128] sm:$0xff]
    %v1947 = vld [vmem:[%s5 + $0x130] sm:$0xff]
    %v1948 = vld [vmem:[%s5 + $0x138] sm:$0xff]
    %v1949 = vld [vmem:[%s5 + $0x140] sm:$0xff]
    %v1950 = vld [vmem:[%s5 + $0x148] sm:$0xff]
    %v1951 = vld [vmem:[%s5 + $0x150] sm:$0xff]
    %v1952 = vld [vmem:[%s5 + $0x158] sm:$0xff]
    %v1953 = vld [vmem:[%s5 + $0x160] sm:$0xff]
    %v1954 = vld [vmem:[%s5 + $0x168] sm:$0xff]
    %v1955 = vld [vmem:[%s5 + $0x170] sm:$0xff]
    %v1956 = vld [vmem:[%s5 + $0x178] sm:$0xff]
    %v1957 = vld [vmem:[%s5 + $0x180] sm:$0xff]
    %v1958 = vld [vmem:[%s5 + $0x188] sm:$0xff]
    %v1959 = vld [vmem:[%s5 + $0x190] sm:$0xff]
    %v1960 = vld [vmem:[%s5 + $0x198] sm:$0xff]
    %v1961 = vld [vmem:[%s5 + $0x1a0] sm:$0xff]
    %v1962 = vld [vmem:[%s5 + $0x1a8] sm:$0xff]
    %v1963 = vld [vmem:[%s5 + $0x1b0] sm:$0xff]
    %v1964 = vld [vmem:[%s5 + $0x1b8] sm:$0xff]
    %v1965 = vld [vmem:[%s5 + $0x1c0] sm:$0xff]
    %v1966 = vld [vmem:[%s5 + $0x1c8] sm:$0xff]
    %v1967 = vld [vmem:[%s5 + $0x1d0] sm:$0xff]
    %v1968 = vld [vmem:[%s5 + $0x1d8] sm:$0xff]
    %v1969 = vmul.f32 %v1909, %v1819
    %v1970 = vmul.f32 %v1910, %v1820
    %v1971 = vmul.f32 %v1911, %v1821
    %v1972 = vmul.f32 %v1912, %v1822
    %v1973 = vmul.f32 %v1913, %v1823
    %v1974 = vmul.f32 %v1914, %v1824
    %v1975 = vmul.f32 %v1915, %v1825
    %v1976 = vmul.f32 %v1916, %v1826
    %v1977 = vmul.f32 %v1917, %v1827
    %v1978 = vmul.f32 %v1918, %v1828
    %v1979 = vmul.f32 %v1919, %v1829
    %v1980 = vmul.f32 %v1920, %v1830
    %v1981 = vmul.f32 %v1921, %v1831
    %v1982 = vmul.f32 %v1922, %v1832
    %v1983 = vmul.f32 %v1923, %v1833
    %v1984 = vmul.f32 %v1924, %v1819
    %v1985 = vmul.f32 %v1925, %v1820
    %v1986 = vmul.f32 %v1926, %v1821
    %v1987 = vmul.f32 %v1927, %v1822
    %v1988 = vmul.f32 %v1928, %v1823
    %v1989 = vmul.f32 %v1929, %v1824
    %v1990 = vmul.f32 %v1930, %v1825
    %v1991 = vmul.f32 %v1931, %v1826
    %v1992 = vmul.f32 %v1932, %v1827
    %v1993 = vmul.f32 %v1933, %v1828
    %v1994 = vmul.f32 %v1934, %v1829
    %v1995 = vmul.f32 %v1935, %v1830
    %v1996 = vmul.f32 %v1936, %v1831
    %v1997 = vmul.f32 %v1937, %v1832
    %v1998 = vmul.f32 %v1938, %v1833
    %v1999 = vmul.f32 %v1939, %v1819
    %v2000 = vmul.f32 %v1940, %v1820
    %v2001 = vmul.f32 %v1941, %v1821
    %v2002 = vmul.f32 %v1942, %v1822
    %v2003 = vmul.f32 %v1943, %v1823
    %v2004 = vmul.f32 %v1944, %v1824
    %v2005 = vmul.f32 %v1945, %v1825
    %v2006 = vmul.f32 %v1946, %v1826
    %v2007 = vmul.f32 %v1947, %v1827
    %v2008 = vmul.f32 %v1948, %v1828
    %v2009 = vmul.f32 %v1949, %v1829
    %v2010 = vmul.f32 %v1950, %v1830
    %v2011 = vmul.f32 %v1951, %v1831
    %v2012 = vmul.f32 %v1952, %v1832
    %v2013 = vmul.f32 %v1953, %v1833
    %v2014 = vmul.f32 %v1954, %v1819
    %v2015 = vmul.f32 %v1955, %v1820
    %v2016 = vmul.f32 %v1956, %v1821
    %v2017 = vmul.f32 %v1957, %v1822
    %v2018 = vmul.f32 %v1958, %v1823
    %v2019 = vmul.f32 %v1959, %v1824
    %v2020 = vmul.f32 %v1960, %v1825
    %v2021 = vmul.f32 %v1961, %v1826
    %v2022 = vmul.f32 %v1962, %v1827
    %v2023 = vmul.f32 %v1963, %v1828
    %v2024 = vmul.f32 %v1964, %v1829
    %v2025 = vmul.f32 %v1965, %v1830
    %v2026 = vmul.f32 %v1966, %v1831
    %v2027 = vmul.f32 %v1967, %v1832
    %v2028 = vmul.f32 %v1968, %v1833
    %v2029 = vld [vmem:[%s6] sm:$0xff]
    %v2030 = vld [vmem:[%s6 + $0x8] sm:$0xff]
    %v2031 = vld [vmem:[%s6 + $0x10] sm:$0xff]
    %v2032 = vld [vmem:[%s6 + $0x18] sm:$0xff]
    %v2033 = vld [vmem:[%s6 + $0x20] sm:$0xff]
    %v2034 = vld [vmem:[%s6 + $0x28] sm:$0xff]
    %v2035 = vld [vmem:[%s6 + $0x30] sm:$0xff]
    %v2036 = vld [vmem:[%s6 + $0x38] sm:$0xff]
    %v2037 = vld [vmem:[%s6 + $0x40] sm:$0xff]
    %v2038 = vld [vmem:[%s6 + $0x48] sm:$0xff]
    %v2039 = vld [vmem:[%s6 + $0x50] sm:$0xff]
    %v2040 = vld [vmem:[%s6 + $0x58] sm:$0xff]
    %v2041 = vld [vmem:[%s6 + $0x60] sm:$0xff]
    %v2042 = vld [vmem:[%s6 + $0x68] sm:$0xff]
    %v2043 = vld [vmem:[%s6 + $0x70] sm:$0xff]
    %v2044 = vld [vmem:[%s6 + $0x78] sm:$0xff]
    %v2045 = vld [vmem:[%s6 + $0x80] sm:$0xff]
    %v2046 = vld [vmem:[%s6 + $0x88] sm:$0xff]
    %v2047 = vld [vmem:[%s6 + $0x90] sm:$0xff]
    %v2048 = vld [vmem:[%s6 + $0x98] sm:$0xff]
    %v2049 = vld [vmem:[%s6 + $0xa0] sm:$0xff]
    %v2050 = vld [vmem:[%s6 + $0xa8] sm:$0xff]
    %v2051 = vld [vmem:[%s6 + $0xb0] sm:$0xff]
    %v2052 = vld [vmem:[%s6 + $0xb8] sm:$0xff]
    %v2053 = vld [vmem:[%s6 + $0xc0] sm:$0xff]
    %v2054 = vld [vmem:[%s6 + $0xc8] sm:$0xff]
    %v2055 = vld [vmem:[%s6 + $0xd0] sm:$0xff]
    %v2056 = vld [vmem:[%s6 + $0xd8] sm:$0xff]
    %v2057 = vld [vmem:[%s6 + $0xe0] sm:$0xff]
    %v2058 = vld [vmem:[%s6 + $0xe8] sm:$0xff]
    %v2059 = vld [vmem:[%s6 + $0xf0] sm:$0xff]
    %v2060 = vld [vmem:[%s6 + $0xf8] sm:$0xff]
    %v2061 = vld [vmem:[%s6 + $0x100] sm:$0xff]
    %v2062 = vld [vmem:[%s6 + $0x108] sm:$0xff]
    %v2063 = vld [vmem:[%s6 + $0x110] sm:$0xff]
    %v2064 = vld [vmem:[%s6 + $0x118] sm:$0xff]
    %v2065 = vld [vmem:[%s6 + $0x120] sm:$0xff]
    %v2066 = vld [vmem:[%s6 + $0x128] sm:$0xff]
    %v2067 = vld [vmem:[%s6 + $0x130] sm:$0xff]
    %v2068 = vld [vmem:[%s6 + $0x138] sm:$0xff]
    %v2069 = vld [vmem:[%s6 + $0x140] sm:$0xff]
    %v2070 = vld [vmem:[%s6 + $0x148] sm:$0xff]
    %v2071 = vld [vmem:[%s6 + $0x150] sm:$0xff]
    %v2072 = vld [vmem:[%s6 + $0x158] sm:$0xff]
    %v2073 = vld [vmem:[%s6 + $0x160] sm:$0xff]
    %v2074 = vld [vmem:[%s6 + $0x168] sm:$0xff]
    %v2075 = vld [vmem:[%s6 + $0x170] sm:$0xff]
    %v2076 = vld [vmem:[%s6 + $0x178] sm:$0xff]
    %v2077 = vld [vmem:[%s6 + $0x180] sm:$0xff]
    %v2078 = vld [vmem:[%s6 + $0x188] sm:$0xff]
    %v2079 = vld [vmem:[%s6 + $0x190] sm:$0xff]
    %v2080 = vld [vmem:[%s6 + $0x198] sm:$0xff]
    %v2081 = vld [vmem:[%s6 + $0x1a0] sm:$0xff]
    %v2082 = vld [vmem:[%s6 + $0x1a8] sm:$0xff]
    %v2083 = vld [vmem:[%s6 + $0x1b0] sm:$0xff]
    %v2084 = vld [vmem:[%s6 + $0x1b8] sm:$0xff]
    %v2085 = vld [vmem:[%s6 + $0x1c0] sm:$0xff]
    %v2086 = vld [vmem:[%s6 + $0x1c8] sm:$0xff]
    %v2087 = vld [vmem:[%s6 + $0x1d0] sm:$0xff]
    %v2088 = vld [vmem:[%s6 + $0x1d8] sm:$0xff]
    %v2089 = vld [vmem:[%s6 + $0x1e0] sm:$0xff]
    %v2090 = vld [vmem:[%s6 + $0x1e8] sm:$0xff]
    %v2091 = vld [vmem:[%s6 + $0x1f0] sm:$0xff]
    %v2092 = vld [vmem:[%s6 + $0x1f8] sm:$0xff]
    %v2093 = vld [vmem:[%s6 + $0x200] sm:$0xff]
    %v2094 = vld [vmem:[%s6 + $0x208] sm:$0xff]
    %v2095 = vld [vmem:[%s6 + $0x210] sm:$0xff]
    %v2096 = vld [vmem:[%s6 + $0x218] sm:$0xff]
    %v2097 = vld [vmem:[%s6 + $0x220] sm:$0xff]
    %v2098 = vld [vmem:[%s6 + $0x228] sm:$0xff]
    %v2099 = vld [vmem:[%s6 + $0x230] sm:$0xff]
    %v2100 = vld [vmem:[%s6 + $0x238] sm:$0xff]
    %v2101 = vld [vmem:[%s6 + $0x240] sm:$0xff]
    %v2102 = vld [vmem:[%s6 + $0x248] sm:$0xff]
    %v2103 = vld [vmem:[%s6 + $0x250] sm:$0xff]
    %v2104 = vld [vmem:[%s6 + $0x258] sm:$0xff]
    %v2105 = vld [vmem:[%s6 + $0x260] sm:$0xff]
    %v2106 = vld [vmem:[%s6 + $0x268] sm:$0xff]
    %v2107 = vld [vmem:[%s6 + $0x270] sm:$0xff]
    %v2108 = vld [vmem:[%s6 + $0x278] sm:$0xff]
    %v2109 = vld [vmem:[%s6 + $0x280] sm:$0xff]
    %v2110 = vld [vmem:[%s6 + $0x288] sm:$0xff]
    %v2111 = vld [vmem:[%s6 + $0x290] sm:$0xff]
    %v2112 = vld [vmem:[%s6 + $0x298] sm:$0xff]
    %v2113 = vld [vmem:[%s6 + $0x2a0] sm:$0xff]
    %v2114 = vld [vmem:[%s6 + $0x2a8] sm:$0xff]
    %v2115 = vld [vmem:[%s6 + $0x2b0] sm:$0xff]
    %v2116 = vld [vmem:[%s6 + $0x2b8] sm:$0xff]
    %v2117 = vld [vmem:[%s6 + $0x2c0] sm:$0xff]
    %v2118 = vld [vmem:[%s6 + $0x2c8] sm:$0xff]
    %v2119 = vld [vmem:[%s6 + $0x2d0] sm:$0xff]
    %v2120 = vld [vmem:[%s6 + $0x2d8] sm:$0xff]
    %v2121 = vld [vmem:[%s6 + $0x2e0] sm:$0xff]
    %v2122 = vld [vmem:[%s6 + $0x2e8] sm:$0xff]
    %v2123 = vld [vmem:[%s6 + $0x2f0] sm:$0xff]
    %v2124 = vld [vmem:[%s6 + $0x2f8] sm:$0xff]
    %v2125 = vld [vmem:[%s6 + $0x300] sm:$0xff]
    %v2126 = vld [vmem:[%s6 + $0x308] sm:$0xff]
    %v2127 = vld [vmem:[%s6 + $0x310] sm:$0xff]
    %v2128 = vld [vmem:[%s6 + $0x318] sm:$0xff]
    %v2129 = vld [vmem:[%s6 + $0x320] sm:$0xff]
    %v2130 = vld [vmem:[%s6 + $0x328] sm:$0xff]
    %v2131 = vld [vmem:[%s6 + $0x330] sm:$0xff]
    %v2132 = vld [vmem:[%s6 + $0x338] sm:$0xff]
    %v2133 = vld [vmem:[%s6 + $0x340] sm:$0xff]
    %v2134 = vld [vmem:[%s6 + $0x348] sm:$0xff]
    %v2135 = vld [vmem:[%s6 + $0x350] sm:$0xff]
    %v2136 = vld [vmem:[%s6 + $0x358] sm:$0xff]
    %v2137 = vld [vmem:[%s6 + $0x360] sm:$0xff]
    %v2138 = vld [vmem:[%s6 + $0x368] sm:$0xff]
    %v2139 = vld [vmem:[%s6 + $0x370] sm:$0xff]
    %v2140 = vld [vmem:[%s6 + $0x378] sm:$0xff]
    %v2141 = vld [vmem:[%s6 + $0x380] sm:$0xff]
    %v2142 = vld [vmem:[%s6 + $0x388] sm:$0xff]
    %v2143 = vld [vmem:[%s6 + $0x390] sm:$0xff]
    %v2144 = vld [vmem:[%s6 + $0x398] sm:$0xff]
    %v2145 = vld [vmem:[%s6 + $0x3a0] sm:$0xff]
    %v2146 = vld [vmem:[%s6 + $0x3a8] sm:$0xff]
    %v2147 = vld [vmem:[%s6 + $0x3b0] sm:$0xff]
    %v2148 = vld [vmem:[%s6 + $0x3b8] sm:$0xff]
    %v2149 = vld [vmem:[%s6 + $0x3c0] sm:$0xff]
    %v2150 = vld [vmem:[%s6 + $0x3c8] sm:$0xff]
    %v2151 = vld [vmem:[%s6 + $0x3d0] sm:$0xff]
    %v2152 = vld [vmem:[%s6 + $0x3d8] sm:$0xff]
    %v2153 = vld [vmem:[%s6 + $0x3e0] sm:$0xff]
    %v2154 = vld [vmem:[%s6 + $0x3e8] sm:$0xff]
    %v2155 = vld [vmem:[%s6 + $0x3f0] sm:$0xff]
    %v2156 = vld [vmem:[%s6 + $0x3f8] sm:$0xff]
    %v2157 = vld [vmem:[%s6 + $0x400] sm:$0xff]
    %v2158 = vld [vmem:[%s6 + $0x408] sm:$0xff]
    %v2159 = vld [vmem:[%s6 + $0x410] sm:$0xff]
    %v2160 = vld [vmem:[%s6 + $0x418] sm:$0xff]
    %v2161 = vld [vmem:[%s6 + $0x420] sm:$0xff]
    %v2162 = vld [vmem:[%s6 + $0x428] sm:$0xff]
    %v2163 = vld [vmem:[%s6 + $0x430] sm:$0xff]
    %v2164 = vld [vmem:[%s6 + $0x438] sm:$0xff]
    %v2165 = vld [vmem:[%s6 + $0x440] sm:$0xff]
    %v2166 = vld [vmem:[%s6 + $0x448] sm:$0xff]
    %v2167 = vld [vmem:[%s6 + $0x450] sm:$0xff]
    %v2168 = vld [vmem:[%s6 + $0x458] sm:$0xff]
    %v2169 = vld [vmem:[%s6 + $0x460] sm:$0xff]
    %v2170 = vld [vmem:[%s6 + $0x468] sm:$0xff]
    %v2171 = vld [vmem:[%s6 + $0x470] sm:$0xff]
    %v2172 = vld [vmem:[%s6 + $0x478] sm:$0xff]
    %v2173 = vld [vmem:[%s6 + $0x480] sm:$0xff]
    %v2174 = vld [vmem:[%s6 + $0x488] sm:$0xff]
    %v2175 = vld [vmem:[%s6 + $0x490] sm:$0xff]
    %v2176 = vld [vmem:[%s6 + $0x498] sm:$0xff]
    %v2177 = vld [vmem:[%s6 + $0x4a0] sm:$0xff]
    %v2178 = vld [vmem:[%s6 + $0x4a8] sm:$0xff]
    %v2179 = vld [vmem:[%s6 + $0x4b0] sm:$0xff]
    %v2180 = vld [vmem:[%s6 + $0x4b8] sm:$0xff]
    %v2181 = vld [vmem:[%s6 + $0x4c0] sm:$0xff]
    %v2182 = vld [vmem:[%s6 + $0x4c8] sm:$0xff]
    %v2183 = vld [vmem:[%s6 + $0x4d0] sm:$0xff]
    %v2184 = vld [vmem:[%s6 + $0x4d8] sm:$0xff]
    %v2185 = vld [vmem:[%s6 + $0x4e0] sm:$0xff]
    %v2186 = vld [vmem:[%s6 + $0x4e8] sm:$0xff]
    %v2187 = vld [vmem:[%s6 + $0x4f0] sm:$0xff]
    %v2188 = vld [vmem:[%s6 + $0x4f8] sm:$0xff]
    %v2189 = vld [vmem:[%s6 + $0x500] sm:$0xff]
    %v2190 = vld [vmem:[%s6 + $0x508] sm:$0xff]
    %v2191 = vld [vmem:[%s6 + $0x510] sm:$0xff]
    %v2192 = vld [vmem:[%s6 + $0x518] sm:$0xff]
    %v2193 = vld [vmem:[%s6 + $0x520] sm:$0xff]
    %v2194 = vld [vmem:[%s6 + $0x528] sm:$0xff]
    %v2195 = vld [vmem:[%s6 + $0x530] sm:$0xff]
    %v2196 = vld [vmem:[%s6 + $0x538] sm:$0xff]
    %v2197 = vld [vmem:[%s6 + $0x540] sm:$0xff]
    %v2198 = vld [vmem:[%s6 + $0x548] sm:$0xff]
    %v2199 = vld [vmem:[%s6 + $0x550] sm:$0xff]
    %v2200 = vld [vmem:[%s6 + $0x558] sm:$0xff]
    %v2201 = vld [vmem:[%s6 + $0x560] sm:$0xff]
    %v2202 = vld [vmem:[%s6 + $0x568] sm:$0xff]
    %v2203 = vld [vmem:[%s6 + $0x570] sm:$0xff]
    %v2204 = vld [vmem:[%s6 + $0x578] sm:$0xff]
    %v2205 = vld [vmem:[%s6 + $0x580] sm:$0xff]
    %v2206 = vld [vmem:[%s6 + $0x588] sm:$0xff]
    %v2207 = vld [vmem:[%s6 + $0x590] sm:$0xff]
    %v2208 = vld [vmem:[%s6 + $0x598] sm:$0xff]
    %v2209 = vld [vmem:[%s6 + $0x5a0] sm:$0xff]
    %v2210 = vld [vmem:[%s6 + $0x5a8] sm:$0xff]
    %v2211 = vld [vmem:[%s6 + $0x5b0] sm:$0xff]
    %v2212 = vld [vmem:[%s6 + $0x5b8] sm:$0xff]
    %v2213 = vld [vmem:[%s6 + $0x5c0] sm:$0xff]
    %v2214 = vld [vmem:[%s6 + $0x5c8] sm:$0xff]
    %v2215 = vld [vmem:[%s6 + $0x5d0] sm:$0xff]
    %v2216 = vld [vmem:[%s6 + $0x5d8] sm:$0xff]
    %v2217 = vld [vmem:[%s6 + $0x5e0] sm:$0xff]
    %v2218 = vld [vmem:[%s6 + $0x5e8] sm:$0xff]
    %v2219 = vld [vmem:[%s6 + $0x5f0] sm:$0xff]
    %v2220 = vld [vmem:[%s6 + $0x5f8] sm:$0xff]
    %v2221 = vld [vmem:[%s6 + $0x600] sm:$0xff]
    %v2222 = vld [vmem:[%s6 + $0x608] sm:$0xff]
    %v2223 = vld [vmem:[%s6 + $0x610] sm:$0xff]
    %v2224 = vld [vmem:[%s6 + $0x618] sm:$0xff]
    %v2225 = vld [vmem:[%s6 + $0x620] sm:$0xff]
    %v2226 = vld [vmem:[%s6 + $0x628] sm:$0xff]
    %v2227 = vld [vmem:[%s6 + $0x630] sm:$0xff]
    %v2228 = vld [vmem:[%s6 + $0x638] sm:$0xff]
    %v2229 = vld [vmem:[%s6 + $0x640] sm:$0xff]
    %v2230 = vld [vmem:[%s6 + $0x648] sm:$0xff]
    %v2231 = vld [vmem:[%s6 + $0x650] sm:$0xff]
    %v2232 = vld [vmem:[%s6 + $0x658] sm:$0xff]
    %v2233 = vld [vmem:[%s6 + $0x660] sm:$0xff]
    %v2234 = vld [vmem:[%s6 + $0x668] sm:$0xff]
    %v2235 = vld [vmem:[%s6 + $0x670] sm:$0xff]
    %v2236 = vld [vmem:[%s6 + $0x678] sm:$0xff]
    %v2237 = vld [vmem:[%s6 + $0x680] sm:$0xff]
    %v2238 = vld [vmem:[%s6 + $0x688] sm:$0xff]
    %v2239 = vld [vmem:[%s6 + $0x690] sm:$0xff]
    %v2240 = vld [vmem:[%s6 + $0x698] sm:$0xff]
    %v2241 = vld [vmem:[%s6 + $0x6a0] sm:$0xff]
    %v2242 = vld [vmem:[%s6 + $0x6a8] sm:$0xff]
    %v2243 = vld [vmem:[%s6 + $0x6b0] sm:$0xff]
    %v2244 = vld [vmem:[%s6 + $0x6b8] sm:$0xff]
    %v2245 = vld [vmem:[%s6 + $0x6c0] sm:$0xff]
    %v2246 = vld [vmem:[%s6 + $0x6c8] sm:$0xff]
    %v2247 = vld [vmem:[%s6 + $0x6d0] sm:$0xff]
    %v2248 = vld [vmem:[%s6 + $0x6d8] sm:$0xff]
    %v2249 = vld [vmem:[%s6 + $0x6e0] sm:$0xff]
    %v2250 = vld [vmem:[%s6 + $0x6e8] sm:$0xff]
    %v2251 = vld [vmem:[%s6 + $0x6f0] sm:$0xff]
    %v2252 = vld [vmem:[%s6 + $0x6f8] sm:$0xff]
    %v2253 = vld [vmem:[%s6 + $0x700] sm:$0xff]
    %v2254 = vld [vmem:[%s6 + $0x708] sm:$0xff]
    %v2255 = vld [vmem:[%s6 + $0x710] sm:$0xff]
    %v2256 = vld [vmem:[%s6 + $0x718] sm:$0xff]
    %v2257 = vld [vmem:[%s6 + $0x720] sm:$0xff]
    %v2258 = vld [vmem:[%s6 + $0x728] sm:$0xff]
    %v2259 = vld [vmem:[%s6 + $0x730] sm:$0xff]
    %v2260 = vld [vmem:[%s6 + $0x738] sm:$0xff]
    %v2261 = vld [vmem:[%s6 + $0x740] sm:$0xff]
    %v2262 = vld [vmem:[%s6 + $0x748] sm:$0xff]
    %v2263 = vld [vmem:[%s6 + $0x750] sm:$0xff]
    %v2264 = vld [vmem:[%s6 + $0x758] sm:$0xff]
    %v2265 = vld [vmem:[%s6 + $0x760] sm:$0xff]
    %v2266 = vld [vmem:[%s6 + $0x768] sm:$0xff]
    %v2267 = vld [vmem:[%s6 + $0x770] sm:$0xff]
    %v2268 = vld [vmem:[%s6 + $0x778] sm:$0xff]
    %2269 = vmatpush.msra.mxu0 %v2044
    %2270 = vmatpush.msra.mxu0 %v2043
    %2271 = vmatpush.msra.mxu0 %v2042
    %2272 = vmatpush.msra.mxu0 %v2041
    %2273 = vmatpush.msra.mxu0 %v2040
    %2274 = vmatpush.msra.mxu0 %v2039
    %2275 = vmatpush.msra.mxu0 %v2038
    %2276 = vmatpush.msra.mxu0 %v2037
    %2277 = vmatpush.msra.mxu0 %v2036
    %2278 = vmatpush.msra.mxu0 %v2035
    %2279 = vmatpush.msra.mxu0 %v2034
    %2280 = vmatpush.msra.mxu0 %v2033
    %2281 = vmatpush.msra.mxu0 %v2032
    %2282 = vmatpush.msra.mxu0 %v2031
    %2283 = vmatpush.msra.mxu0 %v2030
    %2284 = vmatpush.msra.mxu0 %v2029
    %2285 = vmatmul.f32.gmra.mxu0 %v1849
    %v2286 = vpop.f32.mrf.mxu0
    %v2287 = vadd.f32 0.0, %v2286
    %2288 = vmatmul.f32.gmra.mxu0 %v1864
    %v2289 = vpop.f32.mrf.mxu0
    %v2290 = vadd.f32 0.0, %v2289
    %2291 = vmatmul.f32.gmra.mxu0 %v1879
    %v2292 = vpop.f32.mrf.mxu0
    %v2293 = vadd.f32 0.0, %v2292
    %2294 = vmatmul.f32.gmra.mxu0 %v1894
    %v2295 = vpop.f32.mrf.mxu0
    %v2296 = vadd.f32 0.0, %v2295
    %2297 = vdwg.mxu0
    %2298 = vmatpush.msra.mxu0 %v2060
    %2299 = vmatpush.msra.mxu0 %v2059
    %2300 = vmatpush.msra.mxu0 %v2058
    %2301 = vmatpush.msra.mxu0 %v2057
    %2302 = vmatpush.msra.mxu0 %v2056
    %2303 = vmatpush.msra.mxu0 %v2055
    %2304 = vmatpush.msra.mxu0 %v2054
    %2305 = vmatpush.msra.mxu0 %v2053
    %2306 = vmatpush.msra.mxu0 %v2052
    %2307 = vmatpush.msra.mxu0 %v2051
    %2308 = vmatpush.msra.mxu0 %v2050
    %2309 = vmatpush.msra.mxu0 %v2049
    %2310 = vmatpush.msra.mxu0 %v2048
    %2311 = vmatpush.msra.mxu0 %v2047
    %2312 = vmatpush.msra.mxu0 %v2046
    %2313 = vmatpush.msra.mxu0 %v2045
    %2314 = vmatmul.f32.gmra.mxu0 %v1850
    %v2315 = vpop.f32.mrf.mxu0
    %v2316 = vadd.f32 %v2287, %v2315
    %2317 = vmatmul.f32.gmra.mxu0 %v1865
    %v2318 = vpop.f32.mrf.mxu0
    %v2319 = vadd.f32 %v2290, %v2318
    %2320 = vmatmul.f32.gmra.mxu0 %v1880
    %v2321 = vpop.f32.mrf.mxu0
    %v2322 = vadd.f32 %v2293, %v2321
    %2323 = vmatmul.f32.gmra.mxu0 %v1895
    %v2324 = vpop.f32.mrf.mxu0
    %v2325 = vadd.f32 %v2296, %v2324
    %2326 = vdwg.mxu0
    %2327 = vmatpush.msra.mxu0 %v2076
    %2328 = vmatpush.msra.mxu0 %v2075
    %2329 = vmatpush.msra.mxu0 %v2074
    %2330 = vmatpush.msra.mxu0 %v2073
    %2331 = vmatpush.msra.mxu0 %v2072
    %2332 = vmatpush.msra.mxu0 %v2071
    %2333 = vmatpush.msra.mxu0 %v2070
    %2334 = vmatpush.msra.mxu0 %v2069
    %2335 = vmatpush.msra.mxu0 %v2068
    %2336 = vmatpush.msra.mxu0 %v2067
    %2337 = vmatpush.msra.mxu0 %v2066
    %2338 = vmatpush.msra.mxu0 %v2065
    %2339 = vmatpush.msra.mxu0 %v2064
    %2340 = vmatpush.msra.mxu0 %v2063
    %2341 = vmatpush.msra.mxu0 %v2062
    %2342 = vmatpush.msra.mxu0 %v2061
    %2343 = vmatmul.f32.gmra.mxu0 %v1851
    %v2344 = vpop.f32.mrf.mxu0
    %v2345 = vadd.f32 %v2316, %v2344
    %2346 = vmatmul.f32.gmra.mxu0 %v1866
    %v2347 = vpop.f32.mrf.mxu0
    %v2348 = vadd.f32 %v2319, %v2347
    %2349 = vmatmul.f32.gmra.mxu0 %v1881
    %v2350 = vpop.f32.mrf.mxu0
    %v2351 = vadd.f32 %v2322, %v2350
    %2352 = vmatmul.f32.gmra.mxu0 %v1896
    %v2353 = vpop.f32.mrf.mxu0
    %v2354 = vadd.f32 %v2325, %v2353
    %2355 = vdwg.mxu0
    %2356 = vmatpush.msra.mxu0 %v2092
    %2357 = vmatpush.msra.mxu0 %v2091
    %2358 = vmatpush.msra.mxu0 %v2090
    %2359 = vmatpush.msra.mxu0 %v2089
    %2360 = vmatpush.msra.mxu0 %v2088
    %2361 = vmatpush.msra.mxu0 %v2087
    %2362 = vmatpush.msra.mxu0 %v2086
    %2363 = vmatpush.msra.mxu0 %v2085
    %2364 = vmatpush.msra.mxu0 %v2084
    %2365 = vmatpush.msra.mxu0 %v2083
    %2366 = vmatpush.msra.mxu0 %v2082
    %2367 = vmatpush.msra.mxu0 %v2081
    %2368 = vmatpush.msra.mxu0 %v2080
    %2369 = vmatpush.msra.mxu0 %v2079
    %2370 = vmatpush.msra.mxu0 %v2078
    %2371 = vmatpush.msra.mxu0 %v2077
    %2372 = vmatmul.f32.gmra.mxu0 %v1852
    %v2373 = vpop.f32.mrf.mxu0
    %v2374 = vadd.f32 %v2345, %v2373
    %2375 = vmatmul.f32.gmra.mxu0 %v1867
    %v2376 = vpop.f32.mrf.mxu0
    %v2377 = vadd.f32 %v2348, %v2376
    %2378 = vmatmul.f32.gmra.mxu0 %v1882
    %v2379 = vpop.f32.mrf.mxu0
    %v2380 = vadd.f32 %v2351, %v2379
    %2381 = vmatmul.f32.gmra.mxu0 %v1897
    %v2382 = vpop.f32.mrf.mxu0
    %v2383 = vadd.f32 %v2354, %v2382
    %2384 = vdwg.mxu0
    %2385 = vmatpush.msra.mxu0 %v2108
    %2386 = vmatpush.msra.mxu0 %v2107
    %2387 = vmatpush.msra.mxu0 %v2106
    %2388 = vmatpush.msra.mxu0 %v2105
    %2389 = vmatpush.msra.mxu0 %v2104
    %2390 = vmatpush.msra.mxu0 %v2103
    %2391 = vmatpush.msra.mxu0 %v2102
    %2392 = vmatpush.msra.mxu0 %v2101
    %2393 = vmatpush.msra.mxu0 %v2100
    %2394 = vmatpush.msra.mxu0 %v2099
    %2395 = vmatpush.msra.mxu0 %v2098
    %2396 = vmatpush.msra.mxu0 %v2097
    %2397 = vmatpush.msra.mxu0 %v2096
    %2398 = vmatpush.msra.mxu0 %v2095
    %2399 = vmatpush.msra.mxu0 %v2094
    %2400 = vmatpush.msra.mxu0 %v2093
    %2401 = vmatmul.f32.gmra.mxu0 %v1853
    %v2402 = vpop.f32.mrf.mxu0
    %v2403 = vadd.f32 %v2374, %v2402
    %2404 = vmatmul.f32.gmra.mxu0 %v1868
    %v2405 = vpop.f32.mrf.mxu0
    %v2406 = vadd.f32 %v2377, %v2405
    %2407 = vmatmul.f32.gmra.mxu0 %v1883
    %v2408 = vpop.f32.mrf.mxu0
    %v2409 = vadd.f32 %v2380, %v2408
    %2410 = vmatmul.f32.gmra.mxu0 %v1898
    %v2411 = vpop.f32.mrf.mxu0
    %v2412 = vadd.f32 %v2383, %v2411
    %2413 = vdwg.mxu0
    %2414 = vmatpush.msra.mxu0 %v2124
    %2415 = vmatpush.msra.mxu0 %v2123
    %2416 = vmatpush.msra.mxu0 %v2122
    %2417 = vmatpush.msra.mxu0 %v2121
    %2418 = vmatpush.msra.mxu0 %v2120
    %2419 = vmatpush.msra.mxu0 %v2119
    %2420 = vmatpush.msra.mxu0 %v2118
    %2421 = vmatpush.msra.mxu0 %v2117
    %2422 = vmatpush.msra.mxu0 %v2116
    %2423 = vmatpush.msra.mxu0 %v2115
    %2424 = vmatpush.msra.mxu0 %v2114
    %2425 = vmatpush.msra.mxu0 %v2113
    %2426 = vmatpush.msra.mxu0 %v2112
    %2427 = vmatpush.msra.mxu0 %v2111
    %2428 = vmatpush.msra.mxu0 %v2110
    %2429 = vmatpush.msra.mxu0 %v2109
    %2430 = vmatmul.f32.gmra.mxu0 %v1854
    %v2431 = vpop.f32.mrf.mxu0
    %v2432 = vadd.f32 %v2403, %v2431
    %2433 = vmatmul.f32.gmra.mxu0 %v1869
    %v2434 = vpop.f32.mrf.mxu0
    %v2435 = vadd.f32 %v2406, %v2434
    %2436 = vmatmul.f32.gmra.mxu0 %v1884
    %v2437 = vpop.f32.mrf.mxu0
    %v2438 = vadd.f32 %v2409, %v2437
    %2439 = vmatmul.f32.gmra.mxu0 %v1899
    %v2440 = vpop.f32.mrf.mxu0
    %v2441 = vadd.f32 %v2412, %v2440
    %2442 = vdwg.mxu0
    %2443 = vmatpush.msra.mxu0 %v2140
    %2444 = vmatpush.msra.mxu0 %v2139
    %2445 = vmatpush.msra.mxu0 %v2138
    %2446 = vmatpush.msra.mxu0 %v2137
    %2447 = vmatpush.msra.mxu0 %v2136
    %2448 = vmatpush.msra.mxu0 %v2135
    %2449 = vmatpush.msra.mxu0 %v2134
    %2450 = vmatpush.msra.mxu0 %v2133
    %2451 = vmatpush.msra.mxu0 %v2132
    %2452 = vmatpush.msra.mxu0 %v2131
    %2453 = vmatpush.msra.mxu0 %v2130
    %2454 = vmatpush.msra.mxu0 %v2129
    %2455 = vmatpush.msra.mxu0 %v2128
    %2456 = vmatpush.msra.mxu0 %v2127
    %2457 = vmatpush.msra.mxu0 %v2126
    %2458 = vmatpush.msra.mxu0 %v2125
    %2459 = vmatmul.f32.gmra.mxu0 %v1855
    %v2460 = vpop.f32.mrf.mxu0
    %v2461 = vadd.f32 %v2432, %v2460
    %2462 = vmatmul.f32.gmra.mxu0 %v1870
    %v2463 = vpop.f32.mrf.mxu0
    %v2464 = vadd.f32 %v2435, %v2463
    %2465 = vmatmul.f32.gmra.mxu0 %v1885
    %v2466 = vpop.f32.mrf.mxu0
    %v2467 = vadd.f32 %v2438, %v2466
    %2468 = vmatmul.f32.gmra.mxu0 %v1900
    %v2469 = vpop.f32.mrf.mxu0
    %v2470 = vadd.f32 %v2441, %v2469
    %2471 = vdwg.mxu0
    %2472 = vmatpush.msra.mxu0 %v2156
    %2473 = vmatpush.msra.mxu0 %v2155
    %2474 = vmatpush.msra.mxu0 %v2154
    %2475 = vmatpush.msra.mxu0 %v2153
    %2476 = vmatpush.msra.mxu0 %v2152
    %2477 = vmatpush.msra.mxu0 %v2151
    %2478 = vmatpush.msra.mxu0 %v2150
    %2479 = vmatpush.msra.mxu0 %v2149
    %2480 = vmatpush.msra.mxu0 %v2148
    %2481 = vmatpush.msra.mxu0 %v2147
    %2482 = vmatpush.msra.mxu0 %v2146
    %2483 = vmatpush.msra.mxu0 %v2145
    %2484 = vmatpush.msra.mxu0 %v2144
    %2485 = vmatpush.msra.mxu0 %v2143
    %2486 = vmatpush.msra.mxu0 %v2142
    %2487 = vmatpush.msra.mxu0 %v2141
    %2488 = vmatmul.f32.gmra.mxu0 %v1856
    %v2489 = vpop.f32.mrf.mxu0
    %v2490 = vadd.f32 %v2461, %v2489
    %2491 = vmatmul.f32.gmra.mxu0 %v1871
    %v2492 = vpop.f32.mrf.mxu0
    %v2493 = vadd.f32 %v2464, %v2492
    %2494 = vmatmul.f32.gmra.mxu0 %v1886
    %v2495 = vpop.f32.mrf.mxu0
    %v2496 = vadd.f32 %v2467, %v2495
    %2497 = vmatmul.f32.gmra.mxu0 %v1901
    %v2498 = vpop.f32.mrf.mxu0
    %v2499 = vadd.f32 %v2470, %v2498
    %2500 = vdwg.mxu0
    %2501 = vmatpush.msra.mxu0 %v2172
    %2502 = vmatpush.msra.mxu0 %v2171
    %2503 = vmatpush.msra.mxu0 %v2170
    %2504 = vmatpush.msra.mxu0 %v2169
    %2505 = vmatpush.msra.mxu0 %v2168
    %2506 = vmatpush.msra.mxu0 %v2167
    %2507 = vmatpush.msra.mxu0 %v2166
    %2508 = vmatpush.msra.mxu0 %v2165
    %2509 = vmatpush.msra.mxu0 %v2164
    %2510 = vmatpush.msra.mxu0 %v2163
    %2511 = vmatpush.msra.mxu0 %v2162
    %2512 = vmatpush.msra.mxu0 %v2161
    %2513 = vmatpush.msra.mxu0 %v2160
    %2514 = vmatpush.msra.mxu0 %v2159
    %2515 = vmatpush.msra.mxu0 %v2158
    %2516 = vmatpush.msra.mxu0 %v2157
    %2517 = vmatmul.f32.gmra.mxu0 %v1857
    %v2518 = vpop.f32.mrf.mxu0
    %v2519 = vadd.f32 %v2490, %v2518
    %2520 = vmatmul.f32.gmra.mxu0 %v1872
    %v2521 = vpop.f32.mrf.mxu0
    %v2522 = vadd.f32 %v2493, %v2521
    %2523 = vmatmul.f32.gmra.mxu0 %v1887
    %v2524 = vpop.f32.mrf.mxu0
    %v2525 = vadd.f32 %v2496, %v2524
    %2526 = vmatmul.f32.gmra.mxu0 %v1902
    %v2527 = vpop.f32.mrf.mxu0
    %v2528 = vadd.f32 %v2499, %v2527
    %2529 = vdwg.mxu0
    %2530 = vmatpush.msra.mxu0 %v2188
    %2531 = vmatpush.msra.mxu0 %v2187
    %2532 = vmatpush.msra.mxu0 %v2186
    %2533 = vmatpush.msra.mxu0 %v2185
    %2534 = vmatpush.msra.mxu0 %v2184
    %2535 = vmatpush.msra.mxu0 %v2183
    %2536 = vmatpush.msra.mxu0 %v2182
    %2537 = vmatpush.msra.mxu0 %v2181
    %2538 = vmatpush.msra.mxu0 %v2180
    %2539 = vmatpush.msra.mxu0 %v2179
    %2540 = vmatpush.msra.mxu0 %v2178
    %2541 = vmatpush.msra.mxu0 %v2177
    %2542 = vmatpush.msra.mxu0 %v2176
    %2543 = vmatpush.msra.mxu0 %v2175
    %2544 = vmatpush.msra.mxu0 %v2174
    %2545 = vmatpush.msra.mxu0 %v2173
    %2546 = vmatmul.f32.gmra.mxu0 %v1858
    %v2547 = vpop.f32.mrf.mxu0
    %v2548 = vadd.f32 %v2519, %v2547
    %2549 = vmatmul.f32.gmra.mxu0 %v1873
    %v2550 = vpop.f32.mrf.mxu0
    %v2551 = vadd.f32 %v2522, %v2550
    %2552 = vmatmul.f32.gmra.mxu0 %v1888
    %v2553 = vpop.f32.mrf.mxu0
    %v2554 = vadd.f32 %v2525, %v2553
    %2555 = vmatmul.f32.gmra.mxu0 %v1903
    %v2556 = vpop.f32.mrf.mxu0
    %v2557 = vadd.f32 %v2528, %v2556
    %2558 = vdwg.mxu0
    %2559 = vmatpush.msra.mxu0 %v2204
    %2560 = vmatpush.msra.mxu0 %v2203
    %2561 = vmatpush.msra.mxu0 %v2202
    %2562 = vmatpush.msra.mxu0 %v2201
    %2563 = vmatpush.msra.mxu0 %v2200
    %2564 = vmatpush.msra.mxu0 %v2199
    %2565 = vmatpush.msra.mxu0 %v2198
    %2566 = vmatpush.msra.mxu0 %v2197
    %2567 = vmatpush.msra.mxu0 %v2196
    %2568 = vmatpush.msra.mxu0 %v2195
    %2569 = vmatpush.msra.mxu0 %v2194
    %2570 = vmatpush.msra.mxu0 %v2193
    %2571 = vmatpush.msra.mxu0 %v2192
    %2572 = vmatpush.msra.mxu0 %v2191
    %2573 = vmatpush.msra.mxu0 %v2190
    %2574 = vmatpush.msra.mxu0 %v2189
    %2575 = vmatmul.f32.gmra.mxu0 %v1859
    %v2576 = vpop.f32.mrf.mxu0
    %v2577 = vadd.f32 %v2548, %v2576
    %2578 = vmatmul.f32.gmra.mxu0 %v1874
    %v2579 = vpop.f32.mrf.mxu0
    %v2580 = vadd.f32 %v2551, %v2579
    %2581 = vmatmul.f32.gmra.mxu0 %v1889
    %v2582 = vpop.f32.mrf.mxu0
    %v2583 = vadd.f32 %v2554, %v2582
    %2584 = vmatmul.f32.gmra.mxu0 %v1904
    %v2585 = vpop.f32.mrf.mxu0
    %v2586 = vadd.f32 %v2557, %v2585
    %2587 = vdwg.mxu0
    %2588 = vmatpush.msra.mxu0 %v2220
    %2589 = vmatpush.msra.mxu0 %v2219
    %2590 = vmatpush.msra.mxu0 %v2218
    %2591 = vmatpush.msra.mxu0 %v2217
    %2592 = vmatpush.msra.mxu0 %v2216
    %2593 = vmatpush.msra.mxu0 %v2215
    %2594 = vmatpush.msra.mxu0 %v2214
    %2595 = vmatpush.msra.mxu0 %v2213
    %2596 = vmatpush.msra.mxu0 %v2212
    %2597 = vmatpush.msra.mxu0 %v2211
    %2598 = vmatpush.msra.mxu0 %v2210
    %2599 = vmatpush.msra.mxu0 %v2209
    %2600 = vmatpush.msra.mxu0 %v2208
    %2601 = vmatpush.msra.mxu0 %v2207
    %2602 = vmatpush.msra.mxu0 %v2206
    %2603 = vmatpush.msra.mxu0 %v2205
    %2604 = vmatmul.f32.gmra.mxu0 %v1860
    %v2605 = vpop.f32.mrf.mxu0
    %v2606 = vadd.f32 %v2577, %v2605
    %2607 = vmatmul.f32.gmra.mxu0 %v1875
    %v2608 = vpop.f32.mrf.mxu0
    %v2609 = vadd.f32 %v2580, %v2608
    %2610 = vmatmul.f32.gmra.mxu0 %v1890
    %v2611 = vpop.f32.mrf.mxu0
    %v2612 = vadd.f32 %v2583, %v2611
    %2613 = vmatmul.f32.gmra.mxu0 %v1905
    %v2614 = vpop.f32.mrf.mxu0
    %v2615 = vadd.f32 %v2586, %v2614
    %2616 = vdwg.mxu0
    %2617 = vmatpush.msra.mxu0 %v2236
    %2618 = vmatpush.msra.mxu0 %v2235
    %2619 = vmatpush.msra.mxu0 %v2234
    %2620 = vmatpush.msra.mxu0 %v2233
    %2621 = vmatpush.msra.mxu0 %v2232
    %2622 = vmatpush.msra.mxu0 %v2231
    %2623 = vmatpush.msra.mxu0 %v2230
    %2624 = vmatpush.msra.mxu0 %v2229
    %2625 = vmatpush.msra.mxu0 %v2228
    %2626 = vmatpush.msra.mxu0 %v2227
    %2627 = vmatpush.msra.mxu0 %v2226
    %2628 = vmatpush.msra.mxu0 %v2225
    %2629 = vmatpush.msra.mxu0 %v2224
    %2630 = vmatpush.msra.mxu0 %v2223
    %2631 = vmatpush.msra.mxu0 %v2222
    %2632 = vmatpush.msra.mxu0 %v2221
    %2633 = vmatmul.f32.gmra.mxu0 %v1861
    %v2634 = vpop.f32.mrf.mxu0
    %v2635 = vadd.f32 %v2606, %v2634
    %2636 = vmatmul.f32.gmra.mxu0 %v1876
    %v2637 = vpop.f32.mrf.mxu0
    %v2638 = vadd.f32 %v2609, %v2637
    %2639 = vmatmul.f32.gmra.mxu0 %v1891
    %v2640 = vpop.f32.mrf.mxu0
    %v2641 = vadd.f32 %v2612, %v2640
    %2642 = vmatmul.f32.gmra.mxu0 %v1906
    %v2643 = vpop.f32.mrf.mxu0
    %v2644 = vadd.f32 %v2615, %v2643
    %2645 = vdwg.mxu0
    %2646 = vmatpush.msra.mxu0 %v2252
    %2647 = vmatpush.msra.mxu0 %v2251
    %2648 = vmatpush.msra.mxu0 %v2250
    %2649 = vmatpush.msra.mxu0 %v2249
    %2650 = vmatpush.msra.mxu0 %v2248
    %2651 = vmatpush.msra.mxu0 %v2247
    %2652 = vmatpush.msra.mxu0 %v2246
    %2653 = vmatpush.msra.mxu0 %v2245
    %2654 = vmatpush.msra.mxu0 %v2244
    %2655 = vmatpush.msra.mxu0 %v2243
    %2656 = vmatpush.msra.mxu0 %v2242
    %2657 = vmatpush.msra.mxu0 %v2241
    %2658 = vmatpush.msra.mxu0 %v2240
    %2659 = vmatpush.msra.mxu0 %v2239
    %2660 = vmatpush.msra.mxu0 %v2238
    %2661 = vmatpush.msra.mxu0 %v2237
    %2662 = vmatmul.f32.gmra.mxu0 %v1862
    %v2663 = vpop.f32.mrf.mxu0
    %v2664 = vadd.f32 %v2635, %v2663
    %2665 = vmatmul.f32.gmra.mxu0 %v1877
    %v2666 = vpop.f32.mrf.mxu0
    %v2667 = vadd.f32 %v2638, %v2666
    %2668 = vmatmul.f32.gmra.mxu0 %v1892
    %v2669 = vpop.f32.mrf.mxu0
    %v2670 = vadd.f32 %v2641, %v2669
    %2671 = vmatmul.f32.gmra.mxu0 %v1907
    %v2672 = vpop.f32.mrf.mxu0
    %v2673 = vadd.f32 %v2644, %v2672
    %2674 = vdwg.mxu0
    %2675 = vmatpush.msra.mxu0 %v2268
    %2676 = vmatpush.msra.mxu0 %v2267
    %2677 = vmatpush.msra.mxu0 %v2266
    %2678 = vmatpush.msra.mxu0 %v2265
    %2679 = vmatpush.msra.mxu0 %v2264
    %2680 = vmatpush.msra.mxu0 %v2263
    %2681 = vmatpush.msra.mxu0 %v2262
    %2682 = vmatpush.msra.mxu0 %v2261
    %2683 = vmatpush.msra.mxu0 %v2260
    %2684 = vmatpush.msra.mxu0 %v2259
    %2685 = vmatpush.msra.mxu0 %v2258
    %2686 = vmatpush.msra.mxu0 %v2257
    %2687 = vmatpush.msra.mxu0 %v2256
    %2688 = vmatpush.msra.mxu0 %v2255
    %2689 = vmatpush.msra.mxu0 %v2254
    %2690 = vmatpush.msra.mxu0 %v2253
    %2691 = vmatmul.f32.gmra.mxu0 %v1863
    %v2692 = vpop.f32.mrf.mxu0
    %v2693 = vadd.f32 %v2664, %v2692
    %2694 = vmatmul.f32.gmra.mxu0 %v1878
    %v2695 = vpop.f32.mrf.mxu0
    %v2696 = vadd.f32 %v2667, %v2695
    %2697 = vmatmul.f32.gmra.mxu0 %v1893
    %v2698 = vpop.f32.mrf.mxu0
    %v2699 = vadd.f32 %v2670, %v2698
    %2700 = vmatmul.f32.gmra.mxu0 %v1908
    %v2701 = vpop.f32.mrf.mxu0
    %v2702 = vadd.f32 %v2673, %v2701
    %2703 = vdwg.mxu0
    %2704 = vmatpush.msra.mxu0 %v2044
    %2705 = vmatpush.msra.mxu0 %v2043
    %2706 = vmatpush.msra.mxu0 %v2042
    %2707 = vmatpush.msra.mxu0 %v2041
    %2708 = vmatpush.msra.mxu0 %v2040
    %2709 = vmatpush.msra.mxu0 %v2039
    %2710 = vmatpush.msra.mxu0 %v2038
    %2711 = vmatpush.msra.mxu0 %v2037
    %2712 = vmatpush.msra.mxu0 %v2036
    %2713 = vmatpush.msra.mxu0 %v2035
    %2714 = vmatpush.msra.mxu0 %v2034
    %2715 = vmatpush.msra.mxu0 %v2033
    %2716 = vmatpush.msra.mxu0 %v2032
    %2717 = vmatpush.msra.mxu0 %v2031
    %2718 = vmatpush.msra.mxu0 %v2030
    %2719 = vmatpush.msra.mxu0 %v2029
    %2720 = vmatmul.f32.gmra.mxu0 %v1969
    %v2721 = vpop.f32.mrf.mxu0
    %v2722 = vadd.f32 0.0, %v2721
    %2723 = vmatmul.f32.gmra.mxu0 %v1984
    %v2724 = vpop.f32.mrf.mxu0
    %v2725 = vadd.f32 0.0, %v2724
    %2726 = vmatmul.f32.gmra.mxu0 %v1999
    %v2727 = vpop.f32.mrf.mxu0
    %v2728 = vadd.f32 0.0, %v2727
    %2729 = vmatmul.f32.gmra.mxu0 %v2014
    %v2730 = vpop.f32.mrf.mxu0
    %v2731 = vadd.f32 0.0, %v2730
    %2732 = vdwg.mxu0
    %2733 = vmatpush.msra.mxu0 %v2060
    %2734 = vmatpush.msra.mxu0 %v2059
    %2735 = vmatpush.msra.mxu0 %v2058
    %2736 = vmatpush.msra.mxu0 %v2057
    %2737 = vmatpush.msra.mxu0 %v2056
    %2738 = vmatpush.msra.mxu0 %v2055
    %2739 = vmatpush.msra.mxu0 %v2054
    %2740 = vmatpush.msra.mxu0 %v2053
    %2741 = vmatpush.msra.mxu0 %v2052
    %2742 = vmatpush.msra.mxu0 %v2051
    %2743 = vmatpush.msra.mxu0 %v2050
    %2744 = vmatpush.msra.mxu0 %v2049
    %2745 = vmatpush.msra.mxu0 %v2048
    %2746 = vmatpush.msra.mxu0 %v2047
    %2747 = vmatpush.msra.mxu0 %v2046
    %2748 = vmatpush.msra.mxu0 %v2045
    %2749 = vmatmul.f32.gmra.mxu0 %v1970
    %v2750 = vpop.f32.mrf.mxu0
    %v2751 = vadd.f32 %v2722, %v2750
    %2752 = vmatmul.f32.gmra.mxu0 %v1985
    %v2753 = vpop.f32.mrf.mxu0
    %v2754 = vadd.f32 %v2725, %v2753
    %2755 = vmatmul.f32.gmra.mxu0 %v2000
    %v2756 = vpop.f32.mrf.mxu0
    %v2757 = vadd.f32 %v2728, %v2756
    %2758 = vmatmul.f32.gmra.mxu0 %v2015
    %v2759 = vpop.f32.mrf.mxu0
    %v2760 = vadd.f32 %v2731, %v2759
    %2761 = vdwg.mxu0
    %2762 = vmatpush.msra.mxu0 %v2076
    %2763 = vmatpush.msra.mxu0 %v2075
    %2764 = vmatpush.msra.mxu0 %v2074
    %2765 = vmatpush.msra.mxu0 %v2073
    %2766 = vmatpush.msra.mxu0 %v2072
    %2767 = vmatpush.msra.mxu0 %v2071
    %2768 = vmatpush.msra.mxu0 %v2070
    %2769 = vmatpush.msra.mxu0 %v2069
    %2770 = vmatpush.msra.mxu0 %v2068
    %2771 = vmatpush.msra.mxu0 %v2067
    %2772 = vmatpush.msra.mxu0 %v2066
    %2773 = vmatpush.msra.mxu0 %v2065
    %2774 = vmatpush.msra.mxu0 %v2064
    %2775 = vmatpush.msra.mxu0 %v2063
    %2776 = vmatpush.msra.mxu0 %v2062
    %2777 = vmatpush.msra.mxu0 %v2061
    %2778 = vmatmul.f32.gmra.mxu0 %v1971
    %v2779 = vpop.f32.mrf.mxu0
    %v2780 = vadd.f32 %v2751, %v2779
    %2781 = vmatmul.f32.gmra.mxu0 %v1986
    %v2782 = vpop.f32.mrf.mxu0
    %v2783 = vadd.f32 %v2754, %v2782
    %2784 = vmatmul.f32.gmra.mxu0 %v2001
    %v2785 = vpop.f32.mrf.mxu0
    %v2786 = vadd.f32 %v2757, %v2785
    %2787 = vmatmul.f32.gmra.mxu0 %v2016
    %v2788 = vpop.f32.mrf.mxu0
    %v2789 = vadd.f32 %v2760, %v2788
    %2790 = vdwg.mxu0
    %2791 = vmatpush.msra.mxu0 %v2092
    %2792 = vmatpush.msra.mxu0 %v2091
    %2793 = vmatpush.msra.mxu0 %v2090
    %2794 = vmatpush.msra.mxu0 %v2089
    %2795 = vmatpush.msra.mxu0 %v2088
    %2796 = vmatpush.msra.mxu0 %v2087
    %2797 = vmatpush.msra.mxu0 %v2086
    %2798 = vmatpush.msra.mxu0 %v2085
    %2799 = vmatpush.msra.mxu0 %v2084
    %2800 = vmatpush.msra.mxu0 %v2083
    %2801 = vmatpush.msra.mxu0 %v2082
    %2802 = vmatpush.msra.mxu0 %v2081
    %2803 = vmatpush.msra.mxu0 %v2080
    %2804 = vmatpush.msra.mxu0 %v2079
    %2805 = vmatpush.msra.mxu0 %v2078
    %2806 = vmatpush.msra.mxu0 %v2077
    %2807 = vmatmul.f32.gmra.mxu0 %v1972
    %v2808 = vpop.f32.mrf.mxu0
    %v2809 = vadd.f32 %v2780, %v2808
    %2810 = vmatmul.f32.gmra.mxu0 %v1987
    %v2811 = vpop.f32.mrf.mxu0
    %v2812 = vadd.f32 %v2783, %v2811
    %2813 = vmatmul.f32.gmra.mxu0 %v2002
    %v2814 = vpop.f32.mrf.mxu0
    %v2815 = vadd.f32 %v2786, %v2814
    %2816 = vmatmul.f32.gmra.mxu0 %v2017
    %v2817 = vpop.f32.mrf.mxu0
    %v2818 = vadd.f32 %v2789, %v2817
    %2819 = vdwg.mxu0
    %2820 = vmatpush.msra.mxu0 %v2108
    %2821 = vmatpush.msra.mxu0 %v2107
    %2822 = vmatpush.msra.mxu0 %v2106
    %2823 = vmatpush.msra.mxu0 %v2105
    %2824 = vmatpush.msra.mxu0 %v2104
    %2825 = vmatpush.msra.mxu0 %v2103
    %2826 = vmatpush.msra.mxu0 %v2102
    %2827 = vmatpush.msra.mxu0 %v2101
    %2828 = vmatpush.msra.mxu0 %v2100
    %2829 = vmatpush.msra.mxu0 %v2099
    %2830 = vmatpush.msra.mxu0 %v2098
    %2831 = vmatpush.msra.mxu0 %v2097
    %2832 = vmatpush.msra.mxu0 %v2096
    %2833 = vmatpush.msra.mxu0 %v2095
    %2834 = vmatpush.msra.mxu0 %v2094
    %2835 = vmatpush.msra.mxu0 %v2093
    %2836 = vmatmul.f32.gmra.mxu0 %v1973
    %v2837 = vpop.f32.mrf.mxu0
    %v2838 = vadd.f32 %v2809, %v2837
    %2839 = vmatmul.f32.gmra.mxu0 %v1988
    %v2840 = vpop.f32.mrf.mxu0
    %v2841 = vadd.f32 %v2812, %v2840
    %2842 = vmatmul.f32.gmra.mxu0 %v2003
    %v2843 = vpop.f32.mrf.mxu0
    %v2844 = vadd.f32 %v2815, %v2843
    %2845 = vmatmul.f32.gmra.mxu0 %v2018
    %v2846 = vpop.f32.mrf.mxu0
    %v2847 = vadd.f32 %v2818, %v2846
    %2848 = vdwg.mxu0
    %2849 = vmatpush.msra.mxu0 %v2124
    %2850 = vmatpush.msra.mxu0 %v2123
    %2851 = vmatpush.msra.mxu0 %v2122
    %2852 = vmatpush.msra.mxu0 %v2121
    %2853 = vmatpush.msra.mxu0 %v2120
    %2854 = vmatpush.msra.mxu0 %v2119
    %2855 = vmatpush.msra.mxu0 %v2118
    %2856 = vmatpush.msra.mxu0 %v2117
    %2857 = vmatpush.msra.mxu0 %v2116
    %2858 = vmatpush.msra.mxu0 %v2115
    %2859 = vmatpush.msra.mxu0 %v2114
    %2860 = vmatpush.msra.mxu0 %v2113
    %2861 = vmatpush.msra.mxu0 %v2112
    %2862 = vmatpush.msra.mxu0 %v2111
    %2863 = vmatpush.msra.mxu0 %v2110
    %2864 = vmatpush.msra.mxu0 %v2109
    %2865 = vmatmul.f32.gmra.mxu0 %v1974
    %v2866 = vpop.f32.mrf.mxu0
    %v2867 = vadd.f32 %v2838, %v2866
    %2868 = vmatmul.f32.gmra.mxu0 %v1989
    %v2869 = vpop.f32.mrf.mxu0
    %v2870 = vadd.f32 %v2841, %v2869
    %2871 = vmatmul.f32.gmra.mxu0 %v2004
    %v2872 = vpop.f32.mrf.mxu0
    %v2873 = vadd.f32 %v2844, %v2872
    %2874 = vmatmul.f32.gmra.mxu0 %v2019
    %v2875 = vpop.f32.mrf.mxu0
    %v2876 = vadd.f32 %v2847, %v2875
    %2877 = vdwg.mxu0
    %2878 = vmatpush.msra.mxu0 %v2140
    %2879 = vmatpush.msra.mxu0 %v2139
    %2880 = vmatpush.msra.mxu0 %v2138
    %2881 = vmatpush.msra.mxu0 %v2137
    %2882 = vmatpush.msra.mxu0 %v2136
    %2883 = vmatpush.msra.mxu0 %v2135
    %2884 = vmatpush.msra.mxu0 %v2134
    %2885 = vmatpush.msra.mxu0 %v2133
    %2886 = vmatpush.msra.mxu0 %v2132
    %2887 = vmatpush.msra.mxu0 %v2131
    %2888 = vmatpush.msra.mxu0 %v2130
    %2889 = vmatpush.msra.mxu0 %v2129
    %2890 = vmatpush.msra.mxu0 %v2128
    %2891 = vmatpush.msra.mxu0 %v2127
    %2892 = vmatpush.msra.mxu0 %v2126
    %2893 = vmatpush.msra.mxu0 %v2125
    %2894 = vmatmul.f32.gmra.mxu0 %v1975
    %v2895 = vpop.f32.mrf.mxu0
    %v2896 = vadd.f32 %v2867, %v2895
    %2897 = vmatmul.f32.gmra.mxu0 %v1990
    %v2898 = vpop.f32.mrf.mxu0
    %v2899 = vadd.f32 %v2870, %v2898
    %2900 = vmatmul.f32.gmra.mxu0 %v2005
    %v2901 = vpop.f32.mrf.mxu0
    %v2902 = vadd.f32 %v2873, %v2901
    %2903 = vmatmul.f32.gmra.mxu0 %v2020
    %v2904 = vpop.f32.mrf.mxu0
    %v2905 = vadd.f32 %v2876, %v2904
    %2906 = vdwg.mxu0
    %2907 = vmatpush.msra.mxu0 %v2156
    %2908 = vmatpush.msra.mxu0 %v2155
    %2909 = vmatpush.msra.mxu0 %v2154
    %2910 = vmatpush.msra.mxu0 %v2153
    %2911 = vmatpush.msra.mxu0 %v2152
    %2912 = vmatpush.msra.mxu0 %v2151
    %2913 = vmatpush.msra.mxu0 %v2150
    %2914 = vmatpush.msra.mxu0 %v2149
    %2915 = vmatpush.msra.mxu0 %v2148
    %2916 = vmatpush.msra.mxu0 %v2147
    %2917 = vmatpush.msra.mxu0 %v2146
    %2918 = vmatpush.msra.mxu0 %v2145
    %2919 = vmatpush.msra.mxu0 %v2144
    %2920 = vmatpush.msra.mxu0 %v2143
    %2921 = vmatpush.msra.mxu0 %v2142
    %2922 = vmatpush.msra.mxu0 %v2141
    %2923 = vmatmul.f32.gmra.mxu0 %v1976
    %v2924 = vpop.f32.mrf.mxu0
    %v2925 = vadd.f32 %v2896, %v2924
    %2926 = vmatmul.f32.gmra.mxu0 %v1991
    %v2927 = vpop.f32.mrf.mxu0
    %v2928 = vadd.f32 %v2899, %v2927
    %2929 = vmatmul.f32.gmra.mxu0 %v2006
    %v2930 = vpop.f32.mrf.mxu0
    %v2931 = vadd.f32 %v2902, %v2930
    %2932 = vmatmul.f32.gmra.mxu0 %v2021
    %v2933 = vpop.f32.mrf.mxu0
    %v2934 = vadd.f32 %v2905, %v2933
    %2935 = vdwg.mxu0
    %2936 = vmatpush.msra.mxu0 %v2172
    %2937 = vmatpush.msra.mxu0 %v2171
    %2938 = vmatpush.msra.mxu0 %v2170
    %2939 = vmatpush.msra.mxu0 %v2169
    %2940 = vmatpush.msra.mxu0 %v2168
    %2941 = vmatpush.msra.mxu0 %v2167
    %2942 = vmatpush.msra.mxu0 %v2166
    %2943 = vmatpush.msra.mxu0 %v2165
    %2944 = vmatpush.msra.mxu0 %v2164
    %2945 = vmatpush.msra.mxu0 %v2163
    %2946 = vmatpush.msra.mxu0 %v2162
    %2947 = vmatpush.msra.mxu0 %v2161
    %2948 = vmatpush.msra.mxu0 %v2160
    %2949 = vmatpush.msra.mxu0 %v2159
    %2950 = vmatpush.msra.mxu0 %v2158
    %2951 = vmatpush.msra.mxu0 %v2157
    %2952 = vmatmul.f32.gmra.mxu0 %v1977
    %v2953 = vpop.f32.mrf.mxu0
    %v2954 = vadd.f32 %v2925, %v2953
    %2955 = vmatmul.f32.gmra.mxu0 %v1992
    %v2956 = vpop.f32.mrf.mxu0
    %v2957 = vadd.f32 %v2928, %v2956
    %2958 = vmatmul.f32.gmra.mxu0 %v2007
    %v2959 = vpop.f32.mrf.mxu0
    %v2960 = vadd.f32 %v2931, %v2959
    %2961 = vmatmul.f32.gmra.mxu0 %v2022
    %v2962 = vpop.f32.mrf.mxu0
    %v2963 = vadd.f32 %v2934, %v2962
    %2964 = vdwg.mxu0
    %2965 = vmatpush.msra.mxu0 %v2188
    %2966 = vmatpush.msra.mxu0 %v2187
    %2967 = vmatpush.msra.mxu0 %v2186
    %2968 = vmatpush.msra.mxu0 %v2185
    %2969 = vmatpush.msra.mxu0 %v2184
    %2970 = vmatpush.msra.mxu0 %v2183
    %2971 = vmatpush.msra.mxu0 %v2182
    %2972 = vmatpush.msra.mxu0 %v2181
    %2973 = vmatpush.msra.mxu0 %v2180
    %2974 = vmatpush.msra.mxu0 %v2179
    %2975 = vmatpush.msra.mxu0 %v2178
    %2976 = vmatpush.msra.mxu0 %v2177
    %2977 = vmatpush.msra.mxu0 %v2176
    %2978 = vmatpush.msra.mxu0 %v2175
    %2979 = vmatpush.msra.mxu0 %v2174
    %2980 = vmatpush.msra.mxu0 %v2173
    %2981 = vmatmul.f32.gmra.mxu0 %v1978
    %v2982 = vpop.f32.mrf.mxu0
    %v2983 = vadd.f32 %v2954, %v2982
    %2984 = vmatmul.f32.gmra.mxu0 %v1993
    %v2985 = vpop.f32.mrf.mxu0
    %v2986 = vadd.f32 %v2957, %v2985
    %2987 = vmatmul.f32.gmra.mxu0 %v2008
    %v2988 = vpop.f32.mrf.mxu0
    %v2989 = vadd.f32 %v2960, %v2988
    %2990 = vmatmul.f32.gmra.mxu0 %v2023
    %v2991 = vpop.f32.mrf.mxu0
    %v2992 = vadd.f32 %v2963, %v2991
    %2993 = vdwg.mxu0
    %2994 = vmatpush.msra.mxu0 %v2204
    %2995 = vmatpush.msra.mxu0 %v2203
    %2996 = vmatpush.msra.mxu0 %v2202
    %2997 = vmatpush.msra.mxu0 %v2201
    %2998 = vmatpush.msra.mxu0 %v2200
    %2999 = vmatpush.msra.mxu0 %v2199
    %3000 = vmatpush.msra.mxu0 %v2198
    %3001 = vmatpush.msra.mxu0 %v2197
    %3002 = vmatpush.msra.mxu0 %v2196
    %3003 = vmatpush.msra.mxu0 %v2195
    %3004 = vmatpush.msra.mxu0 %v2194
    %3005 = vmatpush.msra.mxu0 %v2193
    %3006 = vmatpush.msra.mxu0 %v2192
    %3007 = vmatpush.msra.mxu0 %v2191
    %3008 = vmatpush.msra.mxu0 %v2190
    %3009 = vmatpush.msra.mxu0 %v2189
    %3010 = vmatmul.f32.gmra.mxu0 %v1979
    %v3011 = vpop.f32.mrf.mxu0
    %v3012 = vadd.f32 %v2983, %v3011
    %3013 = vmatmul.f32.gmra.mxu0 %v1994
    %v3014 = vpop.f32.mrf.mxu0
    %v3015 = vadd.f32 %v2986, %v3014
    %3016 = vmatmul.f32.gmra.mxu0 %v2009
    %v3017 = vpop.f32.mrf.mxu0
    %v3018 = vadd.f32 %v2989, %v3017
    %3019 = vmatmul.f32.gmra.mxu0 %v2024
    %v3020 = vpop.f32.mrf.mxu0
    %v3021 = vadd.f32 %v2992, %v3020
    %3022 = vdwg.mxu0
    %3023 = vmatpush.msra.mxu0 %v2220
    %3024 = vmatpush.msra.mxu0 %v2219
    %3025 = vmatpush.msra.mxu0 %v2218
    %3026 = vmatpush.msra.mxu0 %v2217
    %3027 = vmatpush.msra.mxu0 %v2216
    %3028 = vmatpush.msra.mxu0 %v2215
    %3029 = vmatpush.msra.mxu0 %v2214
    %3030 = vmatpush.msra.mxu0 %v2213
    %3031 = vmatpush.msra.mxu0 %v2212
    %3032 = vmatpush.msra.mxu0 %v2211
    %3033 = vmatpush.msra.mxu0 %v2210
    %3034 = vmatpush.msra.mxu0 %v2209
    %3035 = vmatpush.msra.mxu0 %v2208
    %3036 = vmatpush.msra.mxu0 %v2207
    %3037 = vmatpush.msra.mxu0 %v2206
    %3038 = vmatpush.msra.mxu0 %v2205
    %3039 = vmatmul.f32.gmra.mxu0 %v1980
    %v3040 = vpop.f32.mrf.mxu0
    %v3041 = vadd.f32 %v3012, %v3040
    %3042 = vmatmul.f32.gmra.mxu0 %v1995
    %v3043 = vpop.f32.mrf.mxu0
    %v3044 = vadd.f32 %v3015, %v3043
    %3045 = vmatmul.f32.gmra.mxu0 %v2010
    %v3046 = vpop.f32.mrf.mxu0
    %v3047 = vadd.f32 %v3018, %v3046
    %3048 = vmatmul.f32.gmra.mxu0 %v2025
    %v3049 = vpop.f32.mrf.mxu0
    %v3050 = vadd.f32 %v3021, %v3049
    %3051 = vdwg.mxu0
    %3052 = vmatpush.msra.mxu0 %v2236
    %3053 = vmatpush.msra.mxu0 %v2235
    %3054 = vmatpush.msra.mxu0 %v2234
    %3055 = vmatpush.msra.mxu0 %v2233
    %3056 = vmatpush.msra.mxu0 %v2232
    %3057 = vmatpush.msra.mxu0 %v2231
    %3058 = vmatpush.msra.mxu0 %v2230
    %3059 = vmatpush.msra.mxu0 %v2229
    %3060 = vmatpush.msra.mxu0 %v2228
    %3061 = vmatpush.msra.mxu0 %v2227
    %3062 = vmatpush.msra.mxu0 %v2226
    %3063 = vmatpush.msra.mxu0 %v2225
    %3064 = vmatpush.msra.mxu0 %v2224
    %3065 = vmatpush.msra.mxu0 %v2223
    %3066 = vmatpush.msra.mxu0 %v2222
    %3067 = vmatpush.msra.mxu0 %v2221
    %3068 = vmatmul.f32.gmra.mxu0 %v1981
    %v3069 = vpop.f32.mrf.mxu0
    %v3070 = vadd.f32 %v3041, %v3069
    %3071 = vmatmul.f32.gmra.mxu0 %v1996
    %v3072 = vpop.f32.mrf.mxu0
    %v3073 = vadd.f32 %v3044, %v3072
    %3074 = vmatmul.f32.gmra.mxu0 %v2011
    %v3075 = vpop.f32.mrf.mxu0
    %v3076 = vadd.f32 %v3047, %v3075
    %3077 = vmatmul.f32.gmra.mxu0 %v2026
    %v3078 = vpop.f32.mrf.mxu0
    %v3079 = vadd.f32 %v3050, %v3078
    %3080 = vdwg.mxu0
    %3081 = vmatpush.msra.mxu0 %v2252
    %3082 = vmatpush.msra.mxu0 %v2251
    %3083 = vmatpush.msra.mxu0 %v2250
    %3084 = vmatpush.msra.mxu0 %v2249
    %3085 = vmatpush.msra.mxu0 %v2248
    %3086 = vmatpush.msra.mxu0 %v2247
    %3087 = vmatpush.msra.mxu0 %v2246
    %3088 = vmatpush.msra.mxu0 %v2245
    %3089 = vmatpush.msra.mxu0 %v2244
    %3090 = vmatpush.msra.mxu0 %v2243
    %3091 = vmatpush.msra.mxu0 %v2242
    %3092 = vmatpush.msra.mxu0 %v2241
    %3093 = vmatpush.msra.mxu0 %v2240
    %3094 = vmatpush.msra.mxu0 %v2239
    %3095 = vmatpush.msra.mxu0 %v2238
    %3096 = vmatpush.msra.mxu0 %v2237
    %3097 = vmatmul.f32.gmra.mxu0 %v1982
    %v3098 = vpop.f32.mrf.mxu0
    %v3099 = vadd.f32 %v3070, %v3098
    %3100 = vmatmul.f32.gmra.mxu0 %v1997
    %v3101 = vpop.f32.mrf.mxu0
    %v3102 = vadd.f32 %v3073, %v3101
    %3103 = vmatmul.f32.gmra.mxu0 %v2012
    %v3104 = vpop.f32.mrf.mxu0
    %v3105 = vadd.f32 %v3076, %v3104
    %3106 = vmatmul.f32.gmra.mxu0 %v2027
    %v3107 = vpop.f32.mrf.mxu0
    %v3108 = vadd.f32 %v3079, %v3107
    %3109 = vdwg.mxu0
    %3110 = vmatpush.msra.mxu0 %v2268
    %3111 = vmatpush.msra.mxu0 %v2267
    %3112 = vmatpush.msra.mxu0 %v2266
    %3113 = vmatpush.msra.mxu0 %v2265
    %3114 = vmatpush.msra.mxu0 %v2264
    %3115 = vmatpush.msra.mxu0 %v2263
    %3116 = vmatpush.msra.mxu0 %v2262
    %3117 = vmatpush.msra.mxu0 %v2261
    %3118 = vmatpush.msra.mxu0 %v2260
    %3119 = vmatpush.msra.mxu0 %v2259
    %3120 = vmatpush.msra.mxu0 %v2258
    %3121 = vmatpush.msra.mxu0 %v2257
    %3122 = vmatpush.msra.mxu0 %v2256
    %3123 = vmatpush.msra.mxu0 %v2255
    %3124 = vmatpush.msra.mxu0 %v2254
    %3125 = vmatpush.msra.mxu0 %v2253
    %3126 = vmatmul.f32.gmra.mxu0 %v1983
    %v3127 = vpop.f32.mrf.mxu0
    %v3128 = vadd.f32 %v3099, %v3127
    %3129 = vmatmul.f32.gmra.mxu0 %v1998
    %v3130 = vpop.f32.mrf.mxu0
    %v3131 = vadd.f32 %v3102, %v3130
    %3132 = vmatmul.f32.gmra.mxu0 %v2013
    %v3133 = vpop.f32.mrf.mxu0
    %v3134 = vadd.f32 %v3105, %v3133
    %3135 = vmatmul.f32.gmra.mxu0 %v2028
    %v3136 = vpop.f32.mrf.mxu0
    %v3137 = vadd.f32 %v3108, %v3136
    %3138 = vdwg.mxu0
    %vm3139 = vcmask 261120
    %3140 = vst.msk [vmem:[#allocation4] sm:$0xff] %vm3139, %v2693
    %3141 = vst.msk [vmem:[#allocation4 + $0x8] sm:$0xff] %vm3139, %v2696
    %3142 = vst.msk [vmem:[#allocation4 + $0x10] sm:$0xff] %vm3139, %v2699
    %3143 = vst.msk [vmem:[#allocation4 + $0x18] sm:$0xff] %vm3139, %v2702
    %3144 = vst.msk [vmem:[#allocation6] sm:$0xff] %vm3139, %v3128
    %3145 = vst.msk [vmem:[#allocation6 + $0x8] sm:$0xff] %vm3139, %v3131
    %3146 = vst.msk [vmem:[#allocation6 + $0x10] sm:$0xff] %vm3139, %v3134
    %3147 = vst.msk [vmem:[#allocation6 + $0x18] sm:$0xff] %vm3139, %v3137
    %v3148 = vld [vmem:[%s7] sm:$0xff]
    %v3149 = vld [vmem:[%s7 + $0x8] sm:$0xff]
    %v3150 = vld [vmem:[%s7 + $0x10] sm:$0xff]
    %v3151 = vld [vmem:[%s7 + $0x18] sm:$0xff]
    %v3152 = vsub.f32 %v3148, %v2693
    %v3153 = vsub.f32 %v3149, %v2696
    %v3154 = vsub.f32 %v3150, %v2699
    %v3155 = vsub.f32 %v3151, %v2702
    %v3156 = vld [vmem:[%s8] sm:$0xff]
    %v3157 = vld [vmem:[%s8 + $0x8] sm:$0xff]
    %v3158 = vld [vmem:[%s8 + $0x10] sm:$0xff]
    %v3159 = vld [vmem:[%s8 + $0x18] sm:$0xff]
    %v3160 = vsub.f32 %v3156, %v3128
    %v3161 = vsub.f32 %v3157, %v3131
    %v3162 = vsub.f32 %v3158, %v3134
    %v3163 = vsub.f32 %v3159, %v3137
    %v3164 = vmul.f32 %v3152, %v3152
    %v3165 = vmul.f32 %v3153, %v3153
    %v3166 = vmul.f32 %v3154, %v3154
    %v3167 = vmul.f32 %v3155, %v3155
    %v3168 = vsel %vm3139, %v3164, 0.0
    %v3169 = vsel %vm3139, %v3165, 0.0
    %v3170 = vadd.f32 %v3168, %v3169
    %v3171 = vsel %vm3139, %v3166, 0.0
    %v3172 = vadd.f32 %v3170, %v3171
    %v3173 = vsel %vm3139, %v3167, 0.0
    %v3174 = vadd.f32 %v3172, %v3173
    %3175 = vadd.xlane.f32.xlu0 %v3174
    %v3176 = vpop.xlane.xlu0 %3175
    %v3177 = vrot.slane %v3176, 4
    %v3178 = vadd.f32 %v3176, %v3177
    %v3179 = vrot.slane %v3178, 2
    %v3180 = vadd.f32 %v3178, %v3179
    %v3181 = vrot.slane %v3180, 1
    %v3182 = vadd.f32 %v3180, %v3181
    %s3183 = vtos %v3182
    %v3184 = vmul.f32 %v3160, %v3160
    %v3185 = vmul.f32 %v3161, %v3161
    %v3186 = vmul.f32 %v3162, %v3162
    %v3187 = vmul.f32 %v3163, %v3163
    %v3188 = vsel %vm3139, %v3184, 0.0
    %v3189 = vsel %vm3139, %v3185, 0.0
    %v3190 = vadd.f32 %v3188, %v3189
    %v3191 = vsel %vm3139, %v3186, 0.0
    %v3192 = vadd.f32 %v3190, %v3191
    %v3193 = vsel %vm3139, %v3187, 0.0
    %v3194 = vadd.f32 %v3192, %v3193
    %3195 = vadd.xlane.f32.xlu0 %v3194
    %v3196 = vpop.xlane.xlu0 %3195
    %v3197 = vrot.slane %v3196, 4
    %v3198 = vadd.f32 %v3196, %v3197
    %v3199 = vrot.slane %v3198, 2
    %v3200 = vadd.f32 %v3198, %v3199
    %v3201 = vrot.slane %v3200, 1
    %v3202 = vadd.f32 %v3200, %v3201
    %s3203 = vtos %v3202
    %s3204 = sadd.f32 %s3183, %s3203
    %s3205 = smul.f32 %s3204, 2.0
    %v3206 = vstv %s3205
    %vm3207 = vcmask 0
    %3208 = vst.msk [vmem:[#allocation2] sm:$0x1] %vm3207, %v3206
    // Predicated region
    $region38: #{tpu_custom_call.1} parent=1 // pred_check
      _
    $region39: #{tpu_custom_call.1} parent=1 // pred_check_branch
      %3210 = sbr.rel (0) target = $region41
    $region40: #{tpu_custom_call.1} parent=1 // pred_region
      %3212 = vsyncadd [#allocation3], 0
      %s3214 = sshll.u32 [#allocation2], 4
      %s3215 = int_to_ptr.vmem [resolvable:$true] %s3214
      %s3216 = sshll.u32 %s9, 4
      %s3217 = int_to_ptr.hbm [resolvable:$true] %s3216
      %3219 = dma.vmem_to_hbm [thread:$0]  %s3215, 16, %s3217, [#allocation3]
    $region41: #{tpu_custom_call.1} parent=1 // pred_fallthru
      _
    // Predicated region
    $region42: #{tpu_custom_call.1} parent=1 // pred_check
      _
    $region43: #{tpu_custom_call.1} parent=1 // pred_check_branch
      %3221 = sbr.rel (0) target = $region45
    $region44: #{tpu_custom_call.1} parent=1 // pred_region
      %3223 = vsyncadd [#allocation5], 0
      %s3224 = sshll.u32 [#allocation4], 4
      %s3225 = int_to_ptr.vmem [resolvable:$true] %s3224
      %s3226 = sshll.u32 %s10, 4
      %s3227 = int_to_ptr.hbm [resolvable:$true] %s3226
      %3232 = dma.vmem_to_hbm [thread:$0]  %s3225, 512, %s3227, [#allocation5], 128, 128, 8
    $region45: #{tpu_custom_call.1} parent=1 // pred_fallthru
      _
    // Predicated region
    $region46: #{tpu_custom_call.1} parent=1 // pred_check
      _
    $region47: #{tpu_custom_call.1} parent=1 // pred_check_branch
      %3234 = sbr.rel (0) target = $region49
    $region48: #{tpu_custom_call.1} parent=1 // pred_region
      %3236 = vsyncadd [#allocation5], 0
      %s3237 = sshll.u32 [#allocation6], 4
      %s3238 = int_to_ptr.vmem [resolvable:$true] %s3237
      %s3239 = sshll.u32 %s11, 4
      %s3240 = int_to_ptr.hbm [resolvable:$true] %s3239
      %3245 = dma.vmem_to_hbm [thread:$0]  %s3238, 512, %s3240, [#allocation5], 128, 128, 8
    $region49: #{tpu_custom_call.1} parent=1 // pred_fallthru
      _
    // Predicated region
    $region50: #{tpu_custom_call.1} parent=1 // pred_check
      _
    $region51: #{tpu_custom_call.1} parent=1 // pred_check_branch
      %3247 = sbr.rel (0) target = $region53
    $region52: #{tpu_custom_call.1} parent=1 // pred_region
      %3249 = dma.done [#allocation3], 16
    $region53: #{tpu_custom_call.1} parent=1 // pred_fallthru
      _
    // Predicated region
    $region54: #{tpu_custom_call.1} parent=1 // pred_check
      _
    $region55: #{tpu_custom_call.1} parent=1 // pred_check_branch
      %3251 = sbr.rel (0) target = $region57
    $region56: #{tpu_custom_call.1} parent=1 // pred_region
      %3253 = dma.done [#allocation5], 512
    $region57: #{tpu_custom_call.1} parent=1 // pred_fallthru
      _
    // Predicated region
    $region58: #{tpu_custom_call.1} parent=1 // pred_check
      _
    $region59: #{tpu_custom_call.1} parent=1 // pred_check_branch
      %3255 = sbr.rel (0) target = $region61
    $region60: #{tpu_custom_call.1} parent=1 // pred_region
      %3257 = dma.done [#allocation5], 512
    $region61: #{tpu_custom_call.1} parent=1 // pred_fallthru
      _
    %3258 = vsyncpa [#allocation3], 1
    %3259 = vsyncpa [#allocation5], 1

</llo_original>
